<compile_context>
chip_gen: v7x
topology: tpu7x:2x2x1
jax: 0.10.0
libtpu: 0.0.40
codegen_flags: <defaults>
</compile_context>

<pallas_src>
import math

import jax
import jax.numpy as jnp
from jax.experimental import pallas as pl
from jax.experimental.pallas import tpu as pltpu


# ---------------------------------------------------------------------------
# helpers
# ---------------------------------------------------------------------------
def _pick_tile(n, target):
    """Largest tile dividing n that is a multiple of 128 and <= target,
    falling back to the full extent (full-dim blocks are always legal)."""
    if n <= target or n % 128 != 0:
        return n
    t = (min(target, n) // 128) * 128
    while t >= 128 and n % t:
        t -= 128
    tile = t if t >= 128 else n
    # explicit legality check: either full extent or 128-aligned divisor
    assert tile == n or (n % tile == 0 and tile % 128 == 0), (n, target, tile)
    return tile


def _nb(shape, dtype):
    return math.prod(shape) * jnp.dtype(dtype).itemsize


def _vmem_limit_bytes(block_bytes, scratch_bytes=0):
    """Double-buffered blocks + scratch + headroom, clamped to chip VMEM."""
    need = 2 * block_bytes + scratch_bytes + (4 << 20)
    cap = 64 << 20  # conservative (v7x) fallback
    try:
        cap = int(pltpu.get_tpu_info().vmem_capacity_bytes)
    except Exception:
        pass
    return int(min(max(need, 32 << 20), int(cap * 0.85)))


def _w1x1_cf(wt):
    # torch conv1x1 weight (O, I, 1, 1) -> (O, I) acting on channel-first data
    return wt[:, :, 0, 0]


# ---------------------------------------------------------------------------
# Kernel 1: stacked 1x1 projections (g / theta / phi) + channel attention f_c
# ---------------------------------------------------------------------------
def _proj_kernel(x_ref, w_ref, b_ref, g_ref, th_ref, ph_ref, fc_ref, fc_scr):
    ic = x_ref.shape[1]
    j = pl.program_id(1)

    x = x_ref[0]                                                  # (IC, TK) f32
    proj = jnp.dot(w_ref[...], x,
                   preferred_element_type=jnp.float32) + b_ref[...]   # (3IC, TK)
    g = proj[:ic, :]
    th = proj[ic:2 * ic, :]
    ph = proj[2 * ic:, :]
    # bf16 storage for the attention-stage operands (halves HBM traffic)
    g_ref[0] = g.astype(g_ref.dtype)
    th_ref[0] = th.astype(th_ref.dtype)
    ph_ref[0] = ph.astype(ph_ref.dtype)

    @pl.when(j == 0)
    def _():
        fc_scr[...] = jnp.zeros(fc_scr.shape, fc_scr.dtype)

    # f_c[i, j] = sum_n theta[i, n] * phi[j, n]   (f32 accumulation)
    fc_scr[...] += jax.lax.dot_general(
        th, ph, (((1,), (1,)), ((), ())), preferred_element_type=jnp.float32)

    @pl.when(j == pl.num_programs(1) - 1)
    def _():
        fc = fc_scr[...]
        fc = fc - jnp.max(fc, axis=-1, keepdims=True)
        e = jnp.exp(fc)
        inv = pl.reciprocal(jnp.sum(e, axis=-1, keepdims=True), approx=True)
        fc_ref[0] = e * inv


def nonlocal_projections(x_cf, w_gtp, b_gtp, *, tk):
    b, ic, n = x_cf.shape
    tok = pl.BlockSpec((1, ic, tk), lambda bi, j: (bi, 0, j))
    blk = (_nb((1, ic, tk), jnp.float32) + _nb((3 * ic, ic), jnp.float32)
           + _nb((3 * ic, 1), jnp.float32) + 3 * _nb((1, ic, tk), jnp.bfloat16)
           + _nb((1, ic, ic), jnp.float32))
    # NOTE: at large IC the constant-index weight/fc blocks would benefit from
    # pipeline_mode=pl.Buffered(1) (single-buffering); left default here.
    return pl.pallas_call(
        _proj_kernel,
        grid=(b, n // tk),
        in_specs=[tok,
                  pl.BlockSpec((3 * ic, ic), lambda bi, j: (0, 0)),
                  pl.BlockSpec((3 * ic, 1), lambda bi, j: (0, 0))],
        out_specs=(tok, tok, tok,
                   pl.BlockSpec((1, ic, ic), lambda bi, j: (bi, 0, 0))),
        out_shape=(jax.ShapeDtypeStruct((b, ic, n), jnp.bfloat16),
                   jax.ShapeDtypeStruct((b, ic, n), jnp.bfloat16),
                   jax.ShapeDtypeStruct((b, ic, n), jnp.bfloat16),
                   jax.ShapeDtypeStruct((b, ic, ic), jnp.float32)),
        scratch_shapes=[pltpu.VMEM((ic, ic), jnp.float32)],
        compiler_params=pltpu.CompilerParams(
            dimension_semantics=("parallel", "arbitrary"),
            vmem_limit_bytes=_vmem_limit_bytes(blk, _nb((ic, ic), jnp.float32))),
    )(x_cf, w_gtp, b_gtp)


# ---------------------------------------------------------------------------
# Kernel 2: flash-style spatial attention (online softmax over kv tiles)
# ---------------------------------------------------------------------------
def _flash_kernel(th_ref, ph_ref, gk_ref, ys_ref, m_scr, l_scr, acc_scr):
    k = pl.program_id(2)

    @pl.when(k == 0)
    def _():
        m_scr[...] = jnp.full(m_scr.shape, -jnp.inf, m_scr.dtype)
        l_scr[...] = jnp.zeros(l_scr.shape, l_scr.dtype)
        acc_scr[...] = jnp.zeros(acc_scr.shape, acc_scr.dtype)

    th = th_ref[0]                                               # (IC, TQ)  bf16
    ph = ph_ref[0]                                               # (IC, TKV) bf16
    gk = gk_ref[0]                                               # (IC, TKV) bf16

    # s_t[m, n] = sum_i phi[i, m] * theta[i, n]  ==  f_s[n, m]   -> (TKV, TQ)
    s_t = jax.lax.dot_general(ph, th, (((0,), (0,)), ((), ())),
                              preferred_element_type=jnp.float32)

    m_prev = m_scr[...]                                          # (1, TQ) f32
    m_new = jnp.maximum(m_prev, jnp.max(s_t, axis=0, keepdims=True))
    alpha = jnp.exp(m_prev - m_new)                              # (1, TQ)
    p = jnp.exp(s_t - m_new)                                     # (TKV, TQ) f32
    l_scr[...] = alpha * l_scr[...] + jnp.sum(p, axis=0, keepdims=True)
    acc_scr[...] = alpha * acc_scr[...] + jnp.dot(
        gk, p.astype(gk.dtype), preferred_element_type=jnp.float32)  # (IC, TQ)
    m_scr[...] = m_new

    @pl.when(k == pl.num_programs(2) - 1)
    def _():
        inv_l = pl.reciprocal(l_scr[...], approx=True)           # (1, TQ)
        ys_ref[0] = (acc_scr[...] * inv_l).astype(ys_ref.dtype)  # (IC, TQ)


def flash_spatial_attention(th_bf, ph_bf, g_bf, *, tq, tkv):
    b, ic, n = th_bf.shape
    qspec = pl.BlockSpec((1, ic, tq), lambda bi, q, k: (bi, 0, q))
    kspec = pl.BlockSpec((1, ic, tkv), lambda bi, q, k: (bi, 0, k))
    blk = (_nb((1, ic, tq), jnp.bfloat16) + 2 * _nb((1, ic, tkv), jnp.bfloat16)
           + _nb((1, ic, tq), jnp.float32))
    scr = 2 * _nb((8, tq), jnp.float32) + _nb((ic, tq), jnp.float32)
    return pl.pallas_call(
        _flash_kernel,
        grid=(b, n // tq, n // tkv),
        in_specs=[qspec, kspec, kspec],
        out_specs=pl.BlockSpec((1, ic, tq), lambda bi, q, k: (bi, 0, q)),
        out_shape=jax.ShapeDtypeStruct((b, ic, n), jnp.float32),
        scratch_shapes=[pltpu.VMEM((1, tq), jnp.float32),
                        pltpu.VMEM((1, tq), jnp.float32),
                        pltpu.VMEM((ic, tq), jnp.float32)],
        compiler_params=pltpu.CompilerParams(
            dimension_semantics=("parallel", "parallel", "arbitrary"),
            vmem_limit_bytes=_vmem_limit_bytes(blk, scr)),
    )(th_bf, ph_bf, g_bf)


# ---------------------------------------------------------------------------
# Kernel 3: channel attention apply   y_c[n, j] = sum_i g[i, n] * f_c[i, j]
# ---------------------------------------------------------------------------
def _yc_kernel(g_ref, fc_ref, yc_ref):
    yc_ref[0] = jax.lax.dot_general(
        g_ref[0].astype(jnp.float32), fc_ref[0],
        (((0,), (0,)), ((), ())), preferred_element_type=jnp.float32)


def channel_attention(g_bf, fc_div, *, tq):
    b, ic, n = g_bf.shape
    blk = (_nb((1, ic, tq), jnp.bfloat16) + _nb((1, ic, ic), jnp.float32)
           + _nb((1, tq, ic), jnp.float32))
    # TODO(synk): when IC < 128 the (TQ, IC) output store is a masked partial
    # store; pad IC to 128 for small-IC configs (non-issue for realistic IC).
    return pl.pallas_call(
        _yc_kernel,
        grid=(b, n // tq),
        in_specs=[pl.BlockSpec((1, ic, tq), lambda bi, q: (bi, 0, q)),
                  pl.BlockSpec((1, ic, ic), lambda bi, q: (bi, 0, 0))],
        out_specs=pl.BlockSpec((1, tq, ic), lambda bi, q: (bi, q, 0)),
        out_shape=jax.ShapeDtypeStruct((b, n, ic), jnp.float32),
        compiler_params=pltpu.CompilerParams(
            dimension_semantics=("parallel", "parallel"),
            vmem_limit_bytes=_vmem_limit_bytes(blk)),
    )(g_bf, fc_div)


# ---------------------------------------------------------------------------
# Kernel 4: z = x + (gs*Ws) @ y_s + (gc*Wc) @ y_c + (gs*bs + gc*bc)
#           (channels-first, flattened spatial on lanes, row-tiled; no concat)
# ---------------------------------------------------------------------------
def _fuse_kernel(x_ref, ys_ref, yc_ref, ws_ref, wc_ref, bf_ref, z_ref):
    z_ref[0] = (x_ref[0]
                + jnp.dot(ws_ref[...], ys_ref[0],
                          preferred_element_type=jnp.float32)
                + jnp.dot(wc_ref[...], yc_ref[0],
                          preferred_element_type=jnp.float32)
                + bf_ref[...])


def fuse_residual(x_cf, ys_cf, yc_cf, ws, wc, bias, *, tp):
    b, c, hw = x_cf.shape
    tok = pl.BlockSpec((1, c, tp), lambda bi, p: (bi, 0, p))
    blk = (4 * _nb((1, c, tp), jnp.float32) + 2 * _nb((c, c), jnp.float32)
           + _nb((c, 1), jnp.float32))
    return pl.pallas_call(
        _fuse_kernel,
        grid=(b, hw // tp),
        in_specs=[tok, tok, tok,
                  pl.BlockSpec((c, c), lambda bi, p: (0, 0)),
                  pl.BlockSpec((c, c), lambda bi, p: (0, 0)),
                  pl.BlockSpec((c, 1), lambda bi, p: (0, 0))],
        out_specs=tok,
        out_shape=jax.ShapeDtypeStruct((b, c, hw), jnp.float32),
        compiler_params=pltpu.CompilerParams(
            dimension_semantics=("parallel", "parallel"),
            vmem_limit_bytes=_vmem_limit_bytes(blk)),
    )(x_cf, ys_cf, yc_cf, ws, wc, bias)


# ---------------------------------------------------------------------------
# Kernel 5: fused mask head  conv3x3 -> relu -> conv3x3 -> sigmoid
#   - channel contraction on the MXU (all 9 taps stacked into one matmul)
#   - spatial tap shifts via pltpu.roll on the flattened (lane) axis
#   - zero padding handled by row/col border masks (no padded copies of z)
#   - hidden accumulator kept in VMEM scratch
# ---------------------------------------------------------------------------
def _make_mask_head_kernel(img_h, img_w, ch):
    hw = img_h * img_w
    offsets = [(oy, ox) for oy in (-1, 0, 1) for ox in (-1, 0, 1)]

    def kernel(z_ref, rc_ref, w1_ref, b1_ref, w2_ref, b2_ref, mask_ref,
               hid_scr):
        z = z_ref[0]                                             # (C, HW) f32
        # all 9 tap filters at once: (9*ch, C) @ (C, HW) -> (9*ch, HW)
        taps1 = jnp.dot(w1_ref[...], z, preferred_element_type=jnp.float32)

        row = rc_ref[0:1, :]                                     # (1, HW) f32
        col = rc_ref[1:2, :]                                     # (1, HW) f32
        valids, shifts = [], []
        for oy, ox in offsets:
            valids.append((row >= -oy) & (row <= (img_h - 1) - oy) &
                          (col >= -ox) & (col <= (img_w - 1) - ox))
            shifts.append((-(oy * img_w + ox)) % hw)

        # --- conv1: C -> ch, 3x3, pad 1 (accumulate in VMEM scratch) --------
        hid_scr[...] = jnp.broadcast_to(b1_ref[...], hid_scr.shape)
        for t in range(9):
            contrib = pltpu.roll(taps1[t * ch:(t + 1) * ch, :], shifts[t], 1)
            hid_scr[...] += jnp.where(valids[t], contrib, 0.0)

        hid = jnp.maximum(hid_scr[...], 0.0)                     # relu (ch, HW)

        # --- conv2: ch -> 1, 3x3, pad 1, sigmoid -----------------------------
        taps2 = jnp.dot(w2_ref[...], hid,
                        preferred_element_type=jnp.float32)      # (9, HW)
        acc2 = jnp.broadcast_to(b2_ref[...], (1, hw))
        for t in range(9):
            shifted = pltpu.roll(taps2[t:t + 1, :], shifts[t], 1)
            acc2 = acc2 + jnp.where(valids[t], shifted, 0.0)

        # exact sigmoid (precision-sensitive final output)
        mask_ref[0] = 1.0 / (1.0 + jnp.exp(-acc2))

    return kernel


def mask_head(z_cf, rowcol, w1, b1, w2, b2, *, img_h, img_w):
    # TODO(synk): for very large H*W the image should be tiled along H with a
    # 2-row halo (overlapping pl.Element index_map or manual make_async_copy);
    # whole image per batch element here.
    b, c, hw = z_cf.shape
    ch = b1.shape[0]
    kernel = _make_mask_head_kernel(img_h, img_w, ch)
    blk = (_nb((1, c, hw), jnp.float32) + _nb((2, hw), jnp.float32)
           + _nb((9 * ch, c), jnp.float32) + _nb((ch, 1), jnp.float32)
           + _nb((9, ch), jnp.float32) + _nb((1, 1), jnp.float32)
           + _nb((1, 1, hw), jnp.float32))
    return pl.pallas_call(
        kernel,
        grid=(b,),
        in_specs=[pl.BlockSpec((1, c, hw), lambda bi: (bi, 0, 0)),
                  pl.BlockSpec((2, hw), lambda bi: (0, 0)),
                  pl.BlockSpec((9 * ch, c), lambda bi: (0, 0)),
                  pl.BlockSpec((ch, 1), lambda bi: (0, 0)),
                  pl.BlockSpec((9, ch), lambda bi: (0, 0)),
                  pl.BlockSpec((1, 1), lambda bi: (0, 0))],
        out_specs=pl.BlockSpec((1, 1, hw), lambda bi: (bi, 0, 0)),
        out_shape=jax.ShapeDtypeStruct((b, 1, hw), jnp.float32),
        scratch_shapes=[pltpu.VMEM((ch, hw), jnp.float32)],
        compiler_params=pltpu.CompilerParams(
            dimension_semantics=("parallel",),
            vmem_limit_bytes=_vmem_limit_bytes(blk, _nb((ch, hw), jnp.float32))),
    )(z_cf, rowcol, w1, b1, w2, b2)


# ---------------------------------------------------------------------------
# Full forward (wrapper glue = free row-major reinterpretations only)
# ---------------------------------------------------------------------------
def nonlocal_mask_forward(params, x, reduce_scale):
    b, c, h, w = x.shape
    r = reduce_scale
    ic = c * r * r
    n = (h // r) * (w // r)
    hw = h * w

    # x1.view(b, ic, -1)  (channel-first tokens)
    x_cf = x.reshape(b, ic, n)

    # stacked projection weights: one (3IC, IC) matmul instead of three
    w_gtp = jnp.concatenate([_w1x1_cf(params["g_w"]),
                             _w1x1_cf(params["theta_w"]),
                             _w1x1_cf(params["phi_w"])], axis=0)
    b_gtp = jnp.concatenate([params["g_b"], params["theta_b"],
                             params["phi_b"]]).reshape(3 * ic, 1)

    tk = _pick_tile(n, 1024)
    g_bf, th_bf, ph_bf, fc_div = nonlocal_projections(x_cf, w_gtp, b_gtp, tk=tk)

    tq = _pick_tile(n, 1024)
    tkv = _pick_tile(n, 512)
    ys = flash_spatial_attention(th_bf, ph_bf, g_bf, tq=tq, tkv=tkv)  # (b,ic,n)
    yc = channel_attention(g_bf, fc_div, tq=tq)                      # (b,n,ic)

    # torch: y_s.permute(0,2,1).view(b,c,h,w) == ys (channel-first already)
    #        y_c.view(b,c,h,w)                == yc (row-major reinterpret)
    ys_cf = ys.reshape(b, c, hw)
    yc_cf = yc.reshape(b, c, hw)

    gs = params["gamma_s"][0]
    gc = params["gamma_c"][0]
    ws = gs * _w1x1_cf(params["ws_w"])                                # (c, c)
    wc = gc * _w1x1_cf(params["wc_w"])                                # (c, c)
    bf_ = (gs * params["ws_b"] + gc * params["wc_b"]).reshape(c, 1)

    tp = _pick_tile(hw, 2048)
    z_cf = fuse_residual(x.reshape(b, c, hw), ys_cf, yc_cf, ws, wc, bf_, tp=tp)

    # fused mask head directly on z_cf; 1-px zero padding handled in-kernel
    ch = params["m1_b"].shape[0]
    w1 = params["m1_w"].transpose(2, 3, 0, 1).reshape(9 * ch, c)     # tap-major
    w2 = params["m2_w"].transpose(2, 3, 0, 1).reshape(9, ch)
    b1 = params["m1_b"].reshape(ch, 1)
    b2 = params["m2_b"].reshape(1, 1)
    row_idx = jnp.repeat(jnp.arange(h, dtype=jnp.float32), w)
    col_idx = jnp.tile(jnp.arange(w, dtype=jnp.float32), h)
    rowcol = jnp.stack([row_idx, col_idx], axis=0)                   # (2, hw)

    mask = mask_head(z_cf, rowcol, w1, b1, w2, b2, img_h=h, img_w=w)

    return mask.reshape(b, 1, h, w), z_cf.reshape(b, c, h, w)


# ---------------------------------------------------------------------------
# Parameters + pure-JAX reference (mirrors the PyTorch forward)
# ---------------------------------------------------------------------------
def init_params(key, in_channels, reduce_scale):
    ic = in_channels * reduce_scale * reduce_scale
    ks = jax.random.split(key, 14)
    nrm = lambda k, s: 0.1 * jax.random.normal(k, s, jnp.float32)
    return dict(
        g_w=nrm(ks[0], (ic, ic, 1, 1)), g_b=nrm(ks[1], (ic,)),
        theta_w=nrm(ks[2], (ic, ic, 1, 1)), theta_b=nrm(ks[3], (ic,)),
        phi_w=nrm(ks[4], (ic, ic, 1, 1)), phi_b=nrm(ks[5], (ic,)),
        ws_w=nrm(ks[6], (in_channels, in_channels, 1, 1)),
        ws_b=nrm(ks[7], (in_channels,)),
        wc_w=nrm(ks[8], (in_channels, in_channels, 1, 1)),
        wc_b=nrm(ks[9], (in_channels,)),
        gamma_s=jnp.ones((1,), jnp.float32),
        gamma_c=jnp.ones((1,), jnp.float32),
        m1_w=nrm(ks[10], (16, in_channels, 3, 3)), m1_b=nrm(ks[11], (16,)),
        m2_w=nrm(ks[12], (1, 16, 3, 3)), m2_b=nrm(ks[13], (1,)),
    )


def reference_forward(params, x, reduce_scale):
    hp = jax.lax.Precision.HIGHEST
    b, c, h, w = x.shape
    r = reduce_scale
    ic = c * r * r
    n = (h // r) * (w // r)
    x1 = x.reshape(b, ic, h // r, w // r)

    def conv1x1(t, wt, bt):
        return jnp.einsum("bchw,oc->bohw", t, wt[:, :, 0, 0],
                          precision=hp) + bt[None, :, None, None]

    def conv3x3(t, wt, bt):
        out = jax.lax.conv_general_dilated(
            t, wt, (1, 1), ((1, 1), (1, 1)),
            dimension_numbers=("NCHW", "OIHW", "NCHW"), precision=hp)
        return out + bt[None, :, None, None]

    g_x = conv1x1(x1, params["g_w"], params["g_b"]).reshape(b, ic, n).transpose(0, 2, 1)
    theta_x = conv1x1(x1, params["theta_w"], params["theta_b"]).reshape(b, ic, n)
    phi_x = conv1x1(x1, params["phi_w"], params["phi_b"]).reshape(b, ic, n)

    f_s = jax.nn.softmax(jnp.einsum("bkn,bkm->bnm", theta_x, phi_x, precision=hp), axis=-1)
    f_c = jax.nn.softmax(jnp.einsum("bin,bjn->bij", theta_x, phi_x, precision=hp), axis=-1)

    y_s = jnp.einsum("bnm,bmi->bni", f_s, g_x, precision=hp)
    y_s = y_s.transpose(0, 2, 1).reshape(b, c, h, w)
    y_c = jnp.einsum("bni,bij->bnj", g_x, f_c, precision=hp).reshape(b, c, h, w)

    z = (x + params["gamma_s"] * conv1x1(y_s, params["ws_w"], params["ws_b"])
           + params["gamma_c"] * conv1x1(y_c, params["wc_w"], params["wc_b"]))
    hid = jax.nn.relu(conv3x3(z, params["m1_w"], params["m1_b"]))
    mask = jax.nn.sigmoid(conv3x3(hid, params["m2_w"], params["m2_b"]))
    return mask, z


if __name__ == "__main__":
    key = jax.random.PRNGKey(0)
    kx, kp = jax.random.split(key)
    B, C, H, W, R = 2, 4, 16, 16, 2

    x = jax.random.normal(kx, (B, C, H, W), jnp.float32)
    params = init_params(kp, C, R)

    fwd = jax.jit(nonlocal_mask_forward, static_argnums=(2,))
    mask, z = fwd(params, x, R)
    mask, z = jax.block_until_ready((mask, z))

    mask_ref, z_ref = reference_forward(params, x, R)
    assert mask.shape == (B, 1, H, W) and z.shape == (B, C, H, W)
    # bf16 attention operands -> slightly relaxed tolerances vs the f32 reference
    assert jnp.allclose(z, z_ref, atol=1e-2, rtol=1e-2), \
        float(jnp.max(jnp.abs(z - z_ref)))
    assert jnp.allclose(mask, mask_ref, atol=1e-2, rtol=1e-2), \
        float(jnp.max(jnp.abs(mask - mask_ref)))

    print("KERNEL_OK")
</pallas_src>

<mosaic_0001>
module attributes {stable_mosaic.version = 11 : i64} {
  func.func @_proj_kernel(%arg0: i32, %arg1: i32, %arg2: memref<1x16x64xf32, #tpu.memory_space<vmem>>, %arg3: memref<48x16xf32, #tpu.memory_space<vmem>>, %arg4: memref<48x1xf32, #tpu.memory_space<vmem>>, %arg5: memref<1x16x64xbf16, #tpu.memory_space<vmem>>, %arg6: memref<1x16x64xbf16, #tpu.memory_space<vmem>>, %arg7: memref<1x16x64xbf16, #tpu.memory_space<vmem>>, %arg8: memref<1x16x16xf32, #tpu.memory_space<vmem>>, %arg9: memref<16x16xf32, #tpu.memory_space<vmem>>) attributes {dimension_semantics = [#tpu.dimension_semantics<parallel>, #tpu.dimension_semantics<arbitrary>], iteration_bounds = array<i64: 2, 1>, scalar_prefetch = 0 : i64, scratch_operands = 1 : i64, tpu.core_type = #tpu.core_type<tc>, window_params = [{transform_indices = @transform_0, window_bounds = array<i64: 1, 16, 64>}, {pipeline_mode = #tpu.pipeline_mode<synchronous>, transform_indices = @transform_1, window_bounds = array<i64: 48, 16>}, {pipeline_mode = #tpu.pipeline_mode<synchronous>, transform_indices = @transform_2, window_bounds = array<i64: 48, 1>}, {transform_indices = @transform_3, window_bounds = array<i64: 1, 16, 64>}, {transform_indices = @transform_4, window_bounds = array<i64: 1, 16, 64>}, {transform_indices = @transform_5, window_bounds = array<i64: 1, 16, 64>}, {transform_indices = @transform_6, window_bounds = array<i64: 1, 16, 16>}]} {
    %c0 = arith.constant 0 : index
    %c0_0 = arith.constant 0 : index
    %c0_1 = arith.constant 0 : index
    %0 = vector.load %arg2[%c0, %c0_0, %c0_1] : memref<1x16x64xf32, #tpu.memory_space<vmem>>, vector<1x16x64xf32>
    %1 = vector.shape_cast %0 : vector<1x16x64xf32> to vector<16x64xf32>
    %c0_2 = arith.constant 0 : index
    %c0_3 = arith.constant 0 : index
    %2 = vector.load %arg3[%c0_2, %c0_3] : memref<48x16xf32, #tpu.memory_space<vmem>>, vector<48x16xf32>
    %cst = arith.constant dense<0.000000e+00> : vector<48x64xf32>
    %3 = tpu.matmul %2, %1, %cst {dimension_numbers = #tpu.dot_dimension_numbers<[1], [0], [0], [1], [0, 0, 1, 1], [], []>} : vector<48x16xf32>, vector<16x64xf32>, vector<48x64xf32> -> vector<48x64xf32>
    %c0_4 = arith.constant 0 : index
    %c0_5 = arith.constant 0 : index
    %4 = vector.load %arg4[%c0_4, %c0_5] : memref<48x1xf32, #tpu.memory_space<vmem>>, vector<48x1xf32>
    %5 = vector.broadcast %4 : vector<48x1xf32> to vector<48x64xf32>
    %6 = arith.addf %3, %5 : vector<48x64xf32>
    %7 = vector.extract_strided_slice %6 {offsets = [0, 0], sizes = [16, 64], strides = [1, 1]} : vector<48x64xf32> to vector<16x64xf32>
    %8 = vector.extract_strided_slice %6 {offsets = [16, 0], sizes = [16, 64], strides = [1, 1]} : vector<48x64xf32> to vector<16x64xf32>
    %9 = vector.extract_strided_slice %6 {offsets = [32, 0], sizes = [16, 64], strides = [1, 1]} : vector<48x64xf32> to vector<16x64xf32>
    %10 = arith.truncf %7 : vector<16x64xf32> to vector<16x64xbf16>
    %c0_6 = arith.constant 0 : index
    %c0_7 = arith.constant 0 : index
    %c0_8 = arith.constant 0 : index
    %11 = vector.load %arg5[%c0_6, %c0_7, %c0_8] : memref<1x16x64xbf16, #tpu.memory_space<vmem>>, vector<1x16x64xbf16>
    %12 = vector.shape_cast %11 : vector<1x16x64xbf16> to vector<16x64xbf16>
    %13 = vector.shape_cast %10 : vector<16x64xbf16> to vector<1x16x64xbf16>
    tpu.vector_store %arg5[%c0_6, %c0_7, %c0_8], %13 {strides = array<i32>} : memref<1x16x64xbf16, #tpu.memory_space<vmem>>, vector<1x16x64xbf16>,
    %14 = arith.truncf %8 : vector<16x64xf32> to vector<16x64xbf16>
    %c0_9 = arith.constant 0 : index
    %c0_10 = arith.constant 0 : index
    %c0_11 = arith.constant 0 : index
    %15 = vector.load %arg6[%c0_9, %c0_10, %c0_11] : memref<1x16x64xbf16, #tpu.memory_space<vmem>>, vector<1x16x64xbf16>
    %16 = vector.shape_cast %15 : vector<1x16x64xbf16> to vector<16x64xbf16>
    %17 = vector.shape_cast %14 : vector<16x64xbf16> to vector<1x16x64xbf16>
    tpu.vector_store %arg6[%c0_9, %c0_10, %c0_11], %17 {strides = array<i32>} : memref<1x16x64xbf16, #tpu.memory_space<vmem>>, vector<1x16x64xbf16>,
    %18 = arith.truncf %9 : vector<16x64xf32> to vector<16x64xbf16>
    %c0_12 = arith.constant 0 : index
    %c0_13 = arith.constant 0 : index
    %c0_14 = arith.constant 0 : index
    %19 = vector.load %arg7[%c0_12, %c0_13, %c0_14] : memref<1x16x64xbf16, #tpu.memory_space<vmem>>, vector<1x16x64xbf16>
    %20 = vector.shape_cast %19 : vector<1x16x64xbf16> to vector<16x64xbf16>
    %21 = vector.shape_cast %18 : vector<16x64xbf16> to vector<1x16x64xbf16>
    tpu.vector_store %arg7[%c0_12, %c0_13, %c0_14], %21 {strides = array<i32>} : memref<1x16x64xbf16, #tpu.memory_space<vmem>>, vector<1x16x64xbf16>,
    %c0_i32 = arith.constant 0 : i32
    %22 = arith.cmpi eq, %arg1, %c0_i32 : i32
    %23 = arith.extui %22 : i1 to i32
    %c0_i32_15 = arith.constant 0 : i32
    %24 = arith.cmpi ne, %23, %c0_i32_15 : i32
    scf.if %24 {
      %cst_23 = arith.constant 0.000000e+00 : f32
      %32 = vector.broadcast %cst_23 : f32 to vector<16x16xf32>
      %c0_24 = arith.constant 0 : index
      %c0_25 = arith.constant 0 : index
      %33 = vector.load %arg9[%c0_24, %c0_25] : memref<16x16xf32, #tpu.memory_space<vmem>>, vector<16x16xf32>
      tpu.vector_store %arg9[%c0_24, %c0_25], %32 {strides = array<i32>} : memref<16x16xf32, #tpu.memory_space<vmem>>, vector<16x16xf32>,
    } else {
    }
    %c0_16 = arith.constant 0 : index
    %c0_17 = arith.constant 0 : index
    %25 = vector.load %arg9[%c0_16, %c0_17] : memref<16x16xf32, #tpu.memory_space<vmem>>, vector<16x16xf32>
    %cst_18 = arith.constant dense<0.000000e+00> : vector<16x16xf32>
    %26 = tpu.matmul %8, %9, %cst_18 {dimension_numbers = #tpu.dot_dimension_numbers<[1], [1], [0], [0], [0, 0, 1, 0], [], []>} : vector<16x64xf32>, vector<16x64xf32>, vector<16x16xf32> -> vector<16x16xf32>
    %27 = arith.addf %25, %26 : vector<16x16xf32>
    %c0_19 = arith.constant 0 : index
    %c0_20 = arith.constant 0 : index
    %28 = vector.load %arg9[%c0_19, %c0_20] : memref<16x16xf32, #tpu.memory_space<vmem>>, vector<16x16xf32>
    tpu.vector_store %arg9[%c0_19, %c0_20], %27 {strides = array<i32>} : memref<16x16xf32, #tpu.memory_space<vmem>>, vector<16x16xf32>,
    %c0_i32_21 = arith.constant 0 : i32
    %29 = arith.cmpi eq, %arg1, %c0_i32_21 : i32
    %30 = arith.extui %29 : i1 to i32
    %c0_i32_22 = arith.constant 0 : i32
    %31 = arith.cmpi ne, %30, %c0_i32_22 : i32
    scf.if %31 {
      %c0_23 = arith.constant 0 : index
      %c0_24 = arith.constant 0 : index
      %32 = vector.load %arg9[%c0_23, %c0_24] : memref<16x16xf32, #tpu.memory_space<vmem>>, vector<16x16xf32>
      %cst_25 = arith.constant dense<0xFF800000> : vector<16xf32>
      %33 = vector.multi_reduction <maximumf>, %32, %cst_25 [1] : vector<16x16xf32> to vector<16xf32>
      %34 = vector.shape_cast %33 : vector<16xf32> to vector<16x1xf32>
      %35 = vector.broadcast %34 : vector<16x1xf32> to vector<16x16xf32>
      %36 = arith.subf %32, %35 : vector<16x16xf32>
      %37 = math.exp %36 : vector<16x16xf32>
      %cst_26 = arith.constant dense<0.000000e+00> : vector<16xf32>
      %38 = vector.multi_reduction <add>, %37, %cst_26 [1] : vector<16x16xf32> to vector<16xf32>
      %39 = vector.shape_cast %38 : vector<16xf32> to vector<16x1xf32>
      %40 = tpu.reciprocal %39 {approx = true} : vector<16x1xf32> -> vector<16x1xf32>
      %41 = vector.broadcast %40 : vector<16x1xf32> to vector<16x16xf32>
      %42 = arith.mulf %37, %41 : vector<16x16xf32>
      %c0_27 = arith.constant 0 : index
      %c0_28 = arith.constant 0 : index
      %c0_29 = arith.constant 0 : index
      %43 = vector.load %arg8[%c0_27, %c0_28, %c0_29] : memref<1x16x16xf32, #tpu.memory_space<vmem>>, vector<1x16x16xf32>
      %44 = vector.shape_cast %43 : vector<1x16x16xf32> to vector<16x16xf32>
      %45 = vector.shape_cast %42 : vector<16x16xf32> to vector<1x16x16xf32>
      tpu.vector_store %arg8[%c0_27, %c0_28, %c0_29], %45 {strides = array<i32>} : memref<1x16x16xf32, #tpu.memory_space<vmem>>, vector<1x16x16xf32>,
    } else {
    }
    return
  }
  func.func @transform_0(%arg0: i32, %arg1: i32) -> (i32, i32, i32) {
    %c0_i32 = arith.constant 0 : i32
    %c0_i32_0 = arith.constant 0 : i32
    return %arg0, %c0_i32, %arg1 : i32, i32, i32
  }
  func.func @transform_1(%arg0: i32, %arg1: i32) -> (i32, i32) {
    %c0_i32 = arith.constant 0 : i32
    %c0_i32_0 = arith.constant 0 : i32
    %c0_i32_1 = arith.constant 0 : i32
    return %c0_i32, %c0_i32_0 : i32, i32
  }
  func.func @transform_2(%arg0: i32, %arg1: i32) -> (i32, i32) {
    %c0_i32 = arith.constant 0 : i32
    %c0_i32_0 = arith.constant 0 : i32
    %c0_i32_1 = arith.constant 0 : i32
    return %c0_i32, %c0_i32_0 : i32, i32
  }
  func.func @transform_3(%arg0: i32, %arg1: i32) -> (i32, i32, i32) {
    %c0_i32 = arith.constant 0 : i32
    %c0_i32_0 = arith.constant 0 : i32
    return %arg0, %c0_i32, %arg1 : i32, i32, i32
  }
  func.func @transform_4(%arg0: i32, %arg1: i32) -> (i32, i32, i32) {
    %c0_i32 = arith.constant 0 : i32
    %c0_i32_0 = arith.constant 0 : i32
    return %arg0, %c0_i32, %arg1 : i32, i32, i32
  }
  func.func @transform_5(%arg0: i32, %arg1: i32) -> (i32, i32, i32) {
    %c0_i32 = arith.constant 0 : i32
    %c0_i32_0 = arith.constant 0 : i32
    return %arg0, %c0_i32, %arg1 : i32, i32, i32
  }
  func.func @transform_6(%arg0: i32, %arg1: i32) -> (i32, i32, i32) {
    %c0_i32 = arith.constant 0 : i32
    %c0_i32_0 = arith.constant 0 : i32
    %c0_i32_1 = arith.constant 0 : i32
    return %arg0, %c0_i32, %c0_i32_0 : i32, i32, i32
  }
}

module attributes {stable_mosaic.version = 11 : i64} {
  func.func @_yc_kernel(%arg0: i32, %arg1: i32, %arg2: memref<1x16x64xbf16, #tpu.memory_space<vmem>>, %arg3: memref<1x16x16xf32, #tpu.memory_space<vmem>>, %arg4: memref<1x64x16xf32, #tpu.memory_space<vmem>>) attributes {dimension_semantics = [#tpu.dimension_semantics<parallel>, #tpu.dimension_semantics<parallel>], iteration_bounds = array<i64: 2, 1>, scalar_prefetch = 0 : i64, scratch_operands = 0 : i64, tpu.core_type = #tpu.core_type<tc>, window_params = [{transform_indices = @transform_0, window_bounds = array<i64: 1, 16, 64>}, {transform_indices = @transform_1, window_bounds = array<i64: 1, 16, 16>}, {transform_indices = @transform_2, window_bounds = array<i64: 1, 64, 16>}]} {
    %c0 = arith.constant 0 : index
    %c0_0 = arith.constant 0 : index
    %c0_1 = arith.constant 0 : index
    %0 = vector.load %arg2[%c0, %c0_0, %c0_1] : memref<1x16x64xbf16, #tpu.memory_space<vmem>>, vector<1x16x64xbf16>
    %1 = vector.shape_cast %0 : vector<1x16x64xbf16> to vector<16x64xbf16>
    %2 = arith.extf %1 : vector<16x64xbf16> to vector<16x64xf32>
    %c0_2 = arith.constant 0 : index
    %c0_3 = arith.constant 0 : index
    %c0_4 = arith.constant 0 : index
    %3 = vector.load %arg3[%c0_2, %c0_3, %c0_4] : memref<1x16x16xf32, #tpu.memory_space<vmem>>, vector<1x16x16xf32>
    %4 = vector.shape_cast %3 : vector<1x16x16xf32> to vector<16x16xf32>
    %cst = arith.constant dense<0.000000e+00> : vector<64x16xf32>
    %5 = tpu.matmul %2, %4, %cst {dimension_numbers = #tpu.dot_dimension_numbers<[0], [0], [1], [1], [0, 1, 1, 1], [], []>} : vector<16x64xf32>, vector<16x16xf32>, vector<64x16xf32> -> vector<64x16xf32>
    %c0_5 = arith.constant 0 : index
    %c0_6 = arith.constant 0 : index
    %c0_7 = arith.constant 0 : index
    %6 = vector.load %arg4[%c0_5, %c0_6, %c0_7] : memref<1x64x16xf32, #tpu.memory_space<vmem>>, vector<1x64x16xf32>
    %7 = vector.shape_cast %6 : vector<1x64x16xf32> to vector<64x16xf32>
    %8 = vector.shape_cast %5 : vector<64x16xf32> to vector<1x64x16xf32>
    tpu.vector_store %arg4[%c0_5, %c0_6, %c0_7], %8 {strides = array<i32>} : memref<1x64x16xf32, #tpu.memory_space<vmem>>, vector<1x64x16xf32>,
    return
  }
  func.func @transform_0(%arg0: i32, %arg1: i32) -> (i32, i32, i32) {
    %c0_i32 = arith.constant 0 : i32
    %c0_i32_0 = arith.constant 0 : i32
    return %arg0, %c0_i32, %arg1 : i32, i32, i32
  }
  func.func @transform_1(%arg0: i32, %arg1: i32) -> (i32, i32, i32) {
    %c0_i32 = arith.constant 0 : i32
    %c0_i32_0 = arith.constant 0 : i32
    %c0_i32_1 = arith.constant 0 : i32
    return %arg0, %c0_i32, %c0_i32_0 : i32, i32, i32
  }
  func.func @transform_2(%arg0: i32, %arg1: i32) -> (i32, i32, i32) {
    %c0_i32 = arith.constant 0 : i32
    %c0_i32_0 = arith.constant 0 : i32
    return %arg0, %arg1, %c0_i32 : i32, i32, i32
  }
}

module attributes {stable_mosaic.version = 11 : i64} {
  func.func @_flash_kernel(%arg0: i32, %arg1: i32, %arg2: i32, %arg3: memref<1x16x64xbf16, #tpu.memory_space<vmem>>, %arg4: memref<1x16x64xbf16, #tpu.memory_space<vmem>>, %arg5: memref<1x16x64xbf16, #tpu.memory_space<vmem>>, %arg6: memref<1x16x64xf32, #tpu.memory_space<vmem>>, %arg7: memref<1x64xf32, #tpu.memory_space<vmem>>, %arg8: memref<1x64xf32, #tpu.memory_space<vmem>>, %arg9: memref<16x64xf32, #tpu.memory_space<vmem>>) attributes {dimension_semantics = [#tpu.dimension_semantics<parallel>, #tpu.dimension_semantics<parallel>, #tpu.dimension_semantics<arbitrary>], iteration_bounds = array<i64: 2, 1, 1>, scalar_prefetch = 0 : i64, scratch_operands = 3 : i64, tpu.core_type = #tpu.core_type<tc>, window_params = [{transform_indices = @transform_0, window_bounds = array<i64: 1, 16, 64>}, {transform_indices = @transform_1, window_bounds = array<i64: 1, 16, 64>}, {transform_indices = @transform_2, window_bounds = array<i64: 1, 16, 64>}, {transform_indices = @transform_3, window_bounds = array<i64: 1, 16, 64>}]} {
    %c0_i32 = arith.constant 0 : i32
    %0 = arith.cmpi eq, %arg2, %c0_i32 : i32
    %1 = arith.extui %0 : i1 to i32
    %c0_i32_0 = arith.constant 0 : i32
    %2 = arith.cmpi ne, %1, %c0_i32_0 : i32
    scf.if %2 {
      %cst_26 = arith.constant 0xFF800000 : f32
      %36 = vector.broadcast %cst_26 : f32 to vector<1x64xf32>
      %c0_27 = arith.constant 0 : index
      %c0_28 = arith.constant 0 : index
      %37 = vector.load %arg7[%c0_27, %c0_28] : memref<1x64xf32, #tpu.memory_space<vmem>>, vector<1x64xf32>
      tpu.vector_store %arg7[%c0_27, %c0_28], %36 {strides = array<i32>} : memref<1x64xf32, #tpu.memory_space<vmem>>, vector<1x64xf32>,
      %cst_29 = arith.constant 0.000000e+00 : f32
      %38 = vector.broadcast %cst_29 : f32 to vector<1x64xf32>
      %c0_30 = arith.constant 0 : index
      %c0_31 = arith.constant 0 : index
      %39 = vector.load %arg8[%c0_30, %c0_31] : memref<1x64xf32, #tpu.memory_space<vmem>>, vector<1x64xf32>
      tpu.vector_store %arg8[%c0_30, %c0_31], %38 {strides = array<i32>} : memref<1x64xf32, #tpu.memory_space<vmem>>, vector<1x64xf32>,
      %cst_32 = arith.constant 0.000000e+00 : f32
      %40 = vector.broadcast %cst_32 : f32 to vector<16x64xf32>
      %c0_33 = arith.constant 0 : index
      %c0_34 = arith.constant 0 : index
      %41 = vector.load %arg9[%c0_33, %c0_34] : memref<16x64xf32, #tpu.memory_space<vmem>>, vector<16x64xf32>
      tpu.vector_store %arg9[%c0_33, %c0_34], %40 {strides = array<i32>} : memref<16x64xf32, #tpu.memory_space<vmem>>, vector<16x64xf32>,
    } else {
    }
    %c0 = arith.constant 0 : index
    %c0_1 = arith.constant 0 : index
    %c0_2 = arith.constant 0 : index
    %3 = vector.load %arg3[%c0, %c0_1, %c0_2] : memref<1x16x64xbf16, #tpu.memory_space<vmem>>, vector<1x16x64xbf16>
    %4 = vector.shape_cast %3 : vector<1x16x64xbf16> to vector<16x64xbf16>
    %c0_3 = arith.constant 0 : index
    %c0_4 = arith.constant 0 : index
    %c0_5 = arith.constant 0 : index
    %5 = vector.load %arg4[%c0_3, %c0_4, %c0_5] : memref<1x16x64xbf16, #tpu.memory_space<vmem>>, vector<1x16x64xbf16>
    %6 = vector.shape_cast %5 : vector<1x16x64xbf16> to vector<16x64xbf16>
    %c0_6 = arith.constant 0 : index
    %c0_7 = arith.constant 0 : index
    %c0_8 = arith.constant 0 : index
    %7 = vector.load %arg5[%c0_6, %c0_7, %c0_8] : memref<1x16x64xbf16, #tpu.memory_space<vmem>>, vector<1x16x64xbf16>
    %8 = vector.shape_cast %7 : vector<1x16x64xbf16> to vector<16x64xbf16>
    %cst = arith.constant dense<0.000000e+00> : vector<64x64xf32>
    %9 = tpu.matmul %6, %4, %cst {dimension_numbers = #tpu.dot_dimension_numbers<[0], [0], [1], [1], [0, 1, 1, 1], [], []>} : vector<16x64xbf16>, vector<16x64xbf16>, vector<64x64xf32> -> vector<64x64xf32>
    %c0_9 = arith.constant 0 : index
    %c0_10 = arith.constant 0 : index
    %10 = vector.load %arg7[%c0_9, %c0_10] : memref<1x64xf32, #tpu.memory_space<vmem>>, vector<1x64xf32>
    %cst_11 = arith.constant dense<0xFF800000> : vector<64xf32>
    %11 = vector.multi_reduction <maximumf>, %9, %cst_11 [0] : vector<64x64xf32> to vector<64xf32>
    %12 = vector.shape_cast %11 : vector<64xf32> to vector<1x64xf32>
    %13 = arith.maximumf %10, %12 : vector<1x64xf32>
    %14 = arith.subf %10, %13 : vector<1x64xf32>
    %15 = math.exp %14 : vector<1x64xf32>
    %16 = vector.broadcast %13 : vector<1x64xf32> to vector<64x64xf32>
    %17 = arith.subf %9, %16 : vector<64x64xf32>
    %18 = math.exp %17 : vector<64x64xf32>
    %c0_12 = arith.constant 0 : index
    %c0_13 = arith.constant 0 : index
    %19 = vector.load %arg8[%c0_12, %c0_13] : memref<1x64xf32, #tpu.memory_space<vmem>>, vector<1x64xf32>
    %20 = arith.mulf %15, %19 : vector<1x64xf32>
    %cst_14 = arith.constant dense<0.000000e+00> : vector<64xf32>
    %21 = vector.multi_reduction <add>, %18, %cst_14 [0] : vector<64x64xf32> to vector<64xf32>
    %22 = vector.shape_cast %21 : vector<64xf32> to vector<1x64xf32>
    %23 = arith.addf %20, %22 : vector<1x64xf32>
    %c0_15 = arith.constant 0 : index
    %c0_16 = arith.constant 0 : index
    %24 = vector.load %arg8[%c0_15, %c0_16] : memref<1x64xf32, #tpu.memory_space<vmem>>, vector<1x64xf32>
    tpu.vector_store %arg8[%c0_15, %c0_16], %23 {strides = array<i32>} : memref<1x64xf32, #tpu.memory_space<vmem>>, vector<1x64xf32>,
    %c0_17 = arith.constant 0 : index
    %c0_18 = arith.constant 0 : index
    %25 = vector.load %arg9[%c0_17, %c0_18] : memref<16x64xf32, #tpu.memory_space<vmem>>, vector<16x64xf32>
    %26 = vector.broadcast %15 : vector<1x64xf32> to vector<16x64xf32>
    %27 = arith.mulf %26, %25 : vector<16x64xf32>
    %28 = arith.truncf %18 : vector<64x64xf32> to vector<64x64xbf16>
    %cst_19 = arith.constant dense<0.000000e+00> : vector<16x64xf32>
    %29 = tpu.matmul %8, %28, %cst_19 {dimension_numbers = #tpu.dot_dimension_numbers<[1], [0], [0], [1], [0, 0, 1, 1], [], []>} : vector<16x64xbf16>, vector<64x64xbf16>, vector<16x64xf32> -> vector<16x64xf32>
    %30 = arith.addf %27, %29 : vector<16x64xf32>
    %c0_20 = arith.constant 0 : index
    %c0_21 = arith.constant 0 : index
    %31 = vector.load %arg9[%c0_20, %c0_21] : memref<16x64xf32, #tpu.memory_space<vmem>>, vector<16x64xf32>
    tpu.vector_store %arg9[%c0_20, %c0_21], %30 {strides = array<i32>} : memref<16x64xf32, #tpu.memory_space<vmem>>, vector<16x64xf32>,
    %c0_22 = arith.constant 0 : index
    %c0_23 = arith.constant 0 : index
    %32 = vector.load %arg7[%c0_22, %c0_23] : memref<1x64xf32, #tpu.memory_space<vmem>>, vector<1x64xf32>
    tpu.vector_store %arg7[%c0_22, %c0_23], %13 {strides = array<i32>} : memref<1x64xf32, #tpu.memory_space<vmem>>, vector<1x64xf32>,
    %c0_i32_24 = arith.constant 0 : i32
    %33 = arith.cmpi eq, %arg2, %c0_i32_24 : i32
    %34 = arith.extui %33 : i1 to i32
    %c0_i32_25 = arith.constant 0 : i32
    %35 = arith.cmpi ne, %34, %c0_i32_25 : i32
    scf.if %35 {
      %c0_26 = arith.constant 0 : index
      %c0_27 = arith.constant 0 : index
      %36 = vector.load %arg8[%c0_26, %c0_27] : memref<1x64xf32, #tpu.memory_space<vmem>>, vector<1x64xf32>
      %37 = tpu.reciprocal %36 {approx = true} : vector<1x64xf32> -> vector<1x64xf32>
      %c0_28 = arith.constant 0 : index
      %c0_29 = arith.constant 0 : index
      %38 = vector.load %arg9[%c0_28, %c0_29] : memref<16x64xf32, #tpu.memory_space<vmem>>, vector<16x64xf32>
      %39 = vector.broadcast %37 : vector<1x64xf32> to vector<16x64xf32>
      %40 = arith.mulf %38, %39 : vector<16x64xf32>
      %c0_30 = arith.constant 0 : index
      %c0_31 = arith.constant 0 : index
      %c0_32 = arith.constant 0 : index
      %41 = vector.load %arg6[%c0_30, %c0_31, %c0_32] : memref<1x16x64xf32, #tpu.memory_space<vmem>>, vector<1x16x64xf32>
      %42 = vector.shape_cast %41 : vector<1x16x64xf32> to vector<16x64xf32>
      %43 = vector.shape_cast %40 : vector<16x64xf32> to vector<1x16x64xf32>
      tpu.vector_store %arg6[%c0_30, %c0_31, %c0_32], %43 {strides = array<i32>} : memref<1x16x64xf32, #tpu.memory_space<vmem>>, vector<1x16x64xf32>,
    } else {
    }
    return
  }
  func.func @transform_0(%arg0: i32, %arg1: i32, %arg2: i32) -> (i32, i32, i32) {
    %c0_i32 = arith.constant 0 : i32
    %c0_i32_0 = arith.constant 0 : i32
    return %arg0, %c0_i32, %arg1 : i32, i32, i32
  }
  func.func @transform_1(%arg0: i32, %arg1: i32, %arg2: i32) -> (i32, i32, i32) {
    %c0_i32 = arith.constant 0 : i32
    %c0_i32_0 = arith.constant 0 : i32
    return %arg0, %c0_i32, %arg2 : i32, i32, i32
  }
  func.func @transform_2(%arg0: i32, %arg1: i32, %arg2: i32) -> (i32, i32, i32) {
    %c0_i32 = arith.constant 0 : i32
    %c0_i32_0 = arith.constant 0 : i32
    return %arg0, %c0_i32, %arg2 : i32, i32, i32
  }
  func.func @transform_3(%arg0: i32, %arg1: i32, %arg2: i32) -> (i32, i32, i32) {
    %c0_i32 = arith.constant 0 : i32
    %c0_i32_0 = arith.constant 0 : i32
    return %arg0, %c0_i32, %arg1 : i32, i32, i32
  }
}

module attributes {stable_mosaic.version = 11 : i64} {
  func.func @_fuse_kernel(%arg0: i32, %arg1: i32, %arg2: memref<1x4x256xf32, #tpu.memory_space<vmem>>, %arg3: memref<1x4x256xf32, #tpu.memory_space<vmem>>, %arg4: memref<1x4x256xf32, #tpu.memory_space<vmem>>, %arg5: memref<4x4xf32, #tpu.memory_space<vmem>>, %arg6: memref<4x4xf32, #tpu.memory_space<vmem>>, %arg7: memref<4x1xf32, #tpu.memory_space<vmem>>, %arg8: memref<1x4x256xf32, #tpu.memory_space<vmem>>) attributes {dimension_semantics = [#tpu.dimension_semantics<parallel>, #tpu.dimension_semantics<parallel>], iteration_bounds = array<i64: 2, 1>, scalar_prefetch = 0 : i64, scratch_operands = 0 : i64, tpu.core_type = #tpu.core_type<tc>, window_params = [{transform_indices = @transform_0, window_bounds = array<i64: 1, 4, 256>}, {transform_indices = @transform_1, window_bounds = array<i64: 1, 4, 256>}, {transform_indices = @transform_2, window_bounds = array<i64: 1, 4, 256>}, {pipeline_mode = #tpu.pipeline_mode<synchronous>, transform_indices = @transform_3, window_bounds = array<i64: 4, 4>}, {pipeline_mode = #tpu.pipeline_mode<synchronous>, transform_indices = @transform_4, window_bounds = array<i64: 4, 4>}, {pipeline_mode = #tpu.pipeline_mode<synchronous>, transform_indices = @transform_5, window_bounds = array<i64: 4, 1>}, {transform_indices = @transform_6, window_bounds = array<i64: 1, 4, 256>}]} {
    %c0 = arith.constant 0 : index
    %c0_0 = arith.constant 0 : index
    %c0_1 = arith.constant 0 : index
    %0 = vector.load %arg2[%c0, %c0_0, %c0_1] : memref<1x4x256xf32, #tpu.memory_space<vmem>>, vector<1x4x256xf32>
    %1 = vector.shape_cast %0 : vector<1x4x256xf32> to vector<4x256xf32>
    %c0_2 = arith.constant 0 : index
    %c0_3 = arith.constant 0 : index
    %2 = vector.load %arg5[%c0_2, %c0_3] : memref<4x4xf32, #tpu.memory_space<vmem>>, vector<4x4xf32>
    %c0_4 = arith.constant 0 : index
    %c0_5 = arith.constant 0 : index
    %c0_6 = arith.constant 0 : index
    %3 = vector.load %arg3[%c0_4, %c0_5, %c0_6] : memref<1x4x256xf32, #tpu.memory_space<vmem>>, vector<1x4x256xf32>
    %4 = vector.shape_cast %3 : vector<1x4x256xf32> to vector<4x256xf32>
    %cst = arith.constant dense<0.000000e+00> : vector<4x256xf32>
    %5 = tpu.matmul %2, %4, %cst {dimension_numbers = #tpu.dot_dimension_numbers<[1], [0], [0], [1], [0, 0, 1, 1], [], []>} : vector<4x4xf32>, vector<4x256xf32>, vector<4x256xf32> -> vector<4x256xf32>
    %6 = arith.addf %1, %5 : vector<4x256xf32>
    %c0_7 = arith.constant 0 : index
    %c0_8 = arith.constant 0 : index
    %7 = vector.load %arg6[%c0_7, %c0_8] : memref<4x4xf32, #tpu.memory_space<vmem>>, vector<4x4xf32>
    %c0_9 = arith.constant 0 : index
    %c0_10 = arith.constant 0 : index
    %c0_11 = arith.constant 0 : index
    %8 = vector.load %arg4[%c0_9, %c0_10, %c0_11] : memref<1x4x256xf32, #tpu.memory_space<vmem>>, vector<1x4x256xf32>
    %9 = vector.shape_cast %8 : vector<1x4x256xf32> to vector<4x256xf32>
    %cst_12 = arith.constant dense<0.000000e+00> : vector<4x256xf32>
    %10 = tpu.matmul %7, %9, %cst_12 {dimension_numbers = #tpu.dot_dimension_numbers<[1], [0], [0], [1], [0, 0, 1, 1], [], []>} : vector<4x4xf32>, vector<4x256xf32>, vector<4x256xf32> -> vector<4x256xf32>
    %11 = arith.addf %6, %10 : vector<4x256xf32>
    %c0_13 = arith.constant 0 : index
    %c0_14 = arith.constant 0 : index
    %12 = vector.load %arg7[%c0_13, %c0_14] : memref<4x1xf32, #tpu.memory_space<vmem>>, vector<4x1xf32>
    %13 = vector.broadcast %12 : vector<4x1xf32> to vector<4x256xf32>
    %14 = arith.addf %11, %13 : vector<4x256xf32>
    %c0_15 = arith.constant 0 : index
    %c0_16 = arith.constant 0 : index
    %c0_17 = arith.constant 0 : index
    %15 = vector.load %arg8[%c0_15, %c0_16, %c0_17] : memref<1x4x256xf32, #tpu.memory_space<vmem>>, vector<1x4x256xf32>
    %16 = vector.shape_cast %15 : vector<1x4x256xf32> to vector<4x256xf32>
    %17 = vector.shape_cast %14 : vector<4x256xf32> to vector<1x4x256xf32>
    tpu.vector_store %arg8[%c0_15, %c0_16, %c0_17], %17 {strides = array<i32>} : memref<1x4x256xf32, #tpu.memory_space<vmem>>, vector<1x4x256xf32>,
    return
  }
  func.func @transform_0(%arg0: i32, %arg1: i32) -> (i32, i32, i32) {
    %c0_i32 = arith.constant 0 : i32
    %c0_i32_0 = arith.constant 0 : i32
    return %arg0, %c0_i32, %arg1 : i32, i32, i32
  }
  func.func @transform_1(%arg0: i32, %arg1: i32) -> (i32, i32, i32) {
    %c0_i32 = arith.constant 0 : i32
    %c0_i32_0 = arith.constant 0 : i32
    return %arg0, %c0_i32, %arg1 : i32, i32, i32
  }
  func.func @transform_2(%arg0: i32, %arg1: i32) -> (i32, i32, i32) {
    %c0_i32 = arith.constant 0 : i32
    %c0_i32_0 = arith.constant 0 : i32
    return %arg0, %c0_i32, %arg1 : i32, i32, i32
  }
  func.func @transform_3(%arg0: i32, %arg1: i32) -> (i32, i32) {
    %c0_i32 = arith.constant 0 : i32
    %c0_i32_0 = arith.constant 0 : i32
    %c0_i32_1 = arith.constant 0 : i32
    return %c0_i32, %c0_i32_0 : i32, i32
  }
  func.func @transform_4(%arg0: i32, %arg1: i32) -> (i32, i32) {
    %c0_i32 = arith.constant 0 : i32
    %c0_i32_0 = arith.constant 0 : i32
    %c0_i32_1 = arith.constant 0 : i32
    return %c0_i32, %c0_i32_0 : i32, i32
  }
  func.func @transform_5(%arg0: i32, %arg1: i32) -> (i32, i32) {
    %c0_i32 = arith.constant 0 : i32
    %c0_i32_0 = arith.constant 0 : i32
    %c0_i32_1 = arith.constant 0 : i32
    return %c0_i32, %c0_i32_0 : i32, i32
  }
  func.func @transform_6(%arg0: i32, %arg1: i32) -> (i32, i32, i32) {
    %c0_i32 = arith.constant 0 : i32
    %c0_i32_0 = arith.constant 0 : i32
    return %arg0, %c0_i32, %arg1 : i32, i32, i32
  }
}

module attributes {stable_mosaic.version = 11 : i64} {
  func.func @kernel(%arg0: i32, %arg1: memref<1x4x256xf32, #tpu.memory_space<vmem>>, %arg2: memref<2x256xf32, #tpu.memory_space<vmem>>, %arg3: memref<144x4xf32, #tpu.memory_space<vmem>>, %arg4: memref<16x1xf32, #tpu.memory_space<vmem>>, %arg5: memref<9x16xf32, #tpu.memory_space<vmem>>, %arg6: memref<1x1xf32, #tpu.memory_space<vmem>>, %arg7: memref<1x1x256xf32, #tpu.memory_space<vmem>>, %arg8: memref<16x256xf32, #tpu.memory_space<vmem>>) attributes {dimension_semantics = [#tpu.dimension_semantics<parallel>], iteration_bounds = array<i64: 2>, scalar_prefetch = 0 : i64, scratch_operands = 1 : i64, tpu.core_type = #tpu.core_type<tc>, window_params = [{transform_indices = @transform_0, window_bounds = array<i64: 1, 4, 256>}, {pipeline_mode = #tpu.pipeline_mode<synchronous>, transform_indices = @transform_1, window_bounds = array<i64: 2, 256>}, {pipeline_mode = #tpu.pipeline_mode<synchronous>, transform_indices = @transform_2, window_bounds = array<i64: 144, 4>}, {pipeline_mode = #tpu.pipeline_mode<synchronous>, transform_indices = @transform_3, window_bounds = array<i64: 16, 1>}, {pipeline_mode = #tpu.pipeline_mode<synchronous>, transform_indices = @transform_4, window_bounds = array<i64: 9, 16>}, {pipeline_mode = #tpu.pipeline_mode<synchronous>, transform_indices = @transform_5, window_bounds = array<i64: 1, 1>}, {transform_indices = @transform_6, window_bounds = array<i64: 1, 1, 256>}]} {
    %c0 = arith.constant 0 : index
    %c0_0 = arith.constant 0 : index
    %c0_1 = arith.constant 0 : index
    %0 = vector.load %arg1[%c0, %c0_0, %c0_1] : memref<1x4x256xf32, #tpu.memory_space<vmem>>, vector<1x4x256xf32>
    %1 = vector.shape_cast %0 : vector<1x4x256xf32> to vector<4x256xf32>
    %c0_2 = arith.constant 0 : index
    %c0_3 = arith.constant 0 : index
    %2 = vector.load %arg3[%c0_2, %c0_3] : memref<144x4xf32, #tpu.memory_space<vmem>>, vector<144x4xf32>
    %cst = arith.constant dense<0.000000e+00> : vector<144x256xf32>
    %3 = tpu.matmul %2, %1, %cst {dimension_numbers = #tpu.dot_dimension_numbers<[1], [0], [0], [1], [0, 0, 1, 1], [], []>} : vector<144x4xf32>, vector<4x256xf32>, vector<144x256xf32> -> vector<144x256xf32>
    %c0_4 = arith.constant 0 : index
    %c0_5 = arith.constant 0 : index
    %4 = vector.load %arg2[%c0_4, %c0_5] : memref<2x256xf32, #tpu.memory_space<vmem>>, vector<1x256xf32>
    %c1 = arith.constant 1 : index
    %c0_6 = arith.constant 0 : index
    %5 = vector.load %arg2[%c1, %c0_6] : memref<2x256xf32, #tpu.memory_space<vmem>>, vector<1x256xf32>
    %cst_7 = arith.constant 1.000000e+00 : f32
    %6 = vector.broadcast %cst_7 : f32 to vector<1x256xf32>
    %7 = arith.cmpf oge, %4, %6 : vector<1x256xf32>
    %cst_8 = arith.constant 1.600000e+01 : f32
    %8 = vector.broadcast %cst_8 : f32 to vector<1x256xf32>
    %9 = arith.cmpf ole, %4, %8 : vector<1x256xf32>
    %10 = arith.andi %7, %9 : vector<1x256xi1>
    %cst_9 = arith.constant 1.000000e+00 : f32
    %11 = vector.broadcast %cst_9 : f32 to vector<1x256xf32>
    %12 = arith.cmpf oge, %5, %11 : vector<1x256xf32>
    %13 = arith.andi %10, %12 : vector<1x256xi1>
    %cst_10 = arith.constant 1.600000e+01 : f32
    %14 = vector.broadcast %cst_10 : f32 to vector<1x256xf32>
    %15 = arith.cmpf ole, %5, %14 : vector<1x256xf32>
    %16 = arith.andi %13, %15 : vector<1x256xi1>
    %cst_11 = arith.constant 1.000000e+00 : f32
    %17 = vector.broadcast %cst_11 : f32 to vector<1x256xf32>
    %18 = arith.cmpf oge, %4, %17 : vector<1x256xf32>
    %cst_12 = arith.constant 1.600000e+01 : f32
    %19 = vector.broadcast %cst_12 : f32 to vector<1x256xf32>
    %20 = arith.cmpf ole, %4, %19 : vector<1x256xf32>
    %21 = arith.andi %18, %20 : vector<1x256xi1>
    %cst_13 = arith.constant 0.000000e+00 : f32
    %22 = vector.broadcast %cst_13 : f32 to vector<1x256xf32>
    %23 = arith.cmpf oge, %5, %22 : vector<1x256xf32>
    %24 = arith.andi %21, %23 : vector<1x256xi1>
    %cst_14 = arith.constant 1.500000e+01 : f32
    %25 = vector.broadcast %cst_14 : f32 to vector<1x256xf32>
    %26 = arith.cmpf ole, %5, %25 : vector<1x256xf32>
    %27 = arith.andi %24, %26 : vector<1x256xi1>
    %cst_15 = arith.constant 1.000000e+00 : f32
    %28 = vector.broadcast %cst_15 : f32 to vector<1x256xf32>
    %29 = arith.cmpf oge, %4, %28 : vector<1x256xf32>
    %cst_16 = arith.constant 1.600000e+01 : f32
    %30 = vector.broadcast %cst_16 : f32 to vector<1x256xf32>
    %31 = arith.cmpf ole, %4, %30 : vector<1x256xf32>
    %32 = arith.andi %29, %31 : vector<1x256xi1>
    %cst_17 = arith.constant -1.000000e+00 : f32
    %33 = vector.broadcast %cst_17 : f32 to vector<1x256xf32>
    %34 = arith.cmpf oge, %5, %33 : vector<1x256xf32>
    %35 = arith.andi %32, %34 : vector<1x256xi1>
    %cst_18 = arith.constant 1.400000e+01 : f32
    %36 = vector.broadcast %cst_18 : f32 to vector<1x256xf32>
    %37 = arith.cmpf ole, %5, %36 : vector<1x256xf32>
    %38 = arith.andi %35, %37 : vector<1x256xi1>
    %cst_19 = arith.constant 0.000000e+00 : f32
    %39 = vector.broadcast %cst_19 : f32 to vector<1x256xf32>
    %40 = arith.cmpf oge, %4, %39 : vector<1x256xf32>
    %cst_20 = arith.constant 1.500000e+01 : f32
    %41 = vector.broadcast %cst_20 : f32 to vector<1x256xf32>
    %42 = arith.cmpf ole, %4, %41 : vector<1x256xf32>
    %43 = arith.andi %40, %42 : vector<1x256xi1>
    %cst_21 = arith.constant 1.000000e+00 : f32
    %44 = vector.broadcast %cst_21 : f32 to vector<1x256xf32>
    %45 = arith.cmpf oge, %5, %44 : vector<1x256xf32>
    %46 = arith.andi %43, %45 : vector<1x256xi1>
    %cst_22 = arith.constant 1.600000e+01 : f32
    %47 = vector.broadcast %cst_22 : f32 to vector<1x256xf32>
    %48 = arith.cmpf ole, %5, %47 : vector<1x256xf32>
    %49 = arith.andi %46, %48 : vector<1x256xi1>
    %cst_23 = arith.constant 0.000000e+00 : f32
    %50 = vector.broadcast %cst_23 : f32 to vector<1x256xf32>
    %51 = arith.cmpf oge, %4, %50 : vector<1x256xf32>
    %cst_24 = arith.constant 1.500000e+01 : f32
    %52 = vector.broadcast %cst_24 : f32 to vector<1x256xf32>
    %53 = arith.cmpf ole, %4, %52 : vector<1x256xf32>
    %54 = arith.andi %51, %53 : vector<1x256xi1>
    %cst_25 = arith.constant 0.000000e+00 : f32
    %55 = vector.broadcast %cst_25 : f32 to vector<1x256xf32>
    %56 = arith.cmpf oge, %5, %55 : vector<1x256xf32>
    %57 = arith.andi %54, %56 : vector<1x256xi1>
    %cst_26 = arith.constant 1.500000e+01 : f32
    %58 = vector.broadcast %cst_26 : f32 to vector<1x256xf32>
    %59 = arith.cmpf ole, %5, %58 : vector<1x256xf32>
    %60 = arith.andi %57, %59 : vector<1x256xi1>
    %cst_27 = arith.constant 0.000000e+00 : f32
    %61 = vector.broadcast %cst_27 : f32 to vector<1x256xf32>
    %62 = arith.cmpf oge, %4, %61 : vector<1x256xf32>
    %cst_28 = arith.constant 1.500000e+01 : f32
    %63 = vector.broadcast %cst_28 : f32 to vector<1x256xf32>
    %64 = arith.cmpf ole, %4, %63 : vector<1x256xf32>
    %65 = arith.andi %62, %64 : vector<1x256xi1>
    %cst_29 = arith.constant -1.000000e+00 : f32
    %66 = vector.broadcast %cst_29 : f32 to vector<1x256xf32>
    %67 = arith.cmpf oge, %5, %66 : vector<1x256xf32>
    %68 = arith.andi %65, %67 : vector<1x256xi1>
    %cst_30 = arith.constant 1.400000e+01 : f32
    %69 = vector.broadcast %cst_30 : f32 to vector<1x256xf32>
    %70 = arith.cmpf ole, %5, %69 : vector<1x256xf32>
    %71 = arith.andi %68, %70 : vector<1x256xi1>
    %cst_31 = arith.constant -1.000000e+00 : f32
    %72 = vector.broadcast %cst_31 : f32 to vector<1x256xf32>
    %73 = arith.cmpf oge, %4, %72 : vector<1x256xf32>
    %cst_32 = arith.constant 1.400000e+01 : f32
    %74 = vector.broadcast %cst_32 : f32 to vector<1x256xf32>
    %75 = arith.cmpf ole, %4, %74 : vector<1x256xf32>
    %76 = arith.andi %73, %75 : vector<1x256xi1>
    %cst_33 = arith.constant 1.000000e+00 : f32
    %77 = vector.broadcast %cst_33 : f32 to vector<1x256xf32>
    %78 = arith.cmpf oge, %5, %77 : vector<1x256xf32>
    %79 = arith.andi %76, %78 : vector<1x256xi1>
    %cst_34 = arith.constant 1.600000e+01 : f32
    %80 = vector.broadcast %cst_34 : f32 to vector<1x256xf32>
    %81 = arith.cmpf ole, %5, %80 : vector<1x256xf32>
    %82 = arith.andi %79, %81 : vector<1x256xi1>
    %cst_35 = arith.constant -1.000000e+00 : f32
    %83 = vector.broadcast %cst_35 : f32 to vector<1x256xf32>
    %84 = arith.cmpf oge, %4, %83 : vector<1x256xf32>
    %cst_36 = arith.constant 1.400000e+01 : f32
    %85 = vector.broadcast %cst_36 : f32 to vector<1x256xf32>
    %86 = arith.cmpf ole, %4, %85 : vector<1x256xf32>
    %87 = arith.andi %84, %86 : vector<1x256xi1>
    %cst_37 = arith.constant 0.000000e+00 : f32
    %88 = vector.broadcast %cst_37 : f32 to vector<1x256xf32>
    %89 = arith.cmpf oge, %5, %88 : vector<1x256xf32>
    %90 = arith.andi %87, %89 : vector<1x256xi1>
    %cst_38 = arith.constant 1.500000e+01 : f32
    %91 = vector.broadcast %cst_38 : f32 to vector<1x256xf32>
    %92 = arith.cmpf ole, %5, %91 : vector<1x256xf32>
    %93 = arith.andi %90, %92 : vector<1x256xi1>
    %cst_39 = arith.constant -1.000000e+00 : f32
    %94 = vector.broadcast %cst_39 : f32 to vector<1x256xf32>
    %95 = arith.cmpf oge, %4, %94 : vector<1x256xf32>
    %cst_40 = arith.constant 1.400000e+01 : f32
    %96 = vector.broadcast %cst_40 : f32 to vector<1x256xf32>
    %97 = arith.cmpf ole, %4, %96 : vector<1x256xf32>
    %98 = arith.andi %95, %97 : vector<1x256xi1>
    %cst_41 = arith.constant -1.000000e+00 : f32
    %99 = vector.broadcast %cst_41 : f32 to vector<1x256xf32>
    %100 = arith.cmpf oge, %5, %99 : vector<1x256xf32>
    %101 = arith.andi %98, %100 : vector<1x256xi1>
    %cst_42 = arith.constant 1.400000e+01 : f32
    %102 = vector.broadcast %cst_42 : f32 to vector<1x256xf32>
    %103 = arith.cmpf ole, %5, %102 : vector<1x256xf32>
    %104 = arith.andi %101, %103 : vector<1x256xi1>
    %c0_43 = arith.constant 0 : index
    %c0_44 = arith.constant 0 : index
    %105 = vector.load %arg4[%c0_43, %c0_44] : memref<16x1xf32, #tpu.memory_space<vmem>>, vector<16x1xf32>
    %106 = vector.shape_cast %105 : vector<16x1xf32> to vector<16x1xf32>
    %107 = vector.broadcast %106 : vector<16x1xf32> to vector<16x256xf32>
    %c0_45 = arith.constant 0 : index
    %c0_46 = arith.constant 0 : index
    %108 = vector.load %arg8[%c0_45, %c0_46] : memref<16x256xf32, #tpu.memory_space<vmem>>, vector<16x256xf32>
    tpu.vector_store %arg8[%c0_45, %c0_46], %107 {strides = array<i32>} : memref<16x256xf32, #tpu.memory_space<vmem>>, vector<16x256xf32>,
    %109 = vector.extract_strided_slice %3 {offsets = [0, 0], sizes = [16, 256], strides = [1, 1]} : vector<144x256xf32> to vector<16x256xf32>
    %c17_i32 = arith.constant 17 : i32
    %110 = tpu.dynamic_rotate %109 by %c17_i32 dim 1 : vector<16x256xf32>, i32 -> vector<16x256xf32>
    %c0_47 = arith.constant 0 : index
    %c0_48 = arith.constant 0 : index
    %111 = vector.load %arg8[%c0_47, %c0_48] : memref<16x256xf32, #tpu.memory_space<vmem>>, vector<16x256xf32>
    %cst_49 = arith.constant 0.000000e+00 : f32
    %112 = vector.shape_cast %16 : vector<1x256xi1> to vector<1x256xi1>
    %113 = vector.broadcast %112 : vector<1x256xi1> to vector<16x256xi1>
    %114 = vector.broadcast %cst_49 : f32 to vector<16x256xf32>
    %115 = arith.select %113, %110, %114 : vector<16x256xi1>, vector<16x256xf32>
    %116 = arith.addf %111, %115 : vector<16x256xf32>
    %c0_50 = arith.constant 0 : index
    %c0_51 = arith.constant 0 : index
    %117 = vector.load %arg8[%c0_50, %c0_51] : memref<16x256xf32, #tpu.memory_space<vmem>>, vector<16x256xf32>
    tpu.vector_store %arg8[%c0_50, %c0_51], %116 {strides = array<i32>} : memref<16x256xf32, #tpu.memory_space<vmem>>, vector<16x256xf32>,
    %118 = vector.extract_strided_slice %3 {offsets = [16, 0], sizes = [16, 256], strides = [1, 1]} : vector<144x256xf32> to vector<16x256xf32>
    %c16_i32 = arith.constant 16 : i32
    %119 = tpu.dynamic_rotate %118 by %c16_i32 dim 1 : vector<16x256xf32>, i32 -> vector<16x256xf32>
    %c0_52 = arith.constant 0 : index
    %c0_53 = arith.constant 0 : index
    %120 = vector.load %arg8[%c0_52, %c0_53] : memref<16x256xf32, #tpu.memory_space<vmem>>, vector<16x256xf32>
    %cst_54 = arith.constant 0.000000e+00 : f32
    %121 = vector.shape_cast %27 : vector<1x256xi1> to vector<1x256xi1>
    %122 = vector.broadcast %121 : vector<1x256xi1> to vector<16x256xi1>
    %123 = vector.broadcast %cst_54 : f32 to vector<16x256xf32>
    %124 = arith.select %122, %119, %123 : vector<16x256xi1>, vector<16x256xf32>
    %125 = arith.addf %120, %124 : vector<16x256xf32>
    %c0_55 = arith.constant 0 : index
    %c0_56 = arith.constant 0 : index
    %126 = vector.load %arg8[%c0_55, %c0_56] : memref<16x256xf32, #tpu.memory_space<vmem>>, vector<16x256xf32>
    tpu.vector_store %arg8[%c0_55, %c0_56], %125 {strides = array<i32>} : memref<16x256xf32, #tpu.memory_space<vmem>>, vector<16x256xf32>,
    %127 = vector.extract_strided_slice %3 {offsets = [32, 0], sizes = [16, 256], strides = [1, 1]} : vector<144x256xf32> to vector<16x256xf32>
    %c15_i32 = arith.constant 15 : i32
    %128 = tpu.dynamic_rotate %127 by %c15_i32 dim 1 : vector<16x256xf32>, i32 -> vector<16x256xf32>
    %c0_57 = arith.constant 0 : index
    %c0_58 = arith.constant 0 : index
    %129 = vector.load %arg8[%c0_57, %c0_58] : memref<16x256xf32, #tpu.memory_space<vmem>>, vector<16x256xf32>
    %cst_59 = arith.constant 0.000000e+00 : f32
    %130 = vector.shape_cast %38 : vector<1x256xi1> to vector<1x256xi1>
    %131 = vector.broadcast %130 : vector<1x256xi1> to vector<16x256xi1>
    %132 = vector.broadcast %cst_59 : f32 to vector<16x256xf32>
    %133 = arith.select %131, %128, %132 : vector<16x256xi1>, vector<16x256xf32>
    %134 = arith.addf %129, %133 : vector<16x256xf32>
    %c0_60 = arith.constant 0 : index
    %c0_61 = arith.constant 0 : index
    %135 = vector.load %arg8[%c0_60, %c0_61] : memref<16x256xf32, #tpu.memory_space<vmem>>, vector<16x256xf32>
    tpu.vector_store %arg8[%c0_60, %c0_61], %134 {strides = array<i32>} : memref<16x256xf32, #tpu.memory_space<vmem>>, vector<16x256xf32>,
    %136 = vector.extract_strided_slice %3 {offsets = [48, 0], sizes = [16, 256], strides = [1, 1]} : vector<144x256xf32> to vector<16x256xf32>
    %c1_i32 = arith.constant 1 : i32
    %137 = tpu.dynamic_rotate %136 by %c1_i32 dim 1 : vector<16x256xf32>, i32 -> vector<16x256xf32>
    %c0_62 = arith.constant 0 : index
    %c0_63 = arith.constant 0 : index
    %138 = vector.load %arg8[%c0_62, %c0_63] : memref<16x256xf32, #tpu.memory_space<vmem>>, vector<16x256xf32>
    %cst_64 = arith.constant 0.000000e+00 : f32
    %139 = vector.shape_cast %49 : vector<1x256xi1> to vector<1x256xi1>
    %140 = vector.broadcast %139 : vector<1x256xi1> to vector<16x256xi1>
    %141 = vector.broadcast %cst_64 : f32 to vector<16x256xf32>
    %142 = arith.select %140, %137, %141 : vector<16x256xi1>, vector<16x256xf32>
    %143 = arith.addf %138, %142 : vector<16x256xf32>
    %c0_65 = arith.constant 0 : index
    %c0_66 = arith.constant 0 : index
    %144 = vector.load %arg8[%c0_65, %c0_66] : memref<16x256xf32, #tpu.memory_space<vmem>>, vector<16x256xf32>
    tpu.vector_store %arg8[%c0_65, %c0_66], %143 {strides = array<i32>} : memref<16x256xf32, #tpu.memory_space<vmem>>, vector<16x256xf32>,
    %145 = vector.extract_strided_slice %3 {offsets = [64, 0], sizes = [16, 256], strides = [1, 1]} : vector<144x256xf32> to vector<16x256xf32>
    %c0_i32 = arith.constant 0 : i32
    %146 = tpu.dynamic_rotate %145 by %c0_i32 dim 1 : vector<16x256xf32>, i32 -> vector<16x256xf32>
    %c0_67 = arith.constant 0 : index
    %c0_68 = arith.constant 0 : index
    %147 = vector.load %arg8[%c0_67, %c0_68] : memref<16x256xf32, #tpu.memory_space<vmem>>, vector<16x256xf32>
    %cst_69 = arith.constant 0.000000e+00 : f32
    %148 = vector.shape_cast %60 : vector<1x256xi1> to vector<1x256xi1>
    %149 = vector.broadcast %148 : vector<1x256xi1> to vector<16x256xi1>
    %150 = vector.broadcast %cst_69 : f32 to vector<16x256xf32>
    %151 = arith.select %149, %146, %150 : vector<16x256xi1>, vector<16x256xf32>
    %152 = arith.addf %147, %151 : vector<16x256xf32>
    %c0_70 = arith.constant 0 : index
    %c0_71 = arith.constant 0 : index
    %153 = vector.load %arg8[%c0_70, %c0_71] : memref<16x256xf32, #tpu.memory_space<vmem>>, vector<16x256xf32>
    tpu.vector_store %arg8[%c0_70, %c0_71], %152 {strides = array<i32>} : memref<16x256xf32, #tpu.memory_space<vmem>>, vector<16x256xf32>,
    %154 = vector.extract_strided_slice %3 {offsets = [80, 0], sizes = [16, 256], strides = [1, 1]} : vector<144x256xf32> to vector<16x256xf32>
    %c255_i32 = arith.constant 255 : i32
    %155 = tpu.dynamic_rotate %154 by %c255_i32 dim 1 : vector<16x256xf32>, i32 -> vector<16x256xf32>
    %c0_72 = arith.constant 0 : index
    %c0_73 = arith.constant 0 : index
    %156 = vector.load %arg8[%c0_72, %c0_73] : memref<16x256xf32, #tpu.memory_space<vmem>>, vector<16x256xf32>
    %cst_74 = arith.constant 0.000000e+00 : f32
    %157 = vector.shape_cast %71 : vector<1x256xi1> to vector<1x256xi1>
    %158 = vector.broadcast %157 : vector<1x256xi1> to vector<16x256xi1>
    %159 = vector.broadcast %cst_74 : f32 to vector<16x256xf32>
    %160 = arith.select %158, %155, %159 : vector<16x256xi1>, vector<16x256xf32>
    %161 = arith.addf %156, %160 : vector<16x256xf32>
    %c0_75 = arith.constant 0 : index
    %c0_76 = arith.constant 0 : index
    %162 = vector.load %arg8[%c0_75, %c0_76] : memref<16x256xf32, #tpu.memory_space<vmem>>, vector<16x256xf32>
    tpu.vector_store %arg8[%c0_75, %c0_76], %161 {strides = array<i32>} : memref<16x256xf32, #tpu.memory_space<vmem>>, vector<16x256xf32>,
    %163 = vector.extract_strided_slice %3 {offsets = [96, 0], sizes = [16, 256], strides = [1, 1]} : vector<144x256xf32> to vector<16x256xf32>
    %c241_i32 = arith.constant 241 : i32
    %164 = tpu.dynamic_rotate %163 by %c241_i32 dim 1 : vector<16x256xf32>, i32 -> vector<16x256xf32>
    %c0_77 = arith.constant 0 : index
    %c0_78 = arith.constant 0 : index
    %165 = vector.load %arg8[%c0_77, %c0_78] : memref<16x256xf32, #tpu.memory_space<vmem>>, vector<16x256xf32>
    %cst_79 = arith.constant 0.000000e+00 : f32
    %166 = vector.shape_cast %82 : vector<1x256xi1> to vector<1x256xi1>
    %167 = vector.broadcast %166 : vector<1x256xi1> to vector<16x256xi1>
    %168 = vector.broadcast %cst_79 : f32 to vector<16x256xf32>
    %169 = arith.select %167, %164, %168 : vector<16x256xi1>, vector<16x256xf32>
    %170 = arith.addf %165, %169 : vector<16x256xf32>
    %c0_80 = arith.constant 0 : index
    %c0_81 = arith.constant 0 : index
    %171 = vector.load %arg8[%c0_80, %c0_81] : memref<16x256xf32, #tpu.memory_space<vmem>>, vector<16x256xf32>
    tpu.vector_store %arg8[%c0_80, %c0_81], %170 {strides = array<i32>} : memref<16x256xf32, #tpu.memory_space<vmem>>, vector<16x256xf32>,
    %172 = vector.extract_strided_slice %3 {offsets = [112, 0], sizes = [16, 256], strides = [1, 1]} : vector<144x256xf32> to vector<16x256xf32>
    %c240_i32 = arith.constant 240 : i32
    %173 = tpu.dynamic_rotate %172 by %c240_i32 dim 1 : vector<16x256xf32>, i32 -> vector<16x256xf32>
    %c0_82 = arith.constant 0 : index
    %c0_83 = arith.constant 0 : index
    %174 = vector.load %arg8[%c0_82, %c0_83] : memref<16x256xf32, #tpu.memory_space<vmem>>, vector<16x256xf32>
    %cst_84 = arith.constant 0.000000e+00 : f32
    %175 = vector.shape_cast %93 : vector<1x256xi1> to vector<1x256xi1>
    %176 = vector.broadcast %175 : vector<1x256xi1> to vector<16x256xi1>
    %177 = vector.broadcast %cst_84 : f32 to vector<16x256xf32>
    %178 = arith.select %176, %173, %177 : vector<16x256xi1>, vector<16x256xf32>
    %179 = arith.addf %174, %178 : vector<16x256xf32>
    %c0_85 = arith.constant 0 : index
    %c0_86 = arith.constant 0 : index
    %180 = vector.load %arg8[%c0_85, %c0_86] : memref<16x256xf32, #tpu.memory_space<vmem>>, vector<16x256xf32>
    tpu.vector_store %arg8[%c0_85, %c0_86], %179 {strides = array<i32>} : memref<16x256xf32, #tpu.memory_space<vmem>>, vector<16x256xf32>,
    %181 = vector.extract_strided_slice %3 {offsets = [128, 0], sizes = [16, 256], strides = [1, 1]} : vector<144x256xf32> to vector<16x256xf32>
    %c239_i32 = arith.constant 239 : i32
    %182 = tpu.dynamic_rotate %181 by %c239_i32 dim 1 : vector<16x256xf32>, i32 -> vector<16x256xf32>
    %c0_87 = arith.constant 0 : index
    %c0_88 = arith.constant 0 : index
    %183 = vector.load %arg8[%c0_87, %c0_88] : memref<16x256xf32, #tpu.memory_space<vmem>>, vector<16x256xf32>
    %cst_89 = arith.constant 0.000000e+00 : f32
    %184 = vector.shape_cast %104 : vector<1x256xi1> to vector<1x256xi1>
    %185 = vector.broadcast %184 : vector<1x256xi1> to vector<16x256xi1>
    %186 = vector.broadcast %cst_89 : f32 to vector<16x256xf32>
    %187 = arith.select %185, %182, %186 : vector<16x256xi1>, vector<16x256xf32>
    %188 = arith.addf %183, %187 : vector<16x256xf32>
    %c0_90 = arith.constant 0 : index
    %c0_91 = arith.constant 0 : index
    %189 = vector.load %arg8[%c0_90, %c0_91] : memref<16x256xf32, #tpu.memory_space<vmem>>, vector<16x256xf32>
    tpu.vector_store %arg8[%c0_90, %c0_91], %188 {strides = array<i32>} : memref<16x256xf32, #tpu.memory_space<vmem>>, vector<16x256xf32>,
    %c0_92 = arith.constant 0 : index
    %c0_93 = arith.constant 0 : index
    %190 = vector.load %arg8[%c0_92, %c0_93] : memref<16x256xf32, #tpu.memory_space<vmem>>, vector<16x256xf32>
    %cst_94 = arith.constant 0.000000e+00 : f32
    %191 = vector.broadcast %cst_94 : f32 to vector<16x256xf32>
    %192 = arith.maximumf %190, %191 : vector<16x256xf32>
    %c0_95 = arith.constant 0 : index
    %c0_96 = arith.constant 0 : index
    %193 = vector.load %arg5[%c0_95, %c0_96] : memref<9x16xf32, #tpu.memory_space<vmem>>, vector<9x16xf32>
    %cst_97 = arith.constant dense<0.000000e+00> : vector<9x256xf32>
    %194 = tpu.matmul %193, %192, %cst_97 {dimension_numbers = #tpu.dot_dimension_numbers<[1], [0], [0], [1], [0, 0, 1, 1], [], []>} : vector<9x16xf32>, vector<16x256xf32>, vector<9x256xf32> -> vector<9x256xf32>
    %c0_98 = arith.constant 0 : index
    %c0_99 = arith.constant 0 : index
    %195 = vector.load %arg6[%c0_98, %c0_99] : memref<1x1xf32, #tpu.memory_space<vmem>>, vector<1x1xf32>
    %196 = vector.shape_cast %195 : vector<1x1xf32> to vector<1x1xf32>
    %197 = vector.broadcast %196 : vector<1x1xf32> to vector<1x256xf32>
    %198 = vector.extract_strided_slice %194 {offsets = [0, 0], sizes = [1, 256], strides = [1, 1]} : vector<9x256xf32> to vector<1x256xf32>
    %c17_i32_100 = arith.constant 17 : i32
    %199 = tpu.dynamic_rotate %198 by %c17_i32_100 dim 1 : vector<1x256xf32>, i32 -> vector<1x256xf32>
    %cst_101 = arith.constant 0.000000e+00 : f32
    %200 = vector.broadcast %cst_101 : f32 to vector<1x256xf32>
    %201 = arith.select %16, %199, %200 : vector<1x256xi1>, vector<1x256xf32>
    %202 = arith.addf %197, %201 : vector<1x256xf32>
    %203 = vector.extract_strided_slice %194 {offsets = [1, 0], sizes = [1, 256], strides = [1, 1]} : vector<9x256xf32> to vector<1x256xf32>
    %c16_i32_102 = arith.constant 16 : i32
    %204 = tpu.dynamic_rotate %203 by %c16_i32_102 dim 1 : vector<1x256xf32>, i32 -> vector<1x256xf32>
    %cst_103 = arith.constant 0.000000e+00 : f32
    %205 = vector.broadcast %cst_103 : f32 to vector<1x256xf32>
    %206 = arith.select %27, %204, %205 : vector<1x256xi1>, vector<1x256xf32>
    %207 = arith.addf %202, %206 : vector<1x256xf32>
    %208 = vector.extract_strided_slice %194 {offsets = [2, 0], sizes = [1, 256], strides = [1, 1]} : vector<9x256xf32> to vector<1x256xf32>
    %c15_i32_104 = arith.constant 15 : i32
    %209 = tpu.dynamic_rotate %208 by %c15_i32_104 dim 1 : vector<1x256xf32>, i32 -> vector<1x256xf32>
    %cst_105 = arith.constant 0.000000e+00 : f32
    %210 = vector.broadcast %cst_105 : f32 to vector<1x256xf32>
    %211 = arith.select %38, %209, %210 : vector<1x256xi1>, vector<1x256xf32>
    %212 = arith.addf %207, %211 : vector<1x256xf32>
    %213 = vector.extract_strided_slice %194 {offsets = [3, 0], sizes = [1, 256], strides = [1, 1]} : vector<9x256xf32> to vector<1x256xf32>
    %c1_i32_106 = arith.constant 1 : i32
    %214 = tpu.dynamic_rotate %213 by %c1_i32_106 dim 1 : vector<1x256xf32>, i32 -> vector<1x256xf32>
    %cst_107 = arith.constant 0.000000e+00 : f32
    %215 = vector.broadcast %cst_107 : f32 to vector<1x256xf32>
    %216 = arith.select %49, %214, %215 : vector<1x256xi1>, vector<1x256xf32>
    %217 = arith.addf %212, %216 : vector<1x256xf32>
    %218 = vector.extract_strided_slice %194 {offsets = [4, 0], sizes = [1, 256], strides = [1, 1]} : vector<9x256xf32> to vector<1x256xf32>
    %c0_i32_108 = arith.constant 0 : i32
    %219 = tpu.dynamic_rotate %218 by %c0_i32_108 dim 1 : vector<1x256xf32>, i32 -> vector<1x256xf32>
    %cst_109 = arith.constant 0.000000e+00 : f32
    %220 = vector.broadcast %cst_109 : f32 to vector<1x256xf32>
    %221 = arith.select %60, %219, %220 : vector<1x256xi1>, vector<1x256xf32>
    %222 = arith.addf %217, %221 : vector<1x256xf32>
    %223 = vector.extract_strided_slice %194 {offsets = [5, 0], sizes = [1, 256], strides = [1, 1]} : vector<9x256xf32> to vector<1x256xf32>
    %c255_i32_110 = arith.constant 255 : i32
    %224 = tpu.dynamic_rotate %223 by %c255_i32_110 dim 1 : vector<1x256xf32>, i32 -> vector<1x256xf32>
    %cst_111 = arith.constant 0.000000e+00 : f32
    %225 = vector.broadcast %cst_111 : f32 to vector<1x256xf32>
    %226 = arith.select %71, %224, %225 : vector<1x256xi1>, vector<1x256xf32>
    %227 = arith.addf %222, %226 : vector<1x256xf32>
    %228 = vector.extract_strided_slice %194 {offsets = [6, 0], sizes = [1, 256], strides = [1, 1]} : vector<9x256xf32> to vector<1x256xf32>
    %c241_i32_112 = arith.constant 241 : i32
    %229 = tpu.dynamic_rotate %228 by %c241_i32_112 dim 1 : vector<1x256xf32>, i32 -> vector<1x256xf32>
    %cst_113 = arith.constant 0.000000e+00 : f32
    %230 = vector.broadcast %cst_113 : f32 to vector<1x256xf32>
    %231 = arith.select %82, %229, %230 : vector<1x256xi1>, vector<1x256xf32>
    %232 = arith.addf %227, %231 : vector<1x256xf32>
    %233 = vector.extract_strided_slice %194 {offsets = [7, 0], sizes = [1, 256], strides = [1, 1]} : vector<9x256xf32> to vector<1x256xf32>
    %c240_i32_114 = arith.constant 240 : i32
    %234 = tpu.dynamic_rotate %233 by %c240_i32_114 dim 1 : vector<1x256xf32>, i32 -> vector<1x256xf32>
    %cst_115 = arith.constant 0.000000e+00 : f32
    %235 = vector.broadcast %cst_115 : f32 to vector<1x256xf32>
    %236 = arith.select %93, %234, %235 : vector<1x256xi1>, vector<1x256xf32>
    %237 = arith.addf %232, %236 : vector<1x256xf32>
    %238 = vector.extract_strided_slice %194 {offsets = [8, 0], sizes = [1, 256], strides = [1, 1]} : vector<9x256xf32> to vector<1x256xf32>
    %c239_i32_116 = arith.constant 239 : i32
    %239 = tpu.dynamic_rotate %238 by %c239_i32_116 dim 1 : vector<1x256xf32>, i32 -> vector<1x256xf32>
    %cst_117 = arith.constant 0.000000e+00 : f32
    %240 = vector.broadcast %cst_117 : f32 to vector<1x256xf32>
    %241 = arith.select %104, %239, %240 : vector<1x256xi1>, vector<1x256xf32>
    %242 = arith.addf %237, %241 : vector<1x256xf32>
    %cst_118 = arith.constant 0.000000e+00 : f32
    %243 = vector.broadcast %cst_118 : f32 to vector<1x256xf32>
    %244 = arith.subf %243, %242 : vector<1x256xf32>
    %245 = math.exp %244 : vector<1x256xf32>
    %cst_119 = arith.constant 1.000000e+00 : f32
    %246 = vector.broadcast %cst_119 : f32 to vector<1x256xf32>
    %247 = arith.addf %246, %245 : vector<1x256xf32>
    %cst_120 = arith.constant 1.000000e+00 : f32
    %248 = vector.broadcast %cst_120 : f32 to vector<1x256xf32>
    %249 = arith.divf %248, %247 : vector<1x256xf32>
    %c0_121 = arith.constant 0 : index
    %c0_122 = arith.constant 0 : index
    %c0_123 = arith.constant 0 : index
    %250 = vector.load %arg7[%c0_121, %c0_122, %c0_123] : memref<1x1x256xf32, #tpu.memory_space<vmem>>, vector<1x1x256xf32>
    %251 = vector.shape_cast %250 : vector<1x1x256xf32> to vector<1x256xf32>
    %252 = vector.shape_cast %249 : vector<1x256xf32> to vector<1x1x256xf32>
    tpu.vector_store %arg7[%c0_121, %c0_122, %c0_123], %252 {strides = array<i32>} : memref<1x1x256xf32, #tpu.memory_space<vmem>>, vector<1x1x256xf32>,
    return
  }
  func.func @transform_0(%arg0: i32) -> (i32, i32, i32) {
    %c0_i32 = arith.constant 0 : i32
    %c0_i32_0 = arith.constant 0 : i32
    %c0_i32_1 = arith.constant 0 : i32
    return %arg0, %c0_i32, %c0_i32_0 : i32, i32, i32
  }
  func.func @transform_1(%arg0: i32) -> (i32, i32) {
    %c0_i32 = arith.constant 0 : i32
    %c0_i32_0 = arith.constant 0 : i32
    %c0_i32_1 = arith.constant 0 : i32
    return %c0_i32, %c0_i32_0 : i32, i32
  }
  func.func @transform_2(%arg0: i32) -> (i32, i32) {
    %c0_i32 = arith.constant 0 : i32
    %c0_i32_0 = arith.constant 0 : i32
    %c0_i32_1 = arith.constant 0 : i32
    return %c0_i32, %c0_i32_0 : i32, i32
  }
  func.func @transform_3(%arg0: i32) -> (i32, i32) {
    %c0_i32 = arith.constant 0 : i32
    %c0_i32_0 = arith.constant 0 : i32
    %c0_i32_1 = arith.constant 0 : i32
    return %c0_i32, %c0_i32_0 : i32, i32
  }
  func.func @transform_4(%arg0: i32) -> (i32, i32) {
    %c0_i32 = arith.constant 0 : i32
    %c0_i32_0 = arith.constant 0 : i32
    %c0_i32_1 = arith.constant 0 : i32
    return %c0_i32, %c0_i32_0 : i32, i32
  }
  func.func @transform_5(%arg0: i32) -> (i32, i32) {
    %c0_i32 = arith.constant 0 : i32
    %c0_i32_0 = arith.constant 0 : i32
    %c0_i32_1 = arith.constant 0 : i32
    return %c0_i32, %c0_i32_0 : i32, i32
  }
  func.func @transform_6(%arg0: i32) -> (i32, i32, i32) {
    %c0_i32 = arith.constant 0 : i32
    %c0_i32_0 = arith.constant 0 : i32
    %c0_i32_1 = arith.constant 0 : i32
    return %arg0, %c0_i32, %c0_i32_0 : i32, i32, i32
  }
}

</mosaic_0001>

<llo_original>
// kernel: nonlocal_mask_forward.7
$region0: #{nonlocal_mask_forward.7}
  #allocation0 [shape = 'u32[]', space=smem, size = 0x4, offset = 0x4, fixed_abs, tag = 'smem constant byte address 0x4 - core index']
  #allocation1 [shape = 'u32[144,128]{1,0:T(1,128)}', space=vmem, size = 0x12000, scoped, tag = 'internal scratch']
  %s0 = inlined_call_operand.vmem [shape: bf16[2,16,64], index: 0, kind: input, shape index: {}]
  %s1 = inlined_call_operand.vmem [shape: f32[2,16,16], index: 1, kind: input, shape index: {}]
  %s2 = inlined_call_operand.vmem [shape: f32[2,64,16], index: 2, kind: output, shape index: {}]
  %s3 = sld [smem:[#allocation0]]
  $region41: #{nonlocal_mask_forward.7} parent=0
    _
  %s5 = ssub.s32 1, %s3
  %s6 = scalar_select 0, %s5, %s3
  loop: start=0, step=1, limit=4
  $region2: #{nonlocal_mask_forward.7} parent=0 // loop_pre_header
    _
  $region3: #{nonlocal_mask_forward.7} parent=0 // loop_header
    %s8 = sphi 0, %s12
    %p9 = scmp.ge.s32.totalorder %s8, 4
    %s15 = sphi 0, %s27
    %s16 = sphi 0, %s23
    %s17 = sphi 0, %s15
    %s18 = sphi 0, %s16
    %s19 = sphi 0, %s17
    %s20 = sphi 0, %s18
    %s32 = sphi 0, %s34
    %s35 = sphi 0, %s32
    %s36 = sphi 0, %s35
    %s52 = sphi 0, %s36
    %s58 = sphi 0, %s60
    %s61 = sphi 0, %s58
    %s62 = sphi 0, %s61
    %s78 = sphi 0, %s62
    %s86 = sphi 0, %s88
    %s89 = sphi 0, %s86
    %s90 = sphi 0, %s89
    %s106 = sphi 0, %s90
  $region4: #{nonlocal_mask_forward.7} parent=0 // loop_header_branch
    %11 = sbr.rel (%p9) target = $region8
  $region5: #{nonlocal_mask_forward.7} parent=0 // loop_body
    %s13 = ssub.s32 %s8, 1
    %s14 = ssub.s32 %s8, 2
    %s21 = sadd.s32 1, %s16
    %p22 = scmp.ge.s32.totalorder %s21, 1
    %s23 = scalar_select %p22, 0, %s21
    %s24 = sadd.s32 1, %s15
    %s25 = scalar_select %p22, %s24, %s15
    %p26 = scmp.ge.s32.totalorder %s25, 2
    %s27 = scalar_select %p26, 0, %s25
    %s28 = ssub.s32 %s15, %s27
    %s29 = ssub.s32 %s16, %s23
    %s30 = sor.u32 %s28, %s29
    %p31 = scmp.eq.s32.totalorder %s30, 0
    %s33 = sadd.s32 %s32, 1
    %s34 = scalar_select %p31, %s32, %s33
    %p37 = pneg %p31
    %p38 = scmp.eq.s32.totalorder %s8, 1
    %p39 = por %p37, %p38
    %p40 = scmp.ne.s32.totalorder %s32, %s35
    %p41 = scmp.eq.s32.totalorder %s8, 0
    %p42 = por %p40, %p41
    %p43 = scmp.ne.s32.totalorder %s32, %s35
    %p44 = scmp.eq.s32.totalorder %s13, 1
    %p45 = por %p43, %p44
    %p46 = scmp.ne.s32.totalorder %s35, %s36
    %p47 = scmp.eq.s32.totalorder %s13, 0
    %p48 = por %p46, %p47
    %p49 = scmp.ne.s32.totalorder %s35, %s36
    %p50 = scmp.eq.s32.totalorder %s14, 1
    %p51 = por %p49, %p50
    %p53 = scmp.ne.s32.totalorder %s36, %s52
    %p54 = scmp.eq.s32.totalorder %s14, 0
    %p55 = por %p53, %p54
    %s56 = ssub.s32 %s15, %s27
    %p57 = scmp.eq.s32.totalorder %s56, 0
    %s59 = sadd.s32 %s58, 1
    %s60 = scalar_select %p57, %s58, %s59
    %p63 = pneg %p57
    %p64 = scmp.eq.s32.totalorder %s8, 1
    %p65 = por %p63, %p64
    %p66 = scmp.ne.s32.totalorder %s58, %s61
    %p67 = scmp.eq.s32.totalorder %s8, 0
    %p68 = por %p66, %p67
    %p69 = scmp.ne.s32.totalorder %s58, %s61
    %p70 = scmp.eq.s32.totalorder %s13, 1
    %p71 = por %p69, %p70
    %p72 = scmp.ne.s32.totalorder %s61, %s62
    %p73 = scmp.eq.s32.totalorder %s13, 0
    %p74 = por %p72, %p73
    %p75 = scmp.ne.s32.totalorder %s61, %s62
    %p76 = scmp.eq.s32.totalorder %s14, 1
    %p77 = por %p75, %p76
    %p79 = scmp.ne.s32.totalorder %s62, %s78
    %p80 = scmp.eq.s32.totalorder %s14, 0
    %p81 = por %p79, %p80
    %s82 = ssub.s32 %s15, %s27
    %s83 = ssub.s32 %s16, %s23
    %s84 = sor.u32 %s82, %s83
    %p85 = scmp.eq.s32.totalorder %s84, 0
    %s87 = sadd.s32 %s86, 1
    %s88 = scalar_select %p85, %s86, %s87
    %p91 = pneg %p85
    %p92 = scmp.eq.s32.totalorder %s8, 1
    %p93 = por %p91, %p92
    %p94 = scmp.ne.s32.totalorder %s86, %s89
    %p95 = scmp.eq.s32.totalorder %s8, 0
    %p96 = por %p94, %p95
    %p97 = scmp.ne.s32.totalorder %s86, %s89
    %p98 = scmp.eq.s32.totalorder %s13, 1
    %p99 = por %p97, %p98
    %p100 = scmp.ne.s32.totalorder %s89, %s90
    %p101 = scmp.eq.s32.totalorder %s13, 0
    %p102 = por %p100, %p101
    %p103 = scmp.ne.s32.totalorder %s89, %s90
    %p104 = scmp.eq.s32.totalorder %s14, 1
    %p105 = por %p103, %p104
    %p107 = scmp.ne.s32.totalorder %s90, %s106
    %p108 = scmp.eq.s32.totalorder %s14, 0
    %p109 = por %p107, %p108
    %p110 = scmp.le.s32.totalorder 1, %s8
    %p111 = scmp.lt.s32.totalorder %s8, 3
    %p112 = pnand %p110, %p111
    %p113 = pneg %p112
    // Predicated region
    $region9: #{nonlocal_mask_forward.7} parent=5 // pred_check
      _
    $region10: #{nonlocal_mask_forward.7} parent=5 // pred_check_branch
      %115 = sbr.rel (%p112) target = $region12
    $region11: #{nonlocal_mask_forward.7} parent=5 // pred_region
      %s116 = ssub.s32 %s8, 1
    $region12: #{nonlocal_mask_forward.7} parent=5 // pred_fallthru
      _
    %p117 = scmp.lt.s32.totalorder %s8, 2
    // Predicated region
    $region13: #{nonlocal_mask_forward.7} parent=5 // pred_check
      %p118 = pneg %p117
    $region14: #{nonlocal_mask_forward.7} parent=5 // pred_check_branch
      %120 = sbr.rel (%p118) target = $region16
    $region15: #{nonlocal_mask_forward.7} parent=5 // pred_region
      // Predicated region
      $region17: #{nonlocal_mask_forward.7} parent=15 // pred_check
        %p121 = pneg %p42
      $region18: #{nonlocal_mask_forward.7} parent=15 // pred_check_branch
        %123 = sbr.rel (%p121) target = $region20
      $region19: #{nonlocal_mask_forward.7} parent=15 // pred_region
        %p124 = scmp.lt.s32.totalorder %s15, 1
        %s125 = scalar_select %p124, %s15, 1
        %p126 = scmp.lt.s32.totalorder %s16, 0
        %s127 = scalar_select %p126, %s16, 0
        %s128 = smul.addr %s125, 2
        %s129 = sadd.s32 %s127, %s128
        %s130 = smul.addr %s129, 4
        %s131 = scalar_lea.vmem %s0, %s130
      $region20: #{nonlocal_mask_forward.7} parent=15 // pred_fallthru
        _
      // Predicated region
      $region21: #{nonlocal_mask_forward.7} parent=15 // pred_check
        %p132 = pneg %p68
      $region22: #{nonlocal_mask_forward.7} parent=15 // pred_check_branch
        %134 = sbr.rel (%p132) target = $region24
      $region23: #{nonlocal_mask_forward.7} parent=15 // pred_region
        %p135 = scmp.lt.s32.totalorder %s15, 1
        %s136 = scalar_select %p135, %s15, 1
        %s137 = smul.addr %s136, 2
        %s138 = smul.addr %s137, 8
        %s139 = scalar_lea.vmem %s1, %s138
      $region24: #{nonlocal_mask_forward.7} parent=15 // pred_fallthru
        _
    $region16: #{nonlocal_mask_forward.7} parent=5 // pred_fallthru
      _
    %p140 = scmp.le.s32.totalorder 1, %s8
    %p141 = scmp.lt.s32.totalorder %s8, 3
    %p142 = pnand %p140, %p141
    %p143 = pneg %p142
    // Predicated region
    $region25: #{nonlocal_mask_forward.7} parent=5 // pred_check
      _
    $region26: #{nonlocal_mask_forward.7} parent=5 // pred_check_branch
      %145 = sbr.rel (%p142) target = $region28
    $region27: #{nonlocal_mask_forward.7} parent=5 // pred_region
      %s146 = ssub.s32 %s8, 1
      %p147 = scmp.lt.s32.totalorder %s17, 1
      %s148 = scalar_select %p147, %s17, 1
      %p149 = scmp.lt.s32.totalorder %s18, 0
      %s150 = scalar_select %p149, %s18, 0
      %s151 = smul.addr %s148, 2
      %s152 = sadd.s32 %s150, %s151
      %s153 = smul.addr %s152, 4
      %s154 = scalar_lea.vmem %s0, %s153
      %p155 = pneg %p48
      %p156 = pneg %p45
      %p157 = scmp.lt.s32.totalorder %s17, 1
      %s158 = scalar_select %p157, %s17, 1
      %s159 = smul.addr %s158, 2
      %s160 = smul.addr %s159, 8
      %s161 = scalar_lea.vmem %s1, %s160
      %p162 = pneg %p74
      %p163 = pneg %p71
      %p164 = pneg %p102
      %p165 = pneg %p99
      %s166 = smul.u32 8, %s18
      %p167 = scmp.lt.s32.totalorder %s17, 1
      %s168 = scalar_select %p167, %s17, 1
      %p169 = scmp.lt.s32.totalorder %s166, 7
      %s170 = scalar_select %p169, %s166, 7
      %s171 = smul.addr %s168, 8
      %s172 = sadd.s32 %s170, %s171
      %s173 = smul.addr %s172, 8
      %s174 = scalar_lea.vmem %s2, %s173
      %p175 = scmp.lt.s32.totalorder %s17, 1
      %s176 = scalar_select %p175, %s17, 1
      %p177 = scmp.lt.s32.totalorder %s18, 0
      %s178 = scalar_select %p177, %s18, 0
      %s179 = smul.addr %s176, 2
      %s180 = sadd.s32 %s178, %s179
      %s181 = smul.addr %s180, 4
      %s182 = scalar_lea.vmem %s0, %s181
      %p183 = scmp.lt.s32.totalorder %s17, 1
      %s184 = scalar_select %p183, %s17, 1
      %s185 = smul.addr %s184, 2
      %s186 = smul.addr %s185, 8
      %s187 = scalar_lea.vmem %s1, %s186
      %s188 = smul.u32 8, %s18
      %p189 = scmp.lt.s32.totalorder %s17, 1
      %s190 = scalar_select %p189, %s17, 1
      %p191 = scmp.lt.s32.totalorder %s188, 7
      %s192 = scalar_select %p191, %s188, 7
      %s193 = smul.addr %s190, 8
      %s194 = sadd.s32 %s192, %s193
      %s195 = smul.addr %s194, 8
      %s196 = scalar_lea.vmem %s2, %s195
      %s197 = smul.u32 8, %s18
      %v198 = vld [vmem:[%s182] sm:$0xf]
      %v199 = vld [vmem:[%s182 + $0x4] sm:$0xf]
      %v200 = vunpack.c.l.bf16 %v198
      %v201 = vunpack.c.l.bf16 %v199
      %v202 = vld [vmem:[%s187] sm:$0xff]
      %v203 = vld [vmem:[%s187 + $0x8] sm:$0xff]
      %204 = vxpose.xlu0.b32.start [1/16] %v200, 128
      %205 = vxpose.xlu0.b32.cont [2/16] %v201, 128
      %206 = vxpose.xlu0.b32.cont [3/16] 0.0, 128
      %207 = vxpose.xlu0.b32.cont [4/16] 0.0, 128
      %208 = vxpose.xlu0.b32.cont [5/16] 0.0, 128
      %209 = vxpose.xlu0.b32.cont [6/16] 0.0, 128
      %210 = vxpose.xlu0.b32.cont [7/16] 0.0, 128
      %211 = vxpose.xlu0.b32.cont [8/16] 0.0, 128
      %212 = vxpose.xlu0.b32.cont [9/16] 0.0, 128
      %213 = vxpose.xlu0.b32.cont [10/16] 0.0, 128
      %214 = vxpose.xlu0.b32.cont [11/16] 0.0, 128
      %215 = vxpose.xlu0.b32.cont [12/16] 0.0, 128
      %216 = vxpose.xlu0.b32.cont [13/16] 0.0, 128
      %217 = vxpose.xlu0.b32.cont [14/16] 0.0, 128
      %218 = vxpose.xlu0.b32.cont [15/16] 0.0, 128
      %219 = vxpose.xlu0.b32.end [16/16] 0.0, 128
      %v220 = vpop.trf.xlu0
      %v221 = vpop.trf.xlu0
      %v222 = vpop.trf.xlu0
      %v223 = vpop.trf.xlu0
      %v224 = vpop.trf.xlu0
      %v225 = vpop.trf.xlu0
      %v226 = vpop.trf.xlu0
      %v227 = vpop.trf.xlu0
      %v228 = vpop.trf.xlu0
      %v229 = vpop.trf.xlu0
      %v230 = vpop.trf.xlu0
      %v231 = vpop.trf.xlu0
      %v232 = vpop.trf.xlu0
      %v233 = vpop.trf.xlu0
      %v234 = vpop.trf.xlu0
      %v235 = vpop.trf.xlu0
      %vm236 = vcmask 130048
      %v238 = vsel %vm236, %v220, 0
      %v241 = vsel %vm236, %v221, 0
      %v244 = vsel %vm236, %v222, 0
      %v247 = vsel %vm236, %v223, 0
      %v250 = vsel %vm236, %v224, 0
      %v253 = vsel %vm236, %v225, 0
      %v256 = vsel %vm236, %v226, 0
      %v259 = vsel %vm236, %v227, 0
      %261 = vmatprep.subr.mxu0 0.0
      %262 = vmatpush1.msra.mxu0 %v202
      %263 = vmatprep.subr.mxu0 0.0
      %264 = vmatpush1.msra.mxu0 %v203
      %265 = vmatprep.subr.mxu0 0.0
      %266 = vmatpush1.msra.mxu0 0.0
      %267 = vmatprep.subr.mxu0 0.0
      %268 = vmatpush1.msra.mxu0 0.0
      %269 = vmatprep.subr.mxu0 0.0
      %270 = vmatpush1.msra.mxu0 0.0
      %271 = vmatprep.subr.mxu0 0.0
      %272 = vmatpush1.msra.mxu0 0.0
      %273 = vmatprep.subr.mxu0 0.0
      %274 = vmatpush1.msra.mxu0 0.0
      %275 = vmatprep.subr.mxu0 0.0
      %276 = vmatpush1.msra.mxu0 0.0
      %277 = vmatprep.subr.mxu0 0.0
      %278 = vmatpush1.msra.mxu0 0.0
      %279 = vmatprep.subr.mxu0 0.0
      %280 = vmatpush1.msra.mxu0 0.0
      %281 = vmatprep.subr.mxu0 0.0
      %282 = vmatpush1.msra.mxu0 0.0
      %283 = vmatprep.subr.mxu0 0.0
      %284 = vmatpush1.msra.mxu0 0.0
      %285 = vmatprep.subr.mxu0 0.0
      %286 = vmatpush1.msra.mxu0 0.0
      %287 = vmatprep.subr.mxu0 0.0
      %288 = vmatpush1.msra.mxu0 0.0
      %289 = vmatprep.subr.mxu0 0.0
      %290 = vmatpush1.msra.mxu0 0.0
      %291 = vmatprep.subr.mxu0 0.0
      %292 = vmatpush1.msra.mxu0 0.0
      %293 = vmatprep.subr.mxu0 0.0
      %294 = vmatpush1.msra.mxu0 0.0
      %295 = vmatprep.subr.mxu0 0.0
      %296 = vmatpush1.msra.mxu0 0.0
      %297 = vmatprep.subr.mxu0 0.0
      %298 = vmatpush1.msra.mxu0 0.0
      %299 = vmatprep.subr.mxu0 0.0
      %300 = vmatpush1.msra.mxu0 0.0
      %301 = vmatprep.subr.mxu0 0.0
      %302 = vmatpush1.msra.mxu0 0.0
      %303 = vmatprep.subr.mxu0 0.0
      %304 = vmatpush1.msra.mxu0 0.0
      %305 = vmatprep.subr.mxu0 0.0
      %306 = vmatpush1.msra.mxu0 0.0
      %307 = vmatprep.subr.mxu0 0.0
      %308 = vmatpush1.msra.mxu0 0.0
      %309 = vmatprep.subr.mxu0 0.0
      %310 = vmatpush1.msra.mxu0 0.0
      %311 = vmatprep.subr.mxu0 0.0
      %312 = vmatpush1.msra.mxu0 0.0
      %313 = vmatprep.subr.mxu0 0.0
      %314 = vmatpush1.msra.mxu0 0.0
      %315 = vmatprep.subr.mxu0 0.0
      %316 = vmatpush1.msra.mxu0 0.0
      %317 = vmatprep.subr.mxu0 0.0
      %318 = vmatpush1.msra.mxu0 0.0
      %319 = vmatprep.subr.mxu0 0.0
      %320 = vmatpush1.msra.mxu0 0.0
      %321 = vmatprep.subr.mxu0 0.0
      %322 = vmatpush1.msra.mxu0 0.0
      %323 = vmatprep.subr.mxu0 0.0
      %324 = vmatpush1.msra.mxu0 0.0
      %325 = vmatprep.mubr.f32.mxu0 0.0
      %326 = vmatmul.mubr.f32.gmra.mrb[0].mxu0 %v238
      %v327 = vpop.f32.mrb[0].mxu0
      %v328 = vadd.f32 0.0, %v327
      %v329 = vpop.f32.mrb[0].mxu0
      %330 = vmatprep.mubr.f32.mxu0 0.0
      %331 = vmatmul.mubr.f32.gmra.mrb[0].mxu0 %v241
      %v332 = vpop.f32.mrb[0].mxu0
      %v333 = vadd.f32 0.0, %v332
      %v334 = vpop.f32.mrb[0].mxu0
      %335 = vmatprep.mubr.f32.mxu0 0.0
      %336 = vmatmul.mubr.f32.gmra.mrb[0].mxu0 %v244
      %v337 = vpop.f32.mrb[0].mxu0
      %v338 = vadd.f32 0.0, %v337
      %v339 = vpop.f32.mrb[0].mxu0
      %340 = vmatprep.mubr.f32.mxu0 0.0
      %341 = vmatmul.mubr.f32.gmra.mrb[0].mxu0 %v247
      %v342 = vpop.f32.mrb[0].mxu0
      %v343 = vadd.f32 0.0, %v342
      %v344 = vpop.f32.mrb[0].mxu0
      %345 = vmatprep.mubr.f32.mxu0 0.0
      %346 = vmatmul.mubr.f32.gmra.mrb[0].mxu0 %v250
      %v347 = vpop.f32.mrb[0].mxu0
      %v348 = vadd.f32 0.0, %v347
      %v349 = vpop.f32.mrb[0].mxu0
      %350 = vmatprep.mubr.f32.mxu0 0.0
      %351 = vmatmul.mubr.f32.gmra.mrb[0].mxu0 %v253
      %v352 = vpop.f32.mrb[0].mxu0
      %v353 = vadd.f32 0.0, %v352
      %v354 = vpop.f32.mrb[0].mxu0
      %355 = vmatprep.mubr.f32.mxu0 0.0
      %356 = vmatmul.mubr.f32.gmra.mrb[0].mxu0 %v256
      %v357 = vpop.f32.mrb[0].mxu0
      %v358 = vadd.f32 0.0, %v357
      %v359 = vpop.f32.mrb[0].mxu0
      %360 = vmatprep.mubr.f32.mxu0 0.0
      %361 = vmatmul.mubr.f32.gmra.mrb[0].mxu0 %v259
      %v362 = vpop.f32.mrb[0].mxu0
      %v363 = vadd.f32 0.0, %v362
      %v364 = vpop.f32.mrb[0].mxu0
      %365 = vdwg.mxu0
      %366 = vst.msk [vmem:[%s196] sm:$0xff] %vm236, %v328
      %367 = vst.msk [vmem:[%s196 + $0x8] sm:$0xff] %vm236, %v333
      %368 = vst.msk [vmem:[%s196 + $0x10] sm:$0xff] %vm236, %v338
      %369 = vst.msk [vmem:[%s196 + $0x18] sm:$0xff] %vm236, %v343
      %370 = vst.msk [vmem:[%s196 + $0x20] sm:$0xff] %vm236, %v348
      %371 = vst.msk [vmem:[%s196 + $0x28] sm:$0xff] %vm236, %v353
      %372 = vst.msk [vmem:[%s196 + $0x30] sm:$0xff] %vm236, %v358
      %373 = vst.msk [vmem:[%s196 + $0x38] sm:$0xff] %vm236, %v363
      %s374 = smul.u32 8, %s18
      %p375 = scmp.lt.s32.totalorder %s17, 1
      %s376 = scalar_select %p375, %s17, 1
      %p377 = scmp.lt.s32.totalorder %s374, 7
      %s378 = scalar_select %p377, %s374, 7
      %s379 = smul.addr %s376, 8
      %s380 = sadd.s32 %s378, %s379
      %s381 = smul.addr %s380, 8
      %s382 = scalar_lea.vmem %s2, %s381
      // Predicated region
      $region29: #{nonlocal_mask_forward.7} parent=27 // pred_check
        %p383 = pneg %p99
      $region30: #{nonlocal_mask_forward.7} parent=27 // pred_check_branch
        %385 = sbr.rel (%p383) target = $region32
      $region31: #{nonlocal_mask_forward.7} parent=27 // pred_region
        %s386 = smul.u32 8, %s18
      $region32: #{nonlocal_mask_forward.7} parent=27 // pred_fallthru
        _
    $region28: #{nonlocal_mask_forward.7} parent=5 // pred_fallthru
      _
    %p387 = scmp.le.s32.totalorder 2, %s8
    // Predicated region
    $region33: #{nonlocal_mask_forward.7} parent=5 // pred_check
      %p388 = pneg %p387
    $region34: #{nonlocal_mask_forward.7} parent=5 // pred_check_branch
      %390 = sbr.rel (%p388) target = $region36
    $region35: #{nonlocal_mask_forward.7} parent=5 // pred_region
      %s391 = ssub.s32 %s8, 2
      // Predicated region
      $region37: #{nonlocal_mask_forward.7} parent=35 // pred_check
        %p392 = pneg %p105
      $region38: #{nonlocal_mask_forward.7} parent=35 // pred_check_branch
        %394 = sbr.rel (%p392) target = $region40
      $region39: #{nonlocal_mask_forward.7} parent=35 // pred_region
        %s395 = smul.u32 8, %s20
        %p396 = scmp.lt.s32.totalorder %s19, 1
        %s397 = scalar_select %p396, %s19, 1
        %p398 = scmp.lt.s32.totalorder %s395, 7
        %s399 = scalar_select %p398, %s395, 7
        %s400 = smul.addr %s397, 8
        %s401 = sadd.s32 %s399, %s400
        %s402 = smul.addr %s401, 8
        %s403 = scalar_lea.vmem %s2, %s402
      $region40: #{nonlocal_mask_forward.7} parent=35 // pred_fallthru
        _
    $region36: #{nonlocal_mask_forward.7} parent=5 // pred_fallthru
      _
  $region6: #{nonlocal_mask_forward.7} parent=0 // loop_footer
    %s12 = sadd.s32 1, %s8
  $region7: #{nonlocal_mask_forward.7} parent=0 // loop_footer_branch
    %7 = sbr.rel target = $region3
  $region8: #{nonlocal_mask_forward.7} parent=0 // loop_exit
    _

// kernel: nonlocal_mask_forward.6
$region0: #{nonlocal_mask_forward.6}
  #allocation0 [shape = 'u32[]', space=smem, size = 0x4, offset = 0x4, fixed_abs, tag = 'smem constant byte address 0x4 - core index']
  #allocation1 [shape = 'u32[144,128]{1,0:T(1,128)}', space=vmem, size = 0x12000, scoped, tag = 'internal scratch']
  #allocation2 [shape = 'f32[1,64]{1,0:T(1,128)}', space=vmem, size = 0x200, scoped, tag = 'scratch operand']
  #allocation3 [shape = 'f32[1,64]{1,0:T(1,128)}', space=vmem, size = 0x200, scoped, tag = 'scratch operand']
  #allocation4 [shape = 'f32[16,64]{1,0:T(8,128)}', space=vmem, size = 0x2000, scoped, tag = 'scratch operand']
  %s0 = inlined_call_operand.vmem [shape: bf16[2,16,64], index: 0, kind: input, shape index: {}]
  %s1 = inlined_call_operand.vmem [shape: bf16[2,16,64], index: 1, kind: input, shape index: {}]
  %s2 = inlined_call_operand.vmem [shape: bf16[2,16,64], index: 2, kind: input, shape index: {}]
  %s3 = inlined_call_operand.vmem [shape: f32[2,16,64], index: 3, kind: output, shape index: {}]
  %s4 = sld [smem:[#allocation0]]
  $region53: #{nonlocal_mask_forward.6} parent=0
    _
  %s6 = ssub.s32 1, %s4
  %s7 = scalar_select 0, %s6, %s4
  loop: start=0, step=1, limit=4
  $region2: #{nonlocal_mask_forward.6} parent=0 // loop_pre_header
    _
  $region3: #{nonlocal_mask_forward.6} parent=0 // loop_header
    %s9 = sphi 0, %s13
    %p10 = scmp.ge.s32.totalorder %s9, 4
    %s16 = sphi 0, %s35
    %s17 = sphi 0, %s31
    %s18 = sphi 0, %s27
    %s19 = sphi 0, %s16
    %s20 = sphi 0, %s17
    %s21 = sphi 0, %s18
    %s22 = sphi 0, %s19
    %s23 = sphi 0, %s20
    %s24 = sphi 0, %s21
    %s40 = sphi 0, %s42
    %s43 = sphi 0, %s40
    %s44 = sphi 0, %s43
    %s60 = sphi 0, %s44
    %s68 = sphi 0, %s70
    %s71 = sphi 0, %s68
    %s72 = sphi 0, %s71
    %s88 = sphi 0, %s72
    %s96 = sphi 0, %s98
    %s99 = sphi 0, %s96
    %s100 = sphi 0, %s99
    %s116 = sphi 0, %s100
    %s124 = sphi 0, %s126
    %s127 = sphi 0, %s124
    %s128 = sphi 0, %s127
    %s144 = sphi 0, %s128
  $region4: #{nonlocal_mask_forward.6} parent=0 // loop_header_branch
    %12 = sbr.rel (%p10) target = $region8
  $region5: #{nonlocal_mask_forward.6} parent=0 // loop_body
    %s14 = ssub.s32 %s9, 1
    %s15 = ssub.s32 %s9, 2
    %s25 = sadd.s32 1, %s18
    %p26 = scmp.ge.s32.totalorder %s25, 1
    %s27 = scalar_select %p26, 0, %s25
    %s28 = sadd.s32 1, %s17
    %s29 = scalar_select %p26, %s28, %s17
    %p30 = scmp.ge.s32.totalorder %s29, 1
    %s31 = scalar_select %p30, 0, %s29
    %s32 = sadd.s32 1, %s16
    %s33 = scalar_select %p30, %s32, %s16
    %p34 = scmp.ge.s32.totalorder %s33, 2
    %s35 = scalar_select %p34, 0, %s33
    %s36 = ssub.s32 %s16, %s35
    %s37 = ssub.s32 %s17, %s31
    %s38 = sor.u32 %s36, %s37
    %p39 = scmp.eq.s32.totalorder %s38, 0
    %s41 = sadd.s32 %s40, 1
    %s42 = scalar_select %p39, %s40, %s41
    %p45 = pneg %p39
    %p46 = scmp.eq.s32.totalorder %s9, 1
    %p47 = por %p45, %p46
    %p48 = scmp.ne.s32.totalorder %s40, %s43
    %p49 = scmp.eq.s32.totalorder %s9, 0
    %p50 = por %p48, %p49
    %p51 = scmp.ne.s32.totalorder %s40, %s43
    %p52 = scmp.eq.s32.totalorder %s14, 1
    %p53 = por %p51, %p52
    %p54 = scmp.ne.s32.totalorder %s43, %s44
    %p55 = scmp.eq.s32.totalorder %s14, 0
    %p56 = por %p54, %p55
    %p57 = scmp.ne.s32.totalorder %s43, %s44
    %p58 = scmp.eq.s32.totalorder %s15, 1
    %p59 = por %p57, %p58
    %p61 = scmp.ne.s32.totalorder %s44, %s60
    %p62 = scmp.eq.s32.totalorder %s15, 0
    %p63 = por %p61, %p62
    %s64 = ssub.s32 %s16, %s35
    %s65 = ssub.s32 %s18, %s27
    %s66 = sor.u32 %s64, %s65
    %p67 = scmp.eq.s32.totalorder %s66, 0
    %s69 = sadd.s32 %s68, 1
    %s70 = scalar_select %p67, %s68, %s69
    %p73 = pneg %p67
    %p74 = scmp.eq.s32.totalorder %s9, 1
    %p75 = por %p73, %p74
    %p76 = scmp.ne.s32.totalorder %s68, %s71
    %p77 = scmp.eq.s32.totalorder %s9, 0
    %p78 = por %p76, %p77
    %p79 = scmp.ne.s32.totalorder %s68, %s71
    %p80 = scmp.eq.s32.totalorder %s14, 1
    %p81 = por %p79, %p80
    %p82 = scmp.ne.s32.totalorder %s71, %s72
    %p83 = scmp.eq.s32.totalorder %s14, 0
    %p84 = por %p82, %p83
    %p85 = scmp.ne.s32.totalorder %s71, %s72
    %p86 = scmp.eq.s32.totalorder %s15, 1
    %p87 = por %p85, %p86
    %p89 = scmp.ne.s32.totalorder %s72, %s88
    %p90 = scmp.eq.s32.totalorder %s15, 0
    %p91 = por %p89, %p90
    %s92 = ssub.s32 %s16, %s35
    %s93 = ssub.s32 %s18, %s27
    %s94 = sor.u32 %s92, %s93
    %p95 = scmp.eq.s32.totalorder %s94, 0
    %s97 = sadd.s32 %s96, 1
    %s98 = scalar_select %p95, %s96, %s97
    %p101 = pneg %p95
    %p102 = scmp.eq.s32.totalorder %s9, 1
    %p103 = por %p101, %p102
    %p104 = scmp.ne.s32.totalorder %s96, %s99
    %p105 = scmp.eq.s32.totalorder %s9, 0
    %p106 = por %p104, %p105
    %p107 = scmp.ne.s32.totalorder %s96, %s99
    %p108 = scmp.eq.s32.totalorder %s14, 1
    %p109 = por %p107, %p108
    %p110 = scmp.ne.s32.totalorder %s99, %s100
    %p111 = scmp.eq.s32.totalorder %s14, 0
    %p112 = por %p110, %p111
    %p113 = scmp.ne.s32.totalorder %s99, %s100
    %p114 = scmp.eq.s32.totalorder %s15, 1
    %p115 = por %p113, %p114
    %p117 = scmp.ne.s32.totalorder %s100, %s116
    %p118 = scmp.eq.s32.totalorder %s15, 0
    %p119 = por %p117, %p118
    %s120 = ssub.s32 %s16, %s35
    %s121 = ssub.s32 %s17, %s31
    %s122 = sor.u32 %s120, %s121
    %p123 = scmp.eq.s32.totalorder %s122, 0
    %s125 = sadd.s32 %s124, 1
    %s126 = scalar_select %p123, %s124, %s125
    %p129 = pneg %p123
    %p130 = scmp.eq.s32.totalorder %s9, 1
    %p131 = por %p129, %p130
    %p132 = scmp.ne.s32.totalorder %s124, %s127
    %p133 = scmp.eq.s32.totalorder %s9, 0
    %p134 = por %p132, %p133
    %p135 = scmp.ne.s32.totalorder %s124, %s127
    %p136 = scmp.eq.s32.totalorder %s14, 1
    %p137 = por %p135, %p136
    %p138 = scmp.ne.s32.totalorder %s127, %s128
    %p139 = scmp.eq.s32.totalorder %s14, 0
    %p140 = por %p138, %p139
    %p141 = scmp.ne.s32.totalorder %s127, %s128
    %p142 = scmp.eq.s32.totalorder %s15, 1
    %p143 = por %p141, %p142
    %p145 = scmp.ne.s32.totalorder %s128, %s144
    %p146 = scmp.eq.s32.totalorder %s15, 0
    %p147 = por %p145, %p146
    %p148 = scmp.le.s32.totalorder 1, %s9
    %p149 = scmp.lt.s32.totalorder %s9, 3
    %p150 = pnand %p148, %p149
    %p151 = pneg %p150
    // Predicated region
    $region9: #{nonlocal_mask_forward.6} parent=5 // pred_check
      _
    $region10: #{nonlocal_mask_forward.6} parent=5 // pred_check_branch
      %153 = sbr.rel (%p150) target = $region12
    $region11: #{nonlocal_mask_forward.6} parent=5 // pred_region
      %s154 = ssub.s32 %s9, 1
    $region12: #{nonlocal_mask_forward.6} parent=5 // pred_fallthru
      _
    %p155 = scmp.lt.s32.totalorder %s9, 2
    // Predicated region
    $region13: #{nonlocal_mask_forward.6} parent=5 // pred_check
      %p156 = pneg %p155
    $region14: #{nonlocal_mask_forward.6} parent=5 // pred_check_branch
      %158 = sbr.rel (%p156) target = $region16
    $region15: #{nonlocal_mask_forward.6} parent=5 // pred_region
      // Predicated region
      $region17: #{nonlocal_mask_forward.6} parent=15 // pred_check
        %p159 = pneg %p50
      $region18: #{nonlocal_mask_forward.6} parent=15 // pred_check_branch
        %161 = sbr.rel (%p159) target = $region20
      $region19: #{nonlocal_mask_forward.6} parent=15 // pred_region
        %p162 = scmp.lt.s32.totalorder %s16, 1
        %s163 = scalar_select %p162, %s16, 1
        %p164 = scmp.lt.s32.totalorder %s17, 0
        %s165 = scalar_select %p164, %s17, 0
        %s166 = smul.addr %s163, 2
        %s167 = sadd.s32 %s165, %s166
        %s168 = smul.addr %s167, 4
        %s169 = scalar_lea.vmem %s0, %s168
      $region20: #{nonlocal_mask_forward.6} parent=15 // pred_fallthru
        _
      // Predicated region
      $region21: #{nonlocal_mask_forward.6} parent=15 // pred_check
        %p170 = pneg %p78
      $region22: #{nonlocal_mask_forward.6} parent=15 // pred_check_branch
        %172 = sbr.rel (%p170) target = $region24
      $region23: #{nonlocal_mask_forward.6} parent=15 // pred_region
        %p173 = scmp.lt.s32.totalorder %s16, 1
        %s174 = scalar_select %p173, %s16, 1
        %p175 = scmp.lt.s32.totalorder %s18, 0
        %s176 = scalar_select %p175, %s18, 0
        %s177 = smul.addr %s174, 2
        %s178 = sadd.s32 %s176, %s177
        %s179 = smul.addr %s178, 4
        %s180 = scalar_lea.vmem %s1, %s179
      $region24: #{nonlocal_mask_forward.6} parent=15 // pred_fallthru
        _
      // Predicated region
      $region25: #{nonlocal_mask_forward.6} parent=15 // pred_check
        %p181 = pneg %p106
      $region26: #{nonlocal_mask_forward.6} parent=15 // pred_check_branch
        %183 = sbr.rel (%p181) target = $region28
      $region27: #{nonlocal_mask_forward.6} parent=15 // pred_region
        %p184 = scmp.lt.s32.totalorder %s16, 1
        %s185 = scalar_select %p184, %s16, 1
        %p186 = scmp.lt.s32.totalorder %s18, 0
        %s187 = scalar_select %p186, %s18, 0
        %s188 = smul.addr %s185, 2
        %s189 = sadd.s32 %s187, %s188
        %s190 = smul.addr %s189, 4
        %s191 = scalar_lea.vmem %s2, %s190
      $region28: #{nonlocal_mask_forward.6} parent=15 // pred_fallthru
        _
    $region16: #{nonlocal_mask_forward.6} parent=5 // pred_fallthru
      _
    %p192 = scmp.le.s32.totalorder 1, %s9
    %p193 = scmp.lt.s32.totalorder %s9, 3
    %p194 = pnand %p192, %p193
    %p195 = pneg %p194
    // Predicated region
    $region29: #{nonlocal_mask_forward.6} parent=5 // pred_check
      _
    $region30: #{nonlocal_mask_forward.6} parent=5 // pred_check_branch
      %197 = sbr.rel (%p194) target = $region32
    $region31: #{nonlocal_mask_forward.6} parent=5 // pred_region
      %s198 = ssub.s32 %s9, 1
      %p199 = scmp.lt.s32.totalorder %s19, 1
      %s200 = scalar_select %p199, %s19, 1
      %p201 = scmp.lt.s32.totalorder %s20, 0
      %s202 = scalar_select %p201, %s20, 0
      %s203 = smul.addr %s200, 2
      %s204 = sadd.s32 %s202, %s203
      %s205 = smul.addr %s204, 4
      %s206 = scalar_lea.vmem %s0, %s205
      %p207 = pneg %p56
      %p208 = pneg %p53
      %p209 = scmp.lt.s32.totalorder %s19, 1
      %s210 = scalar_select %p209, %s19, 1
      %p211 = scmp.lt.s32.totalorder %s21, 0
      %s212 = scalar_select %p211, %s21, 0
      %s213 = smul.addr %s210, 2
      %s214 = sadd.s32 %s212, %s213
      %s215 = smul.addr %s214, 4
      %s216 = scalar_lea.vmem %s1, %s215
      %p217 = pneg %p84
      %p218 = pneg %p81
      %p219 = scmp.lt.s32.totalorder %s19, 1
      %s220 = scalar_select %p219, %s19, 1
      %p221 = scmp.lt.s32.totalorder %s21, 0
      %s222 = scalar_select %p221, %s21, 0
      %s223 = smul.addr %s220, 2
      %s224 = sadd.s32 %s222, %s223
      %s225 = smul.addr %s224, 4
      %s226 = scalar_lea.vmem %s2, %s225
      %p227 = pneg %p112
      %p228 = pneg %p109
      %p229 = pneg %p140
      %p230 = pneg %p137
      %p231 = scmp.lt.s32.totalorder %s19, 1
      %s232 = scalar_select %p231, %s19, 1
      %p233 = scmp.lt.s32.totalorder %s20, 0
      %s234 = scalar_select %p233, %s20, 0
      %s235 = smul.addr %s232, 2
      %s236 = sadd.s32 %s234, %s235
      %s237 = smul.addr %s236, 8
      %s238 = scalar_lea.vmem %s3, %s237
      %p239 = scmp.lt.s32.totalorder %s19, 1
      %s240 = scalar_select %p239, %s19, 1
      %p241 = scmp.lt.s32.totalorder %s20, 0
      %s242 = scalar_select %p241, %s20, 0
      %s243 = smul.addr %s240, 2
      %s244 = sadd.s32 %s242, %s243
      %s245 = smul.addr %s244, 4
      %s246 = scalar_lea.vmem %s0, %s245
      %p247 = scmp.lt.s32.totalorder %s19, 1
      %s248 = scalar_select %p247, %s19, 1
      %p249 = scmp.lt.s32.totalorder %s21, 0
      %s250 = scalar_select %p249, %s21, 0
      %s251 = smul.addr %s248, 2
      %s252 = sadd.s32 %s250, %s251
      %s253 = smul.addr %s252, 4
      %s254 = scalar_lea.vmem %s1, %s253
      %p255 = scmp.lt.s32.totalorder %s19, 1
      %s256 = scalar_select %p255, %s19, 1
      %p257 = scmp.lt.s32.totalorder %s21, 0
      %s258 = scalar_select %p257, %s21, 0
      %s259 = smul.addr %s256, 2
      %s260 = sadd.s32 %s258, %s259
      %s261 = smul.addr %s260, 4
      %s262 = scalar_lea.vmem %s2, %s261
      %p263 = scmp.lt.s32.totalorder %s19, 1
      %s264 = scalar_select %p263, %s19, 1
      %p265 = scmp.lt.s32.totalorder %s20, 0
      %s266 = scalar_select %p265, %s20, 0
      %s267 = smul.addr %s264, 2
      %s268 = sadd.s32 %s266, %s267
      %s269 = smul.addr %s268, 8
      %s270 = scalar_lea.vmem %s3, %s269
      %p272 = scmp.eq.s32.totalorder %s21, 0
      // Predicated region
      $region33: #{nonlocal_mask_forward.6} parent=31 // pred_check
        %p273 = pneg %p272
      $region34: #{nonlocal_mask_forward.6} parent=31 // pred_check_branch
        %275 = sbr.rel (%p273) target = $region36
      $region35: #{nonlocal_mask_forward.6} parent=31 // pred_region
        %vm276 = vcmask 516096
        %277 = vst.msk [vmem:[#allocation2] sm:$0x1] %vm276, -inf
        %278 = vst.msk [vmem:[#allocation3] sm:$0x1] %vm276, 0.0
        %vm279 = vcmask 523264
        %280 = vst.msk [vmem:[#allocation4] sm:$0xff] %vm279, 0.0
        %281 = vst.msk [vmem:[#allocation4 + $0x8] sm:$0xff] %vm279, 0.0
      $region36: #{nonlocal_mask_forward.6} parent=31 // pred_fallthru
        _
      %v282 = vld [vmem:[%s246] sm:$0xf]
      %v283 = vld [vmem:[%s246 + $0x4] sm:$0xf]
      %v284 = vld [vmem:[%s254] sm:$0xf]
      %v285 = vld [vmem:[%s254 + $0x4] sm:$0xf]
      %v286 = vld [vmem:[%s262] sm:$0xf]
      %v287 = vld [vmem:[%s262 + $0x4] sm:$0xf]
      %v290 = vunpack.c.l.b16 %v284
      %v291 = vunpack.c.l.b16 %v285
      %v292 = vpack.c.b16 %v291, %v290
      %294 = vxpose.xlu0.c.b16.start [1/8] %v292, 128
      %295 = vxpose.xlu0.c.b16.cont [2/8] 0, 128
      %296 = vxpose.xlu0.c.b16.cont [3/8] 0, 128
      %297 = vxpose.xlu0.c.b16.cont [4/8] 0, 128
      %298 = vxpose.xlu0.c.b16.cont [5/8] 0, 128
      %299 = vxpose.xlu0.c.b16.cont [6/8] 0, 128
      %300 = vxpose.xlu0.c.b16.cont [7/8] 0, 128
      %301 = vxpose.xlu0.c.b16.end [8/8] 0, 128
      %v302 = vpop.trf.xlu0
      %v303 = vpop.trf.xlu0
      %v304 = vpop.trf.xlu0
      %v305 = vpop.trf.xlu0
      %v306 = vpop.trf.xlu0
      %v307 = vpop.trf.xlu0
      %v308 = vpop.trf.xlu0
      %v309 = vpop.trf.xlu0
      %v312 = vunpack.c.l.b16 %v282
      %v313 = vunpack.c.l.b16 %v283
      %v314 = vpack.c.b16 %v313, %v312
      %vm316 = vcmask 130048
      %v318 = vsel %vm316, %v302, 0
      %v321 = vsel %vm316, %v303, 0
      %v324 = vsel %vm316, %v304, 0
      %v327 = vsel %vm316, %v305, 0
      %329 = vmatprep.subr.bf16.mxu0 0
      %330 = vmatpush1.bf16.msra.mxu0 %v314
      %331 = vmatprep.subr.bf16.mxu0 0
      %332 = vmatpush1.bf16.msra.mxu0 0
      %333 = vmatprep.subr.bf16.mxu0 0
      %334 = vmatpush1.bf16.msra.mxu0 0
      %335 = vmatprep.subr.bf16.mxu0 0
      %336 = vmatpush1.bf16.msra.mxu0 0
      %337 = vmatprep.subr.bf16.mxu0 0
      %338 = vmatpush1.bf16.msra.mxu0 0
      %339 = vmatprep.subr.bf16.mxu0 0
      %340 = vmatpush1.bf16.msra.mxu0 0
      %341 = vmatprep.subr.bf16.mxu0 0
      %342 = vmatpush1.bf16.msra.mxu0 0
      %343 = vmatprep.subr.bf16.mxu0 0
      %344 = vmatpush1.bf16.msra.mxu0 0
      %345 = vmatprep.subr.bf16.mxu0 0
      %346 = vmatpush1.bf16.msra.mxu0 0
      %347 = vmatprep.subr.bf16.mxu0 0
      %348 = vmatpush1.bf16.msra.mxu0 0
      %349 = vmatprep.subr.bf16.mxu0 0
      %350 = vmatpush1.bf16.msra.mxu0 0
      %351 = vmatprep.subr.bf16.mxu0 0
      %352 = vmatpush1.bf16.msra.mxu0 0
      %353 = vmatprep.subr.bf16.mxu0 0
      %354 = vmatpush1.bf16.msra.mxu0 0
      %355 = vmatprep.subr.bf16.mxu0 0
      %356 = vmatpush1.bf16.msra.mxu0 0
      %357 = vmatprep.subr.bf16.mxu0 0
      %358 = vmatpush1.bf16.msra.mxu0 0
      %359 = vmatprep.subr.bf16.mxu0 0
      %360 = vmatpush1.bf16.msra.mxu0 0
      %361 = vmatprep.mubr.bf16.mxu0 0
      %362 = vmatmul.mubr.bf16.gmra.mrb[0].mxu0 %v318
      %v363 = vpop.f32.mrb[0].mxu0
      %v364 = vadd.f32 0.0, %v363
      %v365 = vpop.f32.mrb[0].mxu0
      %v366 = vpop.f32.mrb[0].mxu0
      %v367 = vadd.f32 0.0, %v366
      %v368 = vpop.f32.mrb[0].mxu0
      %369 = vmatprep.mubr.bf16.mxu0 0
      %370 = vmatmul.mubr.bf16.gmra.mrb[0].mxu0 %v321
      %v371 = vpop.f32.mrb[0].mxu0
      %v372 = vadd.f32 0.0, %v371
      %v373 = vpop.f32.mrb[0].mxu0
      %v374 = vpop.f32.mrb[0].mxu0
      %v375 = vadd.f32 0.0, %v374
      %v376 = vpop.f32.mrb[0].mxu0
      %377 = vmatprep.mubr.bf16.mxu0 0
      %378 = vmatmul.mubr.bf16.gmra.mrb[0].mxu0 %v324
      %v379 = vpop.f32.mrb[0].mxu0
      %v380 = vadd.f32 0.0, %v379
      %v381 = vpop.f32.mrb[0].mxu0
      %v382 = vpop.f32.mrb[0].mxu0
      %v383 = vadd.f32 0.0, %v382
      %v384 = vpop.f32.mrb[0].mxu0
      %385 = vmatprep.mubr.bf16.mxu0 0
      %386 = vmatmul.mubr.bf16.gmra.mrb[0].mxu0 %v327
      %v387 = vpop.f32.mrb[0].mxu0
      %v388 = vadd.f32 0.0, %v387
      %v389 = vpop.f32.mrb[0].mxu0
      %v390 = vpop.f32.mrb[0].mxu0
      %v391 = vadd.f32 0.0, %v390
      %v392 = vpop.f32.mrb[0].mxu0
      %393 = vdwg.mxu0
      %v394 = vld [vmem:[#allocation2] sm:$0x1]
      %vm395 = vcmask 523264
      %v396 = vsel %vm395, %v364, -inf
      %v397 = vsel %vm395, %v367, -inf
      %v398 = vsel %vm395, %v372, -inf
      %v399 = vsel %vm395, %v375, -inf
      %v400 = vsel %vm395, %v380, -inf
      %v401 = vmax.f32 %v396, %v400
      %v402 = vsel %vm395, %v383, -inf
      %v403 = vmax.f32 %v397, %v402
      %v404 = vsel %vm395, %v388, -inf
      %v405 = vmax.f32 %v398, %v404
      %v406 = vsel %vm395, %v391, -inf
      %v407 = vmax.f32 %v399, %v406
      %v408 = vmax.f32 %v401, %v403
      %v409 = vmax.f32 %v405, %v407
      %v410 = vmax.f32 %v408, %v409
      %v411 = vrot.slane %v410, 4
      %v412 = vmax.f32 %v410, %v411
      %v413 = vrot.slane %v412, 2
      %v414 = vmax.f32 %v412, %v413
      %v415 = vrot.slane %v414, 1
      %v416 = vmax.f32 %v414, %v415
      %v417 = vmax.f32 %v394, %v416
      %v418 = vsub.f32 %v394, %v417
      %v419 = vmul.f32 %v418, 1.442695
      %v420 = vpow.pop %v419
      %v422 = vlaneseq
      %v423 = vshrl.u32 %v422, 7
      %v424 = vsub.s32 0, %v423
      %v425 = vrot.slane %v417, %v424
      %v427 = vsub.f32 %v364, %v425
      %v428 = vsub.f32 %v367, %v425
      %v429 = vsub.f32 %v372, %v425
      %v430 = vsub.f32 %v375, %v425
      %v431 = vsub.f32 %v380, %v425
      %v432 = vsub.f32 %v383, %v425
      %v433 = vsub.f32 %v388, %v425
      %v434 = vsub.f32 %v391, %v425
      %v435 = vmul.f32 %v427, 1.442695
      %v436 = vpow.pop %v435
      %v437 = vmul.f32 %v428, 1.442695
      %v438 = vpow.pop %v437
      %v439 = vmul.f32 %v429, 1.442695
      %v440 = vpow.pop %v439
      %v441 = vmul.f32 %v430, 1.442695
      %v442 = vpow.pop %v441
      %v443 = vmul.f32 %v431, 1.442695
      %v444 = vpow.pop %v443
      %v445 = vmul.f32 %v432, 1.442695
      %v446 = vpow.pop %v445
      %v447 = vmul.f32 %v433, 1.442695
      %v448 = vpow.pop %v447
      %v449 = vmul.f32 %v434, 1.442695
      %v450 = vpow.pop %v449
      %v451 = vld [vmem:[#allocation3] sm:$0x1]
      %v452 = vmul.f32 %v420, %v451
      %v453 = vsel %vm395, %v436, 0.0
      %v454 = vsel %vm395, %v438, 0.0
      %v455 = vadd.f32 %v453, %v454
      %v456 = vsel %vm395, %v440, 0.0
      %v457 = vadd.f32 %v455, %v456
      %v458 = vsel %vm395, %v442, 0.0
      %v459 = vadd.f32 %v457, %v458
      %v460 = vsel %vm395, %v444, 0.0
      %v461 = vadd.f32 %v459, %v460
      %v462 = vsel %vm395, %v446, 0.0
      %v463 = vadd.f32 %v461, %v462
      %v464 = vsel %vm395, %v448, 0.0
      %v465 = vadd.f32 %v463, %v464
      %v466 = vsel %vm395, %v450, 0.0
      %v467 = vadd.f32 %v465, %v466
      %v468 = vrot.slane %v467, 4
      %v469 = vadd.f32 %v467, %v468
      %v470 = vrot.slane %v469, 2
      %v471 = vadd.f32 %v469, %v470
      %v472 = vrot.slane %v471, 1
      %v473 = vadd.f32 %v471, %v472
      %v474 = vadd.f32 %v452, %v473
      %vm475 = vcmask 516096
      %476 = vst.msk [vmem:[#allocation3] sm:$0x1] %vm475, %v474
      %v477 = vld [vmem:[#allocation4] sm:$0xff]
      %v478 = vld [vmem:[#allocation4 + $0x8] sm:$0xff]
      %v480 = vlaneseq
      %v481 = vshrl.u32 %v480, 7
      %v482 = vsub.s32 0, %v481
      %v483 = vrot.slane %v420, %v482
      %v485 = vmul.f32 %v483, %v477
      %v486 = vmul.f32 %v483, %v478
      %v487 = vpack.c.bf16 %v438, %v436
      %v488 = vpack.c.bf16 %v442, %v440
      %v489 = vpack.c.bf16 %v446, %v444
      %v490 = vpack.c.bf16 %v450, %v448
      %v493 = vunpack.c.l.b16 %v286
      %v494 = vunpack.c.l.b16 %v287
      %v495 = vpack.c.b16 %v494, %v493
      %v497 = vsel %vm395, %v495, 0
      %499 = vmatprep.subr.bf16.mxu0 0
      %500 = vmatpush1.bf16.msra.mxu0 %v487
      %501 = vmatprep.subr.bf16.mxu0 0
      %502 = vmatpush1.bf16.msra.mxu0 %v488
      %503 = vmatprep.subr.bf16.mxu0 0
      %504 = vmatpush1.bf16.msra.mxu0 %v489
      %505 = vmatprep.subr.bf16.mxu0 0
      %506 = vmatpush1.bf16.msra.mxu0 %v490
      %507 = vmatprep.subr.bf16.mxu0 0
      %508 = vmatpush1.bf16.msra.mxu0 0
      %509 = vmatprep.subr.bf16.mxu0 0
      %510 = vmatpush1.bf16.msra.mxu0 0
      %511 = vmatprep.subr.bf16.mxu0 0
      %512 = vmatpush1.bf16.msra.mxu0 0
      %513 = vmatprep.subr.bf16.mxu0 0
      %514 = vmatpush1.bf16.msra.mxu0 0
      %515 = vmatprep.subr.bf16.mxu0 0
      %516 = vmatpush1.bf16.msra.mxu0 0
      %517 = vmatprep.subr.bf16.mxu0 0
      %518 = vmatpush1.bf16.msra.mxu0 0
      %519 = vmatprep.subr.bf16.mxu0 0
      %520 = vmatpush1.bf16.msra.mxu0 0
      %521 = vmatprep.subr.bf16.mxu0 0
      %522 = vmatpush1.bf16.msra.mxu0 0
      %523 = vmatprep.subr.bf16.mxu0 0
      %524 = vmatpush1.bf16.msra.mxu0 0
      %525 = vmatprep.subr.bf16.mxu0 0
      %526 = vmatpush1.bf16.msra.mxu0 0
      %527 = vmatprep.subr.bf16.mxu0 0
      %528 = vmatpush1.bf16.msra.mxu0 0
      %529 = vmatprep.subr.bf16.mxu0 0
      %530 = vmatpush1.bf16.msra.mxu0 0
      %531 = vmatprep.mubr.bf16.mxu0 0
      %532 = vmatmul.mubr.bf16.gmra.mrb[0].mxu0 %v497
      %v533 = vpop.f32.mrb[0].mxu0
      %v534 = vadd.f32 0.0, %v533
      %v535 = vpop.f32.mrb[0].mxu0
      %v536 = vpop.f32.mrb[0].mxu0
      %v537 = vadd.f32 0.0, %v536
      %v538 = vpop.f32.mrb[0].mxu0
      %539 = vdwg.mxu0
      %v540 = vadd.f32 %v485, %v534
      %v541 = vadd.f32 %v486, %v537
      %542 = vst.msk [vmem:[#allocation4] sm:$0xff] %vm395, %v540
      %543 = vst.msk [vmem:[#allocation4 + $0x8] sm:$0xff] %vm395, %v541
      %544 = vst.msk [vmem:[#allocation2] sm:$0x1] %vm475, %v417
      // Predicated region
      $region37: #{nonlocal_mask_forward.6} parent=31 // pred_check
        %p545 = pneg %p272
      $region38: #{nonlocal_mask_forward.6} parent=31 // pred_check_branch
        %547 = sbr.rel (%p545) target = $region40
      $region39: #{nonlocal_mask_forward.6} parent=31 // pred_region
        %v548 = vld [vmem:[#allocation3] sm:$0x1]
        %v549 = vrcp.pop %v548
        %v550 = vld [vmem:[#allocation4] sm:$0xff]
        %v551 = vld [vmem:[#allocation4 + $0x8] sm:$0xff]
        %v553 = vlaneseq
        %v554 = vshrl.u32 %v553, 7
        %v555 = vsub.s32 0, %v554
        %v556 = vrot.slane %v549, %v555
        %v558 = vmul.f32 %v550, %v556
        %v559 = vmul.f32 %v551, %v556
        %560 = vst.msk [vmem:[%s270] sm:$0xff] %vm395, %v558
        %561 = vst.msk [vmem:[%s270 + $0x8] sm:$0xff] %vm395, %v559
      $region40: #{nonlocal_mask_forward.6} parent=31 // pred_fallthru
        _
      %p562 = scmp.lt.s32.totalorder %s19, 1
      %s563 = scalar_select %p562, %s19, 1
      %p564 = scmp.lt.s32.totalorder %s20, 0
      %s565 = scalar_select %p564, %s20, 0
      %s566 = smul.addr %s563, 2
      %s567 = sadd.s32 %s565, %s566
      %s568 = smul.addr %s567, 8
      %s569 = scalar_lea.vmem %s3, %s568
      // Predicated region
      $region41: #{nonlocal_mask_forward.6} parent=31 // pred_check
        %p570 = pneg %p137
      $region42: #{nonlocal_mask_forward.6} parent=31 // pred_check_branch
        %572 = sbr.rel (%p570) target = $region44
      $region43: #{nonlocal_mask_forward.6} parent=31 // pred_region
        _
      $region44: #{nonlocal_mask_forward.6} parent=31 // pred_fallthru
        _
    $region32: #{nonlocal_mask_forward.6} parent=5 // pred_fallthru
      _
    %p573 = scmp.le.s32.totalorder 2, %s9
    // Predicated region
    $region45: #{nonlocal_mask_forward.6} parent=5 // pred_check
      %p574 = pneg %p573
    $region46: #{nonlocal_mask_forward.6} parent=5 // pred_check_branch
      %576 = sbr.rel (%p574) target = $region48
    $region47: #{nonlocal_mask_forward.6} parent=5 // pred_region
      %s577 = ssub.s32 %s9, 2
      // Predicated region
      $region49: #{nonlocal_mask_forward.6} parent=47 // pred_check
        %p578 = pneg %p143
      $region50: #{nonlocal_mask_forward.6} parent=47 // pred_check_branch
        %580 = sbr.rel (%p578) target = $region52
      $region51: #{nonlocal_mask_forward.6} parent=47 // pred_region
        %p581 = scmp.lt.s32.totalorder %s22, 1
        %s582 = scalar_select %p581, %s22, 1
        %p583 = scmp.lt.s32.totalorder %s23, 0
        %s584 = scalar_select %p583, %s23, 0
        %s585 = smul.addr %s582, 2
        %s586 = sadd.s32 %s584, %s585
        %s587 = smul.addr %s586, 8
        %s588 = scalar_lea.vmem %s3, %s587
      $region52: #{nonlocal_mask_forward.6} parent=47 // pred_fallthru
        _
    $region48: #{nonlocal_mask_forward.6} parent=5 // pred_fallthru
      _
  $region6: #{nonlocal_mask_forward.6} parent=0 // loop_footer
    %s13 = sadd.s32 1, %s9
  $region7: #{nonlocal_mask_forward.6} parent=0 // loop_footer_branch
    %8 = sbr.rel target = $region3
  $region8: #{nonlocal_mask_forward.6} parent=0 // loop_exit
    _

// kernel: nonlocal_mask_forward.5
$region0: #{nonlocal_mask_forward.5}
  #allocation0 [shape = 'u32[]', space=smem, size = 0x4, offset = 0x4, fixed_abs, tag = 'smem constant byte address 0x4 - core index']
  #allocation1 [shape = 'u32[144,128]{1,0:T(1,128)}', space=vmem, size = 0x12000, scoped, tag = 'internal scratch']
  #allocation2 [shape = 'f32[16,16]{1,0:T(8,128)}', space=vmem, size = 0x2000, scoped, tag = 'scratch operand']
  %s0 = inlined_call_operand.vmem [shape: f32[2,16,64], index: 0, kind: input, shape index: {}]
  %s1 = inlined_call_operand.vmem [shape: f32[48,16], index: 1, kind: input, shape index: {}]
  %s2 = inlined_call_operand.vmem [shape: f32[48,1], index: 2, kind: input, shape index: {}]
  %s3 = inlined_call_operand.vmem [shape: bf16[2,16,64], index: 3, kind: output, shape index: {0}]
  %s4 = inlined_call_operand.vmem [shape: bf16[2,16,64], index: 4, kind: output, shape index: {1}]
  %s5 = inlined_call_operand.vmem [shape: bf16[2,16,64], index: 5, kind: output, shape index: {2}]
  %s6 = inlined_call_operand.vmem [shape: f32[2,16,16], index: 6, kind: output, shape index: {3}]
  %7 = xla_tuple %s3, %s4, %s5, %s6
  %s8 = sld [smem:[#allocation0]]
  $region77: #{nonlocal_mask_forward.5} parent=0
    _
  %s10 = ssub.s32 1, %s8
  %s11 = scalar_select 0, %s10, %s8
  loop: start=0, step=1, limit=4
  $region2: #{nonlocal_mask_forward.5} parent=0 // loop_pre_header
    _
  $region3: #{nonlocal_mask_forward.5} parent=0 // loop_header
    %s13 = sphi 0, %s17
    %p14 = scmp.ge.s32.totalorder %s13, 4
    %s20 = sphi 0, %s32
    %s21 = sphi 0, %s28
    %s22 = sphi 0, %s20
    %s23 = sphi 0, %s21
    %s24 = sphi 0, %s22
    %s25 = sphi 0, %s23
    %s37 = sphi 0, %s39
    %s40 = sphi 0, %s37
    %s41 = sphi 0, %s40
    %s57 = sphi 0, %s41
    %s61 = sphi 0, %s61
    %s63 = sphi 0, %s61
    %s64 = sphi 0, %s63
    %s78 = sphi 0, %s64
    %s82 = sphi 0, %s82
    %s84 = sphi 0, %s82
    %s85 = sphi 0, %s84
    %s99 = sphi 0, %s85
    %s107 = sphi 0, %s109
    %s110 = sphi 0, %s107
    %s111 = sphi 0, %s110
    %s127 = sphi 0, %s111
    %s135 = sphi 0, %s137
    %s138 = sphi 0, %s135
    %s139 = sphi 0, %s138
    %s155 = sphi 0, %s139
    %s163 = sphi 0, %s165
    %s166 = sphi 0, %s163
    %s167 = sphi 0, %s166
    %s183 = sphi 0, %s167
    %s189 = sphi 0, %s191
    %s192 = sphi 0, %s189
    %s193 = sphi 0, %s192
    %s209 = sphi 0, %s193
  $region4: #{nonlocal_mask_forward.5} parent=0 // loop_header_branch
    %16 = sbr.rel (%p14) target = $region8
  $region5: #{nonlocal_mask_forward.5} parent=0 // loop_body
    %s18 = ssub.s32 %s13, 1
    %s19 = ssub.s32 %s13, 2
    %s26 = sadd.s32 1, %s21
    %p27 = scmp.ge.s32.totalorder %s26, 1
    %s28 = scalar_select %p27, 0, %s26
    %s29 = sadd.s32 1, %s20
    %s30 = scalar_select %p27, %s29, %s20
    %p31 = scmp.ge.s32.totalorder %s30, 2
    %s32 = scalar_select %p31, 0, %s30
    %s33 = ssub.s32 %s20, %s32
    %s34 = ssub.s32 %s21, %s28
    %s35 = sor.u32 %s33, %s34
    %p36 = scmp.eq.s32.totalorder %s35, 0
    %s38 = sadd.s32 %s37, 1
    %s39 = scalar_select %p36, %s37, %s38
    %p42 = pneg %p36
    %p43 = scmp.eq.s32.totalorder %s13, 1
    %p44 = por %p42, %p43
    %p45 = scmp.ne.s32.totalorder %s37, %s40
    %p46 = scmp.eq.s32.totalorder %s13, 0
    %p47 = por %p45, %p46
    %p48 = scmp.ne.s32.totalorder %s37, %s40
    %p49 = scmp.eq.s32.totalorder %s18, 1
    %p50 = por %p48, %p49
    %p51 = scmp.ne.s32.totalorder %s40, %s41
    %p52 = scmp.eq.s32.totalorder %s18, 0
    %p53 = por %p51, %p52
    %p54 = scmp.ne.s32.totalorder %s40, %s41
    %p55 = scmp.eq.s32.totalorder %s19, 1
    %p56 = por %p54, %p55
    %p58 = scmp.ne.s32.totalorder %s41, %s57
    %p59 = scmp.eq.s32.totalorder %s19, 0
    %p60 = por %p58, %p59
    %s62 = sadd.s32 %s61, 1
    %p65 = scmp.eq.s32.totalorder %s13, 1
    %p66 = scmp.ne.s32.totalorder %s61, %s63
    %p67 = scmp.eq.s32.totalorder %s13, 0
    %p68 = por %p66, %p67
    %p69 = scmp.ne.s32.totalorder %s61, %s63
    %p70 = scmp.eq.s32.totalorder %s18, 1
    %p71 = por %p69, %p70
    %p72 = scmp.ne.s32.totalorder %s63, %s64
    %p73 = scmp.eq.s32.totalorder %s18, 0
    %p74 = por %p72, %p73
    %p75 = scmp.ne.s32.totalorder %s63, %s64
    %p76 = scmp.eq.s32.totalorder %s19, 1
    %p77 = por %p75, %p76
    %p79 = scmp.ne.s32.totalorder %s64, %s78
    %p80 = scmp.eq.s32.totalorder %s19, 0
    %p81 = por %p79, %p80
    %s83 = sadd.s32 %s82, 1
    %p86 = scmp.eq.s32.totalorder %s13, 1
    %p87 = scmp.ne.s32.totalorder %s82, %s84
    %p88 = scmp.eq.s32.totalorder %s13, 0
    %p89 = por %p87, %p88
    %p90 = scmp.ne.s32.totalorder %s82, %s84
    %p91 = scmp.eq.s32.totalorder %s18, 1
    %p92 = por %p90, %p91
    %p93 = scmp.ne.s32.totalorder %s84, %s85
    %p94 = scmp.eq.s32.totalorder %s18, 0
    %p95 = por %p93, %p94
    %p96 = scmp.ne.s32.totalorder %s84, %s85
    %p97 = scmp.eq.s32.totalorder %s19, 1
    %p98 = por %p96, %p97
    %p100 = scmp.ne.s32.totalorder %s85, %s99
    %p101 = scmp.eq.s32.totalorder %s19, 0
    %p102 = por %p100, %p101
    %s103 = ssub.s32 %s20, %s32
    %s104 = ssub.s32 %s21, %s28
    %s105 = sor.u32 %s103, %s104
    %p106 = scmp.eq.s32.totalorder %s105, 0
    %s108 = sadd.s32 %s107, 1
    %s109 = scalar_select %p106, %s107, %s108
    %p112 = pneg %p106
    %p113 = scmp.eq.s32.totalorder %s13, 1
    %p114 = por %p112, %p113
    %p115 = scmp.ne.s32.totalorder %s107, %s110
    %p116 = scmp.eq.s32.totalorder %s13, 0
    %p117 = por %p115, %p116
    %p118 = scmp.ne.s32.totalorder %s107, %s110
    %p119 = scmp.eq.s32.totalorder %s18, 1
    %p120 = por %p118, %p119
    %p121 = scmp.ne.s32.totalorder %s110, %s111
    %p122 = scmp.eq.s32.totalorder %s18, 0
    %p123 = por %p121, %p122
    %p124 = scmp.ne.s32.totalorder %s110, %s111
    %p125 = scmp.eq.s32.totalorder %s19, 1
    %p126 = por %p124, %p125
    %p128 = scmp.ne.s32.totalorder %s111, %s127
    %p129 = scmp.eq.s32.totalorder %s19, 0
    %p130 = por %p128, %p129
    %s131 = ssub.s32 %s20, %s32
    %s132 = ssub.s32 %s21, %s28
    %s133 = sor.u32 %s131, %s132
    %p134 = scmp.eq.s32.totalorder %s133, 0
    %s136 = sadd.s32 %s135, 1
    %s137 = scalar_select %p134, %s135, %s136
    %p140 = pneg %p134
    %p141 = scmp.eq.s32.totalorder %s13, 1
    %p142 = por %p140, %p141
    %p143 = scmp.ne.s32.totalorder %s135, %s138
    %p144 = scmp.eq.s32.totalorder %s13, 0
    %p145 = por %p143, %p144
    %p146 = scmp.ne.s32.totalorder %s135, %s138
    %p147 = scmp.eq.s32.totalorder %s18, 1
    %p148 = por %p146, %p147
    %p149 = scmp.ne.s32.totalorder %s138, %s139
    %p150 = scmp.eq.s32.totalorder %s18, 0
    %p151 = por %p149, %p150
    %p152 = scmp.ne.s32.totalorder %s138, %s139
    %p153 = scmp.eq.s32.totalorder %s19, 1
    %p154 = por %p152, %p153
    %p156 = scmp.ne.s32.totalorder %s139, %s155
    %p157 = scmp.eq.s32.totalorder %s19, 0
    %p158 = por %p156, %p157
    %s159 = ssub.s32 %s20, %s32
    %s160 = ssub.s32 %s21, %s28
    %s161 = sor.u32 %s159, %s160
    %p162 = scmp.eq.s32.totalorder %s161, 0
    %s164 = sadd.s32 %s163, 1
    %s165 = scalar_select %p162, %s163, %s164
    %p168 = pneg %p162
    %p169 = scmp.eq.s32.totalorder %s13, 1
    %p170 = por %p168, %p169
    %p171 = scmp.ne.s32.totalorder %s163, %s166
    %p172 = scmp.eq.s32.totalorder %s13, 0
    %p173 = por %p171, %p172
    %p174 = scmp.ne.s32.totalorder %s163, %s166
    %p175 = scmp.eq.s32.totalorder %s18, 1
    %p176 = por %p174, %p175
    %p177 = scmp.ne.s32.totalorder %s166, %s167
    %p178 = scmp.eq.s32.totalorder %s18, 0
    %p179 = por %p177, %p178
    %p180 = scmp.ne.s32.totalorder %s166, %s167
    %p181 = scmp.eq.s32.totalorder %s19, 1
    %p182 = por %p180, %p181
    %p184 = scmp.ne.s32.totalorder %s167, %s183
    %p185 = scmp.eq.s32.totalorder %s19, 0
    %p186 = por %p184, %p185
    %s187 = ssub.s32 %s20, %s32
    %p188 = scmp.eq.s32.totalorder %s187, 0
    %s190 = sadd.s32 %s189, 1
    %s191 = scalar_select %p188, %s189, %s190
    %p194 = pneg %p188
    %p195 = scmp.eq.s32.totalorder %s13, 1
    %p196 = por %p194, %p195
    %p197 = scmp.ne.s32.totalorder %s189, %s192
    %p198 = scmp.eq.s32.totalorder %s13, 0
    %p199 = por %p197, %p198
    %p200 = scmp.ne.s32.totalorder %s189, %s192
    %p201 = scmp.eq.s32.totalorder %s18, 1
    %p202 = por %p200, %p201
    %p203 = scmp.ne.s32.totalorder %s192, %s193
    %p204 = scmp.eq.s32.totalorder %s18, 0
    %p205 = por %p203, %p204
    %p206 = scmp.ne.s32.totalorder %s192, %s193
    %p207 = scmp.eq.s32.totalorder %s19, 1
    %p208 = por %p206, %p207
    %p210 = scmp.ne.s32.totalorder %s193, %s209
    %p211 = scmp.eq.s32.totalorder %s19, 0
    %p212 = por %p210, %p211
    %p213 = scmp.le.s32.totalorder 1, %s13
    %p214 = scmp.lt.s32.totalorder %s13, 3
    %p215 = pnand %p213, %p214
    %p216 = pneg %p215
    // Predicated region
    $region9: #{nonlocal_mask_forward.5} parent=5 // pred_check
      _
    $region10: #{nonlocal_mask_forward.5} parent=5 // pred_check_branch
      %218 = sbr.rel (%p215) target = $region12
    $region11: #{nonlocal_mask_forward.5} parent=5 // pred_region
      %s219 = ssub.s32 %s13, 1
      // Predicated region
      $region13: #{nonlocal_mask_forward.5} parent=11 // pred_check
        %p220 = pneg %p74
      $region14: #{nonlocal_mask_forward.5} parent=11 // pred_check_branch
        %222 = sbr.rel (%p220) target = $region16
      $region15: #{nonlocal_mask_forward.5} parent=11 // pred_region
        _
      $region16: #{nonlocal_mask_forward.5} parent=11 // pred_fallthru
        _
      // Predicated region
      $region17: #{nonlocal_mask_forward.5} parent=11 // pred_check
        %p223 = pneg %p95
      $region18: #{nonlocal_mask_forward.5} parent=11 // pred_check_branch
        %225 = sbr.rel (%p223) target = $region20
      $region19: #{nonlocal_mask_forward.5} parent=11 // pred_region
        _
      $region20: #{nonlocal_mask_forward.5} parent=11 // pred_fallthru
        _
    $region12: #{nonlocal_mask_forward.5} parent=5 // pred_fallthru
      _
    %p226 = scmp.lt.s32.totalorder %s13, 2
    // Predicated region
    $region21: #{nonlocal_mask_forward.5} parent=5 // pred_check
      %p227 = pneg %p226
    $region22: #{nonlocal_mask_forward.5} parent=5 // pred_check_branch
      %229 = sbr.rel (%p227) target = $region24
    $region23: #{nonlocal_mask_forward.5} parent=5 // pred_region
      // Predicated region
      $region25: #{nonlocal_mask_forward.5} parent=23 // pred_check
        %p230 = pneg %p47
      $region26: #{nonlocal_mask_forward.5} parent=23 // pred_check_branch
        %232 = sbr.rel (%p230) target = $region28
      $region27: #{nonlocal_mask_forward.5} parent=23 // pred_region
        %p233 = scmp.lt.s32.totalorder %s20, 1
        %s234 = scalar_select %p233, %s20, 1
        %p235 = scmp.lt.s32.totalorder %s21, 0
        %s236 = scalar_select %p235, %s21, 0
        %s237 = smul.addr %s234, 2
        %s238 = sadd.s32 %s236, %s237
        %s239 = smul.addr %s238, 8
        %s240 = scalar_lea.vmem %s0, %s239
      $region28: #{nonlocal_mask_forward.5} parent=23 // pred_fallthru
        _
    $region24: #{nonlocal_mask_forward.5} parent=5 // pred_fallthru
      _
    %p241 = scmp.le.s32.totalorder 1, %s13
    %p242 = scmp.lt.s32.totalorder %s13, 3
    %p243 = pnand %p241, %p242
    %p244 = pneg %p243
    // Predicated region
    $region29: #{nonlocal_mask_forward.5} parent=5 // pred_check
      _
    $region30: #{nonlocal_mask_forward.5} parent=5 // pred_check_branch
      %246 = sbr.rel (%p243) target = $region32
    $region31: #{nonlocal_mask_forward.5} parent=5 // pred_region
      %s247 = ssub.s32 %s13, 1
      %p248 = scmp.lt.s32.totalorder %s22, 1
      %s249 = scalar_select %p248, %s22, 1
      %p250 = scmp.lt.s32.totalorder %s23, 0
      %s251 = scalar_select %p250, %s23, 0
      %s252 = smul.addr %s249, 2
      %s253 = sadd.s32 %s251, %s252
      %s254 = smul.addr %s253, 8
      %s255 = scalar_lea.vmem %s0, %s254
      %p256 = pneg %p53
      %p257 = pneg %p50
      %p258 = pneg %p74
      %p259 = pneg %p71
      %p260 = pneg %p95
      %p261 = pneg %p92
      %p262 = pneg %p123
      %p263 = pneg %p120
      %p264 = scmp.lt.s32.totalorder %s22, 1
      %s265 = scalar_select %p264, %s22, 1
      %p266 = scmp.lt.s32.totalorder %s23, 0
      %s267 = scalar_select %p266, %s23, 0
      %s268 = smul.addr %s265, 2
      %s269 = sadd.s32 %s267, %s268
      %s270 = smul.addr %s269, 4
      %s271 = scalar_lea.vmem %s3, %s270
      %p272 = pneg %p151
      %p273 = pneg %p148
      %p274 = scmp.lt.s32.totalorder %s22, 1
      %s275 = scalar_select %p274, %s22, 1
      %p276 = scmp.lt.s32.totalorder %s23, 0
      %s277 = scalar_select %p276, %s23, 0
      %s278 = smul.addr %s275, 2
      %s279 = sadd.s32 %s277, %s278
      %s280 = smul.addr %s279, 4
      %s281 = scalar_lea.vmem %s4, %s280
      %p282 = pneg %p179
      %p283 = pneg %p176
      %p284 = scmp.lt.s32.totalorder %s22, 1
      %s285 = scalar_select %p284, %s22, 1
      %p286 = scmp.lt.s32.totalorder %s23, 0
      %s287 = scalar_select %p286, %s23, 0
      %s288 = smul.addr %s285, 2
      %s289 = sadd.s32 %s287, %s288
      %s290 = smul.addr %s289, 4
      %s291 = scalar_lea.vmem %s5, %s290
      %p292 = pneg %p205
      %p293 = pneg %p202
      %p294 = scmp.lt.s32.totalorder %s22, 1
      %s295 = scalar_select %p294, %s22, 1
      %s296 = smul.addr %s295, 2
      %s297 = smul.addr %s296, 8
      %s298 = scalar_lea.vmem %s6, %s297
      %p299 = scmp.lt.s32.totalorder %s22, 1
      %s300 = scalar_select %p299, %s22, 1
      %p301 = scmp.lt.s32.totalorder %s23, 0
      %s302 = scalar_select %p301, %s23, 0
      %s303 = smul.addr %s300, 2
      %s304 = sadd.s32 %s302, %s303
      %s305 = smul.addr %s304, 8
      %s306 = scalar_lea.vmem %s0, %s305
      %p307 = scmp.lt.s32.totalorder %s22, 1
      %s308 = scalar_select %p307, %s22, 1
      %p309 = scmp.lt.s32.totalorder %s23, 0
      %s310 = scalar_select %p309, %s23, 0
      %s311 = smul.addr %s308, 2
      %s312 = sadd.s32 %s310, %s311
      %s313 = smul.addr %s312, 4
      %s314 = scalar_lea.vmem %s3, %s313
      %p315 = scmp.lt.s32.totalorder %s22, 1
      %s316 = scalar_select %p315, %s22, 1
      %p317 = scmp.lt.s32.totalorder %s23, 0
      %s318 = scalar_select %p317, %s23, 0
      %s319 = smul.addr %s316, 2
      %s320 = sadd.s32 %s318, %s319
      %s321 = smul.addr %s320, 4
      %s322 = scalar_lea.vmem %s4, %s321
      %p323 = scmp.lt.s32.totalorder %s22, 1
      %s324 = scalar_select %p323, %s22, 1
      %p325 = scmp.lt.s32.totalorder %s23, 0
      %s326 = scalar_select %p325, %s23, 0
      %s327 = smul.addr %s324, 2
      %s328 = sadd.s32 %s326, %s327
      %s329 = smul.addr %s328, 4
      %s330 = scalar_lea.vmem %s5, %s329
      %p331 = scmp.lt.s32.totalorder %s22, 1
      %s332 = scalar_select %p331, %s22, 1
      %s333 = smul.addr %s332, 2
      %s334 = smul.addr %s333, 8
      %s335 = scalar_lea.vmem %s6, %s334
      %v336 = vld [vmem:[%s306] sm:$0xff]
      %v337 = vld [vmem:[%s306 + $0x8] sm:$0xff]
      %v338 = vld [vmem:[%s1] sm:$0xff]
      %v339 = vld [vmem:[%s1 + $0x8] sm:$0xff]
      %v340 = vld [vmem:[%s1 + $0x10] sm:$0xff]
      %v341 = vld [vmem:[%s1 + $0x18] sm:$0xff]
      %v342 = vld [vmem:[%s1 + $0x20] sm:$0xff]
      %v343 = vld [vmem:[%s1 + $0x28] sm:$0xff]
      %v344 = vld [vmem:[%s2] sm:$0xff]
      %v345 = vld [vmem:[%s2 + $0x8] sm:$0xff]
      %v346 = vld [vmem:[%s2 + $0x10] sm:$0xff]
      %v347 = vld [vmem:[%s2 + $0x18] sm:$0xff]
      %v348 = vld [vmem:[%s2 + $0x20] sm:$0xff]
      %v349 = vld [vmem:[%s2 + $0x28] sm:$0xff]
      %351 = vset.pattern.permute.xlu0 0
      %352 = vperm.xlu0 %351, %v344
      %v353 = vpop.permute.xlu0 %352
      %356 = vset.pattern.permute.xlu0 0
      %357 = vperm.xlu0 %356, %v345
      %v358 = vpop.permute.xlu0 %357
      %361 = vset.pattern.permute.xlu0 0
      %362 = vperm.xlu0 %361, %v346
      %v363 = vpop.permute.xlu0 %362
      %366 = vset.pattern.permute.xlu0 0
      %367 = vperm.xlu0 %366, %v347
      %v368 = vpop.permute.xlu0 %367
      %371 = vset.pattern.permute.xlu0 0
      %372 = vperm.xlu0 %371, %v348
      %v373 = vpop.permute.xlu0 %372
      %376 = vset.pattern.permute.xlu0 0
      %377 = vperm.xlu0 %376, %v349
      %v378 = vpop.permute.xlu0 %377
      %vm380 = vcmask 130048
      %v382 = vsel %vm380, %v338, 0
      %v385 = vsel %vm380, %v339, 0
      %v388 = vsel %vm380, %v340, 0
      %v391 = vsel %vm380, %v341, 0
      %v394 = vsel %vm380, %v342, 0
      %v397 = vsel %vm380, %v343, 0
      %399 = vmatprep.subr.mxu0 0.0
      %400 = vmatpush1.msra.mxu0 %v336
      %401 = vmatprep.subr.mxu0 0.0
      %402 = vmatpush1.msra.mxu0 %v337
      %403 = vmatprep.subr.mxu0 0.0
      %404 = vmatpush1.msra.mxu0 0.0
      %405 = vmatprep.subr.mxu0 0.0
      %406 = vmatpush1.msra.mxu0 0.0
      %407 = vmatprep.subr.mxu0 0.0
      %408 = vmatpush1.msra.mxu0 0.0
      %409 = vmatprep.subr.mxu0 0.0
      %410 = vmatpush1.msra.mxu0 0.0
      %411 = vmatprep.subr.mxu0 0.0
      %412 = vmatpush1.msra.mxu0 0.0
      %413 = vmatprep.subr.mxu0 0.0
      %414 = vmatpush1.msra.mxu0 0.0
      %415 = vmatprep.subr.mxu0 0.0
      %416 = vmatpush1.msra.mxu0 0.0
      %417 = vmatprep.subr.mxu0 0.0
      %418 = vmatpush1.msra.mxu0 0.0
      %419 = vmatprep.subr.mxu0 0.0
      %420 = vmatpush1.msra.mxu0 0.0
      %421 = vmatprep.subr.mxu0 0.0
      %422 = vmatpush1.msra.mxu0 0.0
      %423 = vmatprep.subr.mxu0 0.0
      %424 = vmatpush1.msra.mxu0 0.0
      %425 = vmatprep.subr.mxu0 0.0
      %426 = vmatpush1.msra.mxu0 0.0
      %427 = vmatprep.subr.mxu0 0.0
      %428 = vmatpush1.msra.mxu0 0.0
      %429 = vmatprep.subr.mxu0 0.0
      %430 = vmatpush1.msra.mxu0 0.0
      %431 = vmatprep.subr.mxu0 0.0
      %432 = vmatpush1.msra.mxu0 0.0
      %433 = vmatprep.subr.mxu0 0.0
      %434 = vmatpush1.msra.mxu0 0.0
      %435 = vmatprep.subr.mxu0 0.0
      %436 = vmatpush1.msra.mxu0 0.0
      %437 = vmatprep.subr.mxu0 0.0
      %438 = vmatpush1.msra.mxu0 0.0
      %439 = vmatprep.subr.mxu0 0.0
      %440 = vmatpush1.msra.mxu0 0.0
      %441 = vmatprep.subr.mxu0 0.0
      %442 = vmatpush1.msra.mxu0 0.0
      %443 = vmatprep.subr.mxu0 0.0
      %444 = vmatpush1.msra.mxu0 0.0
      %445 = vmatprep.subr.mxu0 0.0
      %446 = vmatpush1.msra.mxu0 0.0
      %447 = vmatprep.subr.mxu0 0.0
      %448 = vmatpush1.msra.mxu0 0.0
      %449 = vmatprep.subr.mxu0 0.0
      %450 = vmatpush1.msra.mxu0 0.0
      %451 = vmatprep.subr.mxu0 0.0
      %452 = vmatpush1.msra.mxu0 0.0
      %453 = vmatprep.subr.mxu0 0.0
      %454 = vmatpush1.msra.mxu0 0.0
      %455 = vmatprep.subr.mxu0 0.0
      %456 = vmatpush1.msra.mxu0 0.0
      %457 = vmatprep.subr.mxu0 0.0
      %458 = vmatpush1.msra.mxu0 0.0
      %459 = vmatprep.subr.mxu0 0.0
      %460 = vmatpush1.msra.mxu0 0.0
      %461 = vmatprep.subr.mxu0 0.0
      %462 = vmatpush1.msra.mxu0 0.0
      %463 = vmatprep.mubr.f32.mxu0 0.0
      %464 = vmatmul.mubr.f32.gmra.mrb[0].mxu0 %v382
      %v465 = vpop.f32.mrb[0].mxu0
      %v466 = vadd.f32 %v353, %v465
      %v467 = vpop.f32.mrb[0].mxu0
      %468 = vmatprep.mubr.f32.mxu0 0.0
      %469 = vmatmul.mubr.f32.gmra.mrb[0].mxu0 %v385
      %v470 = vpop.f32.mrb[0].mxu0
      %v471 = vadd.f32 %v358, %v470
      %v472 = vpop.f32.mrb[0].mxu0
      %473 = vmatprep.mubr.f32.mxu0 0.0
      %474 = vmatmul.mubr.f32.gmra.mrb[0].mxu0 %v388
      %v475 = vpop.f32.mrb[0].mxu0
      %v476 = vadd.f32 %v363, %v475
      %v477 = vpop.f32.mrb[0].mxu0
      %478 = vmatprep.mubr.f32.mxu0 0.0
      %479 = vmatmul.mubr.f32.gmra.mrb[0].mxu0 %v391
      %v480 = vpop.f32.mrb[0].mxu0
      %v481 = vadd.f32 %v368, %v480
      %v482 = vpop.f32.mrb[0].mxu0
      %483 = vmatprep.mubr.f32.mxu0 0.0
      %484 = vmatmul.mubr.f32.gmra.mrb[0].mxu0 %v394
      %v485 = vpop.f32.mrb[0].mxu0
      %v486 = vadd.f32 %v373, %v485
      %v487 = vpop.f32.mrb[0].mxu0
      %488 = vmatprep.mubr.f32.mxu0 0.0
      %489 = vmatmul.mubr.f32.gmra.mrb[0].mxu0 %v397
      %v490 = vpop.f32.mrb[0].mxu0
      %v491 = vadd.f32 %v378, %v490
      %v492 = vpop.f32.mrb[0].mxu0
      %493 = vdwg.mxu0
      %v494 = vpack.c.bf16 %v471, %v466
      %v496 = vunpack.c.l.b16 %v494
      %v497 = vunpack.c.h.b16 %v494
      %v498 = vpack.c.b16 %v496, %v496
      %v499 = vpack.c.b16 %v497, %v497
      %vm502 = vcmask 519168
      %503 = vst.msk [vmem:[%s314] sm:$0xf] %vm502, %v498
      %504 = vst.msk [vmem:[%s314 + $0x4] sm:$0xf] %vm502, %v499
      %v505 = vpack.c.bf16 %v481, %v476
      %v507 = vunpack.c.l.b16 %v505
      %v508 = vunpack.c.h.b16 %v505
      %v509 = vpack.c.b16 %v507, %v507
      %v510 = vpack.c.b16 %v508, %v508
      %513 = vst.msk [vmem:[%s322] sm:$0xf] %vm502, %v509
      %514 = vst.msk [vmem:[%s322 + $0x4] sm:$0xf] %vm502, %v510
      %v515 = vpack.c.bf16 %v491, %v486
      %v517 = vunpack.c.l.b16 %v515
      %v518 = vunpack.c.h.b16 %v515
      %v519 = vpack.c.b16 %v517, %v517
      %v520 = vpack.c.b16 %v518, %v518
      %523 = vst.msk [vmem:[%s330] sm:$0xf] %vm502, %v519
      %524 = vst.msk [vmem:[%s330 + $0x4] sm:$0xf] %vm502, %v520
      %p525 = scmp.eq.s32.totalorder %s23, 0
      // Predicated region
      $region33: #{nonlocal_mask_forward.5} parent=31 // pred_check
        %p526 = pneg %p525
      $region34: #{nonlocal_mask_forward.5} parent=31 // pred_check_branch
        %528 = sbr.rel (%p526) target = $region36
      $region35: #{nonlocal_mask_forward.5} parent=31 // pred_region
        %529 = vst.msk [vmem:[#allocation2] sm:$0xff] %vm380, 0.0
        %530 = vst.msk [vmem:[#allocation2 + $0x8] sm:$0xff] %vm380, 0.0
      $region36: #{nonlocal_mask_forward.5} parent=31 // pred_fallthru
        _
      %v531 = vld [vmem:[#allocation2] sm:$0xff]
      %v532 = vld [vmem:[#allocation2 + $0x8] sm:$0xff]
      %vm533 = vcmask 523264
      %v535 = vsel %vm533, %v476, 0
      %v538 = vsel %vm533, %v481, 0
      %v541 = vsel %vm533, %v486, 0
      %v544 = vsel %vm533, %v491, 0
      %546 = vmatprep.subr.mxu0 0.0
      %547 = vmatpush1.xpose.msra.mxu0 %v541
      %548 = vmatprep.subr.mxu0 0.0
      %549 = vmatpush1.xpose.msra.mxu0 %v544
      %550 = vmatprep.subr.mxu0 0.0
      %551 = vmatpush1.xpose.msra.mxu0 0.0
      %552 = vmatprep.subr.mxu0 0.0
      %553 = vmatpush1.xpose.msra.mxu0 0.0
      %554 = vmatprep.subr.mxu0 0.0
      %555 = vmatpush1.xpose.msra.mxu0 0.0
      %556 = vmatprep.subr.mxu0 0.0
      %557 = vmatpush1.xpose.msra.mxu0 0.0
      %558 = vmatprep.subr.mxu0 0.0
      %559 = vmatpush1.xpose.msra.mxu0 0.0
      %560 = vmatprep.subr.mxu0 0.0
      %561 = vmatpush1.xpose.msra.mxu0 0.0
      %562 = vmatprep.subr.mxu0 0.0
      %563 = vmatpush1.xpose.msra.mxu0 0.0
      %564 = vmatprep.subr.mxu0 0.0
      %565 = vmatpush1.xpose.msra.mxu0 0.0
      %566 = vmatprep.subr.mxu0 0.0
      %567 = vmatpush1.xpose.msra.mxu0 0.0
      %568 = vmatprep.subr.mxu0 0.0
      %569 = vmatpush1.xpose.msra.mxu0 0.0
      %570 = vmatprep.subr.mxu0 0.0
      %571 = vmatpush1.xpose.msra.mxu0 0.0
      %572 = vmatprep.subr.mxu0 0.0
      %573 = vmatpush1.xpose.msra.mxu0 0.0
      %574 = vmatprep.subr.mxu0 0.0
      %575 = vmatpush1.xpose.msra.mxu0 0.0
      %576 = vmatprep.subr.mxu0 0.0
      %577 = vmatpush1.xpose.msra.mxu0 0.0
      %578 = vmatprep.subr.mxu0 0.0
      %579 = vmatpush1.xpose.msra.mxu0 0.0
      %580 = vmatprep.subr.mxu0 0.0
      %581 = vmatpush1.xpose.msra.mxu0 0.0
      %582 = vmatprep.subr.mxu0 0.0
      %583 = vmatpush1.xpose.msra.mxu0 0.0
      %584 = vmatprep.subr.mxu0 0.0
      %585 = vmatpush1.xpose.msra.mxu0 0.0
      %586 = vmatprep.subr.mxu0 0.0
      %587 = vmatpush1.xpose.msra.mxu0 0.0
      %588 = vmatprep.subr.mxu0 0.0
      %589 = vmatpush1.xpose.msra.mxu0 0.0
      %590 = vmatprep.subr.mxu0 0.0
      %591 = vmatpush1.xpose.msra.mxu0 0.0
      %592 = vmatprep.subr.mxu0 0.0
      %593 = vmatpush1.xpose.msra.mxu0 0.0
      %594 = vmatprep.subr.mxu0 0.0
      %595 = vmatpush1.xpose.msra.mxu0 0.0
      %596 = vmatprep.subr.mxu0 0.0
      %597 = vmatpush1.xpose.msra.mxu0 0.0
      %598 = vmatprep.subr.mxu0 0.0
      %599 = vmatpush1.xpose.msra.mxu0 0.0
      %600 = vmatprep.subr.mxu0 0.0
      %601 = vmatpush1.xpose.msra.mxu0 0.0
      %602 = vmatprep.subr.mxu0 0.0
      %603 = vmatpush1.xpose.msra.mxu0 0.0
      %604 = vmatprep.subr.mxu0 0.0
      %605 = vmatpush1.xpose.msra.mxu0 0.0
      %606 = vmatprep.subr.mxu0 0.0
      %607 = vmatpush1.xpose.msra.mxu0 0.0
      %608 = vmatprep.subr.mxu0 0.0
      %609 = vmatpush1.xpose.msra.mxu0 0.0
      %610 = vmatprep.mubr.f32.mxu0 0.0
      %611 = vmatmul.mubr.f32.gmra.mrb[0].mxu0 %v535
      %v612 = vpop.f32.mrb[0].mxu0
      %v613 = vadd.f32 0.0, %v612
      %v614 = vpop.f32.mrb[0].mxu0
      %615 = vmatprep.mubr.f32.mxu0 0.0
      %616 = vmatmul.mubr.f32.gmra.mrb[0].mxu0 %v538
      %v617 = vpop.f32.mrb[0].mxu0
      %v618 = vadd.f32 0.0, %v617
      %v619 = vpop.f32.mrb[0].mxu0
      %620 = vdwg.mxu0
      %v621 = vadd.f32 %v531, %v613
      %v622 = vadd.f32 %v532, %v618
      %623 = vst.msk [vmem:[#allocation2] sm:$0xff] %vm380, %v621
      %624 = vst.msk [vmem:[#allocation2 + $0x8] sm:$0xff] %vm380, %v622
      // Predicated region
      $region37: #{nonlocal_mask_forward.5} parent=31 // pred_check
        %p625 = pneg %p525
      $region38: #{nonlocal_mask_forward.5} parent=31 // pred_check_branch
        %627 = sbr.rel (%p625) target = $region40
      $region39: #{nonlocal_mask_forward.5} parent=31 // pred_region
        %v628 = vld [vmem:[#allocation2] sm:$0xff]
        %v629 = vld [vmem:[#allocation2 + $0x8] sm:$0xff]
        %v630 = vsel %vm380, %v628, -inf
        %631 = vmax.xlane.f32.xlu0 %v630
        %v632 = vpop.xlane.xlu0 %631
        %v633 = vsel %vm380, %v629, -inf
        %634 = vmax.xlane.f32.xlu0 %v633
        %v635 = vpop.xlane.xlu0 %634
        %v636 = vsub.f32 %v628, %v632
        %v637 = vsub.f32 %v629, %v635
        %v638 = vmul.f32 %v636, 1.442695
        %v639 = vpow.pop %v638
        %v640 = vmul.f32 %v637, 1.442695
        %v641 = vpow.pop %v640
        %v642 = vsel %vm380, %v639, 0.0
        %643 = vadd.xlane.f32.xlu0 %v642
        %v644 = vpop.xlane.xlu0 %643
        %v645 = vsel %vm380, %v641, 0.0
        %646 = vadd.xlane.f32.xlu0 %v645
        %v647 = vpop.xlane.xlu0 %646
        %v648 = vrcp.pop %v644
        %v649 = vrcp.pop %v647
        %v650 = vmul.f32 %v639, %v648
        %v651 = vmul.f32 %v641, %v649
        %652 = vst.msk [vmem:[%s335] sm:$0xff] %vm380, %v650
        %653 = vst.msk [vmem:[%s335 + $0x8] sm:$0xff] %vm380, %v651
      $region40: #{nonlocal_mask_forward.5} parent=31 // pred_fallthru
        _
      %p654 = scmp.lt.s32.totalorder %s22, 1
      %s655 = scalar_select %p654, %s22, 1
      %p656 = scmp.lt.s32.totalorder %s23, 0
      %s657 = scalar_select %p656, %s23, 0
      %s658 = smul.addr %s655, 2
      %s659 = sadd.s32 %s657, %s658
      %s660 = smul.addr %s659, 4
      %s661 = scalar_lea.vmem %s3, %s660
      %p662 = scmp.lt.s32.totalorder %s22, 1
      %s663 = scalar_select %p662, %s22, 1
      %p664 = scmp.lt.s32.totalorder %s23, 0
      %s665 = scalar_select %p664, %s23, 0
      %s666 = smul.addr %s663, 2
      %s667 = sadd.s32 %s665, %s666
      %s668 = smul.addr %s667, 4
      %s669 = scalar_lea.vmem %s4, %s668
      %p670 = scmp.lt.s32.totalorder %s22, 1
      %s671 = scalar_select %p670, %s22, 1
      %p672 = scmp.lt.s32.totalorder %s23, 0
      %s673 = scalar_select %p672, %s23, 0
      %s674 = smul.addr %s671, 2
      %s675 = sadd.s32 %s673, %s674
      %s676 = smul.addr %s675, 4
      %s677 = scalar_lea.vmem %s5, %s676
      %p678 = scmp.lt.s32.totalorder %s22, 1
      %s679 = scalar_select %p678, %s22, 1
      %s680 = smul.addr %s679, 2
      %s681 = smul.addr %s680, 8
      %s682 = scalar_lea.vmem %s6, %s681
      // Predicated region
      $region41: #{nonlocal_mask_forward.5} parent=31 // pred_check
        %p683 = pneg %p120
      $region42: #{nonlocal_mask_forward.5} parent=31 // pred_check_branch
        %685 = sbr.rel (%p683) target = $region44
      $region43: #{nonlocal_mask_forward.5} parent=31 // pred_region
        _
      $region44: #{nonlocal_mask_forward.5} parent=31 // pred_fallthru
        _
      // Predicated region
      $region45: #{nonlocal_mask_forward.5} parent=31 // pred_check
        %p686 = pneg %p148
      $region46: #{nonlocal_mask_forward.5} parent=31 // pred_check_branch
        %688 = sbr.rel (%p686) target = $region48
      $region47: #{nonlocal_mask_forward.5} parent=31 // pred_region
        _
      $region48: #{nonlocal_mask_forward.5} parent=31 // pred_fallthru
        _
      // Predicated region
      $region49: #{nonlocal_mask_forward.5} parent=31 // pred_check
        %p689 = pneg %p176
      $region50: #{nonlocal_mask_forward.5} parent=31 // pred_check_branch
        %691 = sbr.rel (%p689) target = $region52
      $region51: #{nonlocal_mask_forward.5} parent=31 // pred_region
        _
      $region52: #{nonlocal_mask_forward.5} parent=31 // pred_fallthru
        _
      // Predicated region
      $region53: #{nonlocal_mask_forward.5} parent=31 // pred_check
        %p692 = pneg %p202
      $region54: #{nonlocal_mask_forward.5} parent=31 // pred_check_branch
        %694 = sbr.rel (%p692) target = $region56
      $region55: #{nonlocal_mask_forward.5} parent=31 // pred_region
        _
      $region56: #{nonlocal_mask_forward.5} parent=31 // pred_fallthru
        _
    $region32: #{nonlocal_mask_forward.5} parent=5 // pred_fallthru
      _
    %p695 = scmp.le.s32.totalorder 2, %s13
    // Predicated region
    $region57: #{nonlocal_mask_forward.5} parent=5 // pred_check
      %p696 = pneg %p695
    $region58: #{nonlocal_mask_forward.5} parent=5 // pred_check_branch
      %698 = sbr.rel (%p696) target = $region60
    $region59: #{nonlocal_mask_forward.5} parent=5 // pred_region
      %s699 = ssub.s32 %s13, 2
      // Predicated region
      $region61: #{nonlocal_mask_forward.5} parent=59 // pred_check
        %p700 = pneg %p126
      $region62: #{nonlocal_mask_forward.5} parent=59 // pred_check_branch
        %702 = sbr.rel (%p700) target = $region64
      $region63: #{nonlocal_mask_forward.5} parent=59 // pred_region
        %p703 = scmp.lt.s32.totalorder %s24, 1
        %s704 = scalar_select %p703, %s24, 1
        %p705 = scmp.lt.s32.totalorder %s25, 0
        %s706 = scalar_select %p705, %s25, 0
        %s707 = smul.addr %s704, 2
        %s708 = sadd.s32 %s706, %s707
        %s709 = smul.addr %s708, 4
        %s710 = scalar_lea.vmem %s3, %s709
      $region64: #{nonlocal_mask_forward.5} parent=59 // pred_fallthru
        _
      // Predicated region
      $region65: #{nonlocal_mask_forward.5} parent=59 // pred_check
        %p711 = pneg %p154
      $region66: #{nonlocal_mask_forward.5} parent=59 // pred_check_branch
        %713 = sbr.rel (%p711) target = $region68
      $region67: #{nonlocal_mask_forward.5} parent=59 // pred_region
        %p714 = scmp.lt.s32.totalorder %s24, 1
        %s715 = scalar_select %p714, %s24, 1
        %p716 = scmp.lt.s32.totalorder %s25, 0
        %s717 = scalar_select %p716, %s25, 0
        %s718 = smul.addr %s715, 2
        %s719 = sadd.s32 %s717, %s718
        %s720 = smul.addr %s719, 4
        %s721 = scalar_lea.vmem %s4, %s720
      $region68: #{nonlocal_mask_forward.5} parent=59 // pred_fallthru
        _
      // Predicated region
      $region69: #{nonlocal_mask_forward.5} parent=59 // pred_check
        %p722 = pneg %p182
      $region70: #{nonlocal_mask_forward.5} parent=59 // pred_check_branch
        %724 = sbr.rel (%p722) target = $region72
      $region71: #{nonlocal_mask_forward.5} parent=59 // pred_region
        %p725 = scmp.lt.s32.totalorder %s24, 1
        %s726 = scalar_select %p725, %s24, 1
        %p727 = scmp.lt.s32.totalorder %s25, 0
        %s728 = scalar_select %p727, %s25, 0
        %s729 = smul.addr %s726, 2
        %s730 = sadd.s32 %s728, %s729
        %s731 = smul.addr %s730, 4
        %s732 = scalar_lea.vmem %s5, %s731
      $region72: #{nonlocal_mask_forward.5} parent=59 // pred_fallthru
        _
      // Predicated region
      $region73: #{nonlocal_mask_forward.5} parent=59 // pred_check
        %p733 = pneg %p208
      $region74: #{nonlocal_mask_forward.5} parent=59 // pred_check_branch
        %735 = sbr.rel (%p733) target = $region76
      $region75: #{nonlocal_mask_forward.5} parent=59 // pred_region
        %p736 = scmp.lt.s32.totalorder %s24, 1
        %s737 = scalar_select %p736, %s24, 1
        %s738 = smul.addr %s737, 2
        %s739 = smul.addr %s738, 8
        %s740 = scalar_lea.vmem %s6, %s739
      $region76: #{nonlocal_mask_forward.5} parent=59 // pred_fallthru
        _
    $region60: #{nonlocal_mask_forward.5} parent=5 // pred_fallthru
      _
  $region6: #{nonlocal_mask_forward.5} parent=0 // loop_footer
    %s17 = sadd.s32 1, %s13
  $region7: #{nonlocal_mask_forward.5} parent=0 // loop_footer_branch
    %12 = sbr.rel target = $region3
  $region8: #{nonlocal_mask_forward.5} parent=0 // loop_exit
    _

// kernel: nonlocal_mask_forward.8
$region0: #{nonlocal_mask_forward.8}
  #allocation0 [shape = 'u32[]', space=smem, size = 0x4, offset = 0x4, fixed_abs, tag = 'smem constant byte address 0x4 - core index']
  #allocation1 [shape = 'u32[144,128]{1,0:T(1,128)}', space=vmem, size = 0x12000, scoped, tag = 'internal scratch']
  %s0 = inlined_call_operand.vmem [shape: f32[2,4,256], index: 0, kind: input, shape index: {}]
  %s1 = inlined_call_operand.vmem [shape: f32[2,4,256], index: 1, kind: input, shape index: {}]
  %s2 = inlined_call_operand.vmem [shape: f32[2,4,256], index: 2, kind: input, shape index: {}]
  %s3 = inlined_call_operand.vmem [shape: f32[4,4], index: 3, kind: input, shape index: {}]
  %s4 = inlined_call_operand.vmem [shape: f32[4,4], index: 4, kind: input, shape index: {}]
  %s5 = inlined_call_operand.vmem [shape: f32[4,1], index: 5, kind: input, shape index: {}]
  %s6 = inlined_call_operand.vmem [shape: f32[2,4,256], index: 6, kind: output, shape index: {}]
  %s7 = sld [smem:[#allocation0]]
  $region57: #{nonlocal_mask_forward.8} parent=0
    _
  %s9 = ssub.s32 1, %s7
  %s10 = scalar_select 0, %s9, %s7
  loop: start=0, step=1, limit=4
  $region2: #{nonlocal_mask_forward.8} parent=0 // loop_pre_header
    _
  $region3: #{nonlocal_mask_forward.8} parent=0 // loop_header
    %s12 = sphi 0, %s16
    %p13 = scmp.ge.s32.totalorder %s12, 4
    %s19 = sphi 0, %s31
    %s20 = sphi 0, %s27
    %s21 = sphi 0, %s19
    %s22 = sphi 0, %s20
    %s23 = sphi 0, %s21
    %s24 = sphi 0, %s22
    %s36 = sphi 0, %s38
    %s39 = sphi 0, %s36
    %s40 = sphi 0, %s39
    %s56 = sphi 0, %s40
    %s64 = sphi 0, %s66
    %s67 = sphi 0, %s64
    %s68 = sphi 0, %s67
    %s84 = sphi 0, %s68
    %s92 = sphi 0, %s94
    %s95 = sphi 0, %s92
    %s96 = sphi 0, %s95
    %s112 = sphi 0, %s96
    %s116 = sphi 0, %s116
    %s118 = sphi 0, %s116
    %s119 = sphi 0, %s118
    %s133 = sphi 0, %s119
    %s137 = sphi 0, %s137
    %s139 = sphi 0, %s137
    %s140 = sphi 0, %s139
    %s154 = sphi 0, %s140
    %s158 = sphi 0, %s158
    %s160 = sphi 0, %s158
    %s161 = sphi 0, %s160
    %s175 = sphi 0, %s161
    %s183 = sphi 0, %s185
    %s186 = sphi 0, %s183
    %s187 = sphi 0, %s186
    %s203 = sphi 0, %s187
  $region4: #{nonlocal_mask_forward.8} parent=0 // loop_header_branch
    %15 = sbr.rel (%p13) target = $region8
  $region5: #{nonlocal_mask_forward.8} parent=0 // loop_body
    %s17 = ssub.s32 %s12, 1
    %s18 = ssub.s32 %s12, 2
    %s25 = sadd.s32 1, %s20
    %p26 = scmp.ge.s32.totalorder %s25, 1
    %s27 = scalar_select %p26, 0, %s25
    %s28 = sadd.s32 1, %s19
    %s29 = scalar_select %p26, %s28, %s19
    %p30 = scmp.ge.s32.totalorder %s29, 2
    %s31 = scalar_select %p30, 0, %s29
    %s32 = ssub.s32 %s19, %s31
    %s33 = ssub.s32 %s20, %s27
    %s34 = sor.u32 %s32, %s33
    %p35 = scmp.eq.s32.totalorder %s34, 0
    %s37 = sadd.s32 %s36, 1
    %s38 = scalar_select %p35, %s36, %s37
    %p41 = pneg %p35
    %p42 = scmp.eq.s32.totalorder %s12, 1
    %p43 = por %p41, %p42
    %p44 = scmp.ne.s32.totalorder %s36, %s39
    %p45 = scmp.eq.s32.totalorder %s12, 0
    %p46 = por %p44, %p45
    %p47 = scmp.ne.s32.totalorder %s36, %s39
    %p48 = scmp.eq.s32.totalorder %s17, 1
    %p49 = por %p47, %p48
    %p50 = scmp.ne.s32.totalorder %s39, %s40
    %p51 = scmp.eq.s32.totalorder %s17, 0
    %p52 = por %p50, %p51
    %p53 = scmp.ne.s32.totalorder %s39, %s40
    %p54 = scmp.eq.s32.totalorder %s18, 1
    %p55 = por %p53, %p54
    %p57 = scmp.ne.s32.totalorder %s40, %s56
    %p58 = scmp.eq.s32.totalorder %s18, 0
    %p59 = por %p57, %p58
    %s60 = ssub.s32 %s19, %s31
    %s61 = ssub.s32 %s20, %s27
    %s62 = sor.u32 %s60, %s61
    %p63 = scmp.eq.s32.totalorder %s62, 0
    %s65 = sadd.s32 %s64, 1
    %s66 = scalar_select %p63, %s64, %s65
    %p69 = pneg %p63
    %p70 = scmp.eq.s32.totalorder %s12, 1
    %p71 = por %p69, %p70
    %p72 = scmp.ne.s32.totalorder %s64, %s67
    %p73 = scmp.eq.s32.totalorder %s12, 0
    %p74 = por %p72, %p73
    %p75 = scmp.ne.s32.totalorder %s64, %s67
    %p76 = scmp.eq.s32.totalorder %s17, 1
    %p77 = por %p75, %p76
    %p78 = scmp.ne.s32.totalorder %s67, %s68
    %p79 = scmp.eq.s32.totalorder %s17, 0
    %p80 = por %p78, %p79
    %p81 = scmp.ne.s32.totalorder %s67, %s68
    %p82 = scmp.eq.s32.totalorder %s18, 1
    %p83 = por %p81, %p82
    %p85 = scmp.ne.s32.totalorder %s68, %s84
    %p86 = scmp.eq.s32.totalorder %s18, 0
    %p87 = por %p85, %p86
    %s88 = ssub.s32 %s19, %s31
    %s89 = ssub.s32 %s20, %s27
    %s90 = sor.u32 %s88, %s89
    %p91 = scmp.eq.s32.totalorder %s90, 0
    %s93 = sadd.s32 %s92, 1
    %s94 = scalar_select %p91, %s92, %s93
    %p97 = pneg %p91
    %p98 = scmp.eq.s32.totalorder %s12, 1
    %p99 = por %p97, %p98
    %p100 = scmp.ne.s32.totalorder %s92, %s95
    %p101 = scmp.eq.s32.totalorder %s12, 0
    %p102 = por %p100, %p101
    %p103 = scmp.ne.s32.totalorder %s92, %s95
    %p104 = scmp.eq.s32.totalorder %s17, 1
    %p105 = por %p103, %p104
    %p106 = scmp.ne.s32.totalorder %s95, %s96
    %p107 = scmp.eq.s32.totalorder %s17, 0
    %p108 = por %p106, %p107
    %p109 = scmp.ne.s32.totalorder %s95, %s96
    %p110 = scmp.eq.s32.totalorder %s18, 1
    %p111 = por %p109, %p110
    %p113 = scmp.ne.s32.totalorder %s96, %s112
    %p114 = scmp.eq.s32.totalorder %s18, 0
    %p115 = por %p113, %p114
    %s117 = sadd.s32 %s116, 1
    %p120 = scmp.eq.s32.totalorder %s12, 1
    %p121 = scmp.ne.s32.totalorder %s116, %s118
    %p122 = scmp.eq.s32.totalorder %s12, 0
    %p123 = por %p121, %p122
    %p124 = scmp.ne.s32.totalorder %s116, %s118
    %p125 = scmp.eq.s32.totalorder %s17, 1
    %p126 = por %p124, %p125
    %p127 = scmp.ne.s32.totalorder %s118, %s119
    %p128 = scmp.eq.s32.totalorder %s17, 0
    %p129 = por %p127, %p128
    %p130 = scmp.ne.s32.totalorder %s118, %s119
    %p131 = scmp.eq.s32.totalorder %s18, 1
    %p132 = por %p130, %p131
    %p134 = scmp.ne.s32.totalorder %s119, %s133
    %p135 = scmp.eq.s32.totalorder %s18, 0
    %p136 = por %p134, %p135
    %s138 = sadd.s32 %s137, 1
    %p141 = scmp.eq.s32.totalorder %s12, 1
    %p142 = scmp.ne.s32.totalorder %s137, %s139
    %p143 = scmp.eq.s32.totalorder %s12, 0
    %p144 = por %p142, %p143
    %p145 = scmp.ne.s32.totalorder %s137, %s139
    %p146 = scmp.eq.s32.totalorder %s17, 1
    %p147 = por %p145, %p146
    %p148 = scmp.ne.s32.totalorder %s139, %s140
    %p149 = scmp.eq.s32.totalorder %s17, 0
    %p150 = por %p148, %p149
    %p151 = scmp.ne.s32.totalorder %s139, %s140
    %p152 = scmp.eq.s32.totalorder %s18, 1
    %p153 = por %p151, %p152
    %p155 = scmp.ne.s32.totalorder %s140, %s154
    %p156 = scmp.eq.s32.totalorder %s18, 0
    %p157 = por %p155, %p156
    %s159 = sadd.s32 %s158, 1
    %p162 = scmp.eq.s32.totalorder %s12, 1
    %p163 = scmp.ne.s32.totalorder %s158, %s160
    %p164 = scmp.eq.s32.totalorder %s12, 0
    %p165 = por %p163, %p164
    %p166 = scmp.ne.s32.totalorder %s158, %s160
    %p167 = scmp.eq.s32.totalorder %s17, 1
    %p168 = por %p166, %p167
    %p169 = scmp.ne.s32.totalorder %s160, %s161
    %p170 = scmp.eq.s32.totalorder %s17, 0
    %p171 = por %p169, %p170
    %p172 = scmp.ne.s32.totalorder %s160, %s161
    %p173 = scmp.eq.s32.totalorder %s18, 1
    %p174 = por %p172, %p173
    %p176 = scmp.ne.s32.totalorder %s161, %s175
    %p177 = scmp.eq.s32.totalorder %s18, 0
    %p178 = por %p176, %p177
    %s179 = ssub.s32 %s19, %s31
    %s180 = ssub.s32 %s20, %s27
    %s181 = sor.u32 %s179, %s180
    %p182 = scmp.eq.s32.totalorder %s181, 0
    %s184 = sadd.s32 %s183, 1
    %s185 = scalar_select %p182, %s183, %s184
    %p188 = pneg %p182
    %p189 = scmp.eq.s32.totalorder %s12, 1
    %p190 = por %p188, %p189
    %p191 = scmp.ne.s32.totalorder %s183, %s186
    %p192 = scmp.eq.s32.totalorder %s12, 0
    %p193 = por %p191, %p192
    %p194 = scmp.ne.s32.totalorder %s183, %s186
    %p195 = scmp.eq.s32.totalorder %s17, 1
    %p196 = por %p194, %p195
    %p197 = scmp.ne.s32.totalorder %s186, %s187
    %p198 = scmp.eq.s32.totalorder %s17, 0
    %p199 = por %p197, %p198
    %p200 = scmp.ne.s32.totalorder %s186, %s187
    %p201 = scmp.eq.s32.totalorder %s18, 1
    %p202 = por %p200, %p201
    %p204 = scmp.ne.s32.totalorder %s187, %s203
    %p205 = scmp.eq.s32.totalorder %s18, 0
    %p206 = por %p204, %p205
    %p207 = scmp.le.s32.totalorder 1, %s12
    %p208 = scmp.lt.s32.totalorder %s12, 3
    %p209 = pnand %p207, %p208
    %p210 = pneg %p209
    // Predicated region
    $region9: #{nonlocal_mask_forward.8} parent=5 // pred_check
      _
    $region10: #{nonlocal_mask_forward.8} parent=5 // pred_check_branch
      %212 = sbr.rel (%p209) target = $region12
    $region11: #{nonlocal_mask_forward.8} parent=5 // pred_region
      %s213 = ssub.s32 %s12, 1
      // Predicated region
      $region13: #{nonlocal_mask_forward.8} parent=11 // pred_check
        %p214 = pneg %p129
      $region14: #{nonlocal_mask_forward.8} parent=11 // pred_check_branch
        %216 = sbr.rel (%p214) target = $region16
      $region15: #{nonlocal_mask_forward.8} parent=11 // pred_region
        _
      $region16: #{nonlocal_mask_forward.8} parent=11 // pred_fallthru
        _
      // Predicated region
      $region17: #{nonlocal_mask_forward.8} parent=11 // pred_check
        %p217 = pneg %p150
      $region18: #{nonlocal_mask_forward.8} parent=11 // pred_check_branch
        %219 = sbr.rel (%p217) target = $region20
      $region19: #{nonlocal_mask_forward.8} parent=11 // pred_region
        _
      $region20: #{nonlocal_mask_forward.8} parent=11 // pred_fallthru
        _
      // Predicated region
      $region21: #{nonlocal_mask_forward.8} parent=11 // pred_check
        %p220 = pneg %p171
      $region22: #{nonlocal_mask_forward.8} parent=11 // pred_check_branch
        %222 = sbr.rel (%p220) target = $region24
      $region23: #{nonlocal_mask_forward.8} parent=11 // pred_region
        _
      $region24: #{nonlocal_mask_forward.8} parent=11 // pred_fallthru
        _
    $region12: #{nonlocal_mask_forward.8} parent=5 // pred_fallthru
      _
    %p223 = scmp.lt.s32.totalorder %s12, 2
    // Predicated region
    $region25: #{nonlocal_mask_forward.8} parent=5 // pred_check
      %p224 = pneg %p223
    $region26: #{nonlocal_mask_forward.8} parent=5 // pred_check_branch
      %226 = sbr.rel (%p224) target = $region28
    $region27: #{nonlocal_mask_forward.8} parent=5 // pred_region
      // Predicated region
      $region29: #{nonlocal_mask_forward.8} parent=27 // pred_check
        %p227 = pneg %p46
      $region30: #{nonlocal_mask_forward.8} parent=27 // pred_check_branch
        %229 = sbr.rel (%p227) target = $region32
      $region31: #{nonlocal_mask_forward.8} parent=27 // pred_region
        %s230 = smul.u32 2, %s20
        %p231 = scmp.lt.s32.totalorder %s19, 1
        %s232 = scalar_select %p231, %s19, 1
        %p233 = scmp.lt.s32.totalorder %s230, 1
        %s234 = scalar_select %p233, %s230, 1
        %s235 = smul.addr %s232, 2
        %s236 = sadd.s32 %s234, %s235
        %s237 = smul.addr %s236, 4
        %s238 = scalar_lea.vmem %s0, %s237
        %s239 = smul.u32 2, %s20
      $region32: #{nonlocal_mask_forward.8} parent=27 // pred_fallthru
        _
      // Predicated region
      $region33: #{nonlocal_mask_forward.8} parent=27 // pred_check
        %p240 = pneg %p74
      $region34: #{nonlocal_mask_forward.8} parent=27 // pred_check_branch
        %242 = sbr.rel (%p240) target = $region36
      $region35: #{nonlocal_mask_forward.8} parent=27 // pred_region
        %s243 = smul.u32 2, %s20
        %p244 = scmp.lt.s32.totalorder %s19, 1
        %s245 = scalar_select %p244, %s19, 1
        %p246 = scmp.lt.s32.totalorder %s243, 1
        %s247 = scalar_select %p246, %s243, 1
        %s248 = smul.addr %s245, 2
        %s249 = sadd.s32 %s247, %s248
        %s250 = smul.addr %s249, 4
        %s251 = scalar_lea.vmem %s1, %s250
        %s252 = smul.u32 2, %s20
      $region36: #{nonlocal_mask_forward.8} parent=27 // pred_fallthru
        _
      // Predicated region
      $region37: #{nonlocal_mask_forward.8} parent=27 // pred_check
        %p253 = pneg %p102
      $region38: #{nonlocal_mask_forward.8} parent=27 // pred_check_branch
        %255 = sbr.rel (%p253) target = $region40
      $region39: #{nonlocal_mask_forward.8} parent=27 // pred_region
        %s256 = smul.u32 2, %s20
        %p257 = scmp.lt.s32.totalorder %s19, 1
        %s258 = scalar_select %p257, %s19, 1
        %p259 = scmp.lt.s32.totalorder %s256, 1
        %s260 = scalar_select %p259, %s256, 1
        %s261 = smul.addr %s258, 2
        %s262 = sadd.s32 %s260, %s261
        %s263 = smul.addr %s262, 4
        %s264 = scalar_lea.vmem %s2, %s263
        %s265 = smul.u32 2, %s20
      $region40: #{nonlocal_mask_forward.8} parent=27 // pred_fallthru
        _
    $region28: #{nonlocal_mask_forward.8} parent=5 // pred_fallthru
      _
    %p266 = scmp.le.s32.totalorder 1, %s12
    %p267 = scmp.lt.s32.totalorder %s12, 3
    %p268 = pnand %p266, %p267
    %p269 = pneg %p268
    // Predicated region
    $region41: #{nonlocal_mask_forward.8} parent=5 // pred_check
      _
    $region42: #{nonlocal_mask_forward.8} parent=5 // pred_check_branch
      %271 = sbr.rel (%p268) target = $region44
    $region43: #{nonlocal_mask_forward.8} parent=5 // pred_region
      %s272 = ssub.s32 %s12, 1
      %s273 = smul.u32 2, %s22
      %p274 = scmp.lt.s32.totalorder %s21, 1
      %s275 = scalar_select %p274, %s21, 1
      %p276 = scmp.lt.s32.totalorder %s273, 1
      %s277 = scalar_select %p276, %s273, 1
      %s278 = smul.addr %s275, 2
      %s279 = sadd.s32 %s277, %s278
      %s280 = smul.addr %s279, 4
      %s281 = scalar_lea.vmem %s0, %s280
      %p282 = pneg %p52
      %p283 = pneg %p49
      %s284 = smul.u32 2, %s22
      %p285 = scmp.lt.s32.totalorder %s21, 1
      %s286 = scalar_select %p285, %s21, 1
      %p287 = scmp.lt.s32.totalorder %s284, 1
      %s288 = scalar_select %p287, %s284, 1
      %s289 = smul.addr %s286, 2
      %s290 = sadd.s32 %s288, %s289
      %s291 = smul.addr %s290, 4
      %s292 = scalar_lea.vmem %s1, %s291
      %p293 = pneg %p80
      %p294 = pneg %p77
      %s295 = smul.u32 2, %s22
      %p296 = scmp.lt.s32.totalorder %s21, 1
      %s297 = scalar_select %p296, %s21, 1
      %p298 = scmp.lt.s32.totalorder %s295, 1
      %s299 = scalar_select %p298, %s295, 1
      %s300 = smul.addr %s297, 2
      %s301 = sadd.s32 %s299, %s300
      %s302 = smul.addr %s301, 4
      %s303 = scalar_lea.vmem %s2, %s302
      %p304 = pneg %p108
      %p305 = pneg %p105
      %p306 = pneg %p129
      %p307 = pneg %p126
      %p308 = pneg %p150
      %p309 = pneg %p147
      %p310 = pneg %p171
      %p311 = pneg %p168
      %p312 = pneg %p199
      %p313 = pneg %p196
      %s314 = smul.u32 2, %s22
      %p315 = scmp.lt.s32.totalorder %s21, 1
      %s316 = scalar_select %p315, %s21, 1
      %p317 = scmp.lt.s32.totalorder %s314, 1
      %s318 = scalar_select %p317, %s314, 1
      %s319 = smul.addr %s316, 2
      %s320 = sadd.s32 %s318, %s319
      %s321 = smul.addr %s320, 4
      %s322 = scalar_lea.vmem %s6, %s321
      %s323 = smul.u32 2, %s22
      %p324 = scmp.lt.s32.totalorder %s21, 1
      %s325 = scalar_select %p324, %s21, 1
      %p326 = scmp.lt.s32.totalorder %s323, 1
      %s327 = scalar_select %p326, %s323, 1
      %s328 = smul.addr %s325, 2
      %s329 = sadd.s32 %s327, %s328
      %s330 = smul.addr %s329, 4
      %s331 = scalar_lea.vmem %s0, %s330
      %s332 = smul.u32 2, %s22
      %s333 = smul.u32 2, %s22
      %p334 = scmp.lt.s32.totalorder %s21, 1
      %s335 = scalar_select %p334, %s21, 1
      %p336 = scmp.lt.s32.totalorder %s333, 1
      %s337 = scalar_select %p336, %s333, 1
      %s338 = smul.addr %s335, 2
      %s339 = sadd.s32 %s337, %s338
      %s340 = smul.addr %s339, 4
      %s341 = scalar_lea.vmem %s1, %s340
      %s342 = smul.u32 2, %s22
      %s343 = smul.u32 2, %s22
      %p344 = scmp.lt.s32.totalorder %s21, 1
      %s345 = scalar_select %p344, %s21, 1
      %p346 = scmp.lt.s32.totalorder %s343, 1
      %s347 = scalar_select %p346, %s343, 1
      %s348 = smul.addr %s345, 2
      %s349 = sadd.s32 %s347, %s348
      %s350 = smul.addr %s349, 4
      %s351 = scalar_lea.vmem %s2, %s350
      %s352 = smul.u32 2, %s22
      %s353 = smul.u32 2, %s22
      %p354 = scmp.lt.s32.totalorder %s21, 1
      %s355 = scalar_select %p354, %s21, 1
      %p356 = scmp.lt.s32.totalorder %s353, 1
      %s357 = scalar_select %p356, %s353, 1
      %s358 = smul.addr %s355, 2
      %s359 = sadd.s32 %s357, %s358
      %s360 = smul.addr %s359, 4
      %s361 = scalar_lea.vmem %s6, %s360
      %s362 = smul.u32 2, %s22
      %v363 = vld [vmem:[%s331] sm:$0xff]
      %v364 = vld [vmem:[%s3] sm:$0xf]
      %v365 = vld [vmem:[%s341] sm:$0xff]
      %v367 = vcombine.high %v365, %v365
      %vm368 = vcmask 31744
      %v370 = vsel %vm368, %v364, 0
      %vm372 = vcmask 1043456
      %v373 = vsel %vm372, %v365, 0
      %v375 = vsel %vm372, %v367, 0
      %377 = vmatprep.subr.mxu0 %v375
      %378 = vmatpush1.msra.mxu0 %v373
      %379 = vmatprep.subr.mxu0 0.0
      %380 = vmatpush1.msra.mxu0 0.0
      %381 = vmatprep.subr.mxu0 0.0
      %382 = vmatpush1.msra.mxu0 0.0
      %383 = vmatprep.subr.mxu0 0.0
      %384 = vmatpush1.msra.mxu0 0.0
      %385 = vmatprep.subr.mxu0 0.0
      %386 = vmatpush1.msra.mxu0 0.0
      %387 = vmatprep.subr.mxu0 0.0
      %388 = vmatpush1.msra.mxu0 0.0
      %389 = vmatprep.subr.mxu0 0.0
      %390 = vmatpush1.msra.mxu0 0.0
      %391 = vmatprep.subr.mxu0 0.0
      %392 = vmatpush1.msra.mxu0 0.0
      %393 = vmatprep.subr.mxu0 0.0
      %394 = vmatpush1.msra.mxu0 0.0
      %395 = vmatprep.subr.mxu0 0.0
      %396 = vmatpush1.msra.mxu0 0.0
      %397 = vmatprep.subr.mxu0 0.0
      %398 = vmatpush1.msra.mxu0 0.0
      %399 = vmatprep.subr.mxu0 0.0
      %400 = vmatpush1.msra.mxu0 0.0
      %401 = vmatprep.subr.mxu0 0.0
      %402 = vmatpush1.msra.mxu0 0.0
      %403 = vmatprep.subr.mxu0 0.0
      %404 = vmatpush1.msra.mxu0 0.0
      %405 = vmatprep.subr.mxu0 0.0
      %406 = vmatpush1.msra.mxu0 0.0
      %407 = vmatprep.subr.mxu0 0.0
      %408 = vmatpush1.msra.mxu0 0.0
      %409 = vmatprep.subr.mxu0 0.0
      %410 = vmatpush1.msra.mxu0 0.0
      %411 = vmatprep.subr.mxu0 0.0
      %412 = vmatpush1.msra.mxu0 0.0
      %413 = vmatprep.subr.mxu0 0.0
      %414 = vmatpush1.msra.mxu0 0.0
      %415 = vmatprep.subr.mxu0 0.0
      %416 = vmatpush1.msra.mxu0 0.0
      %417 = vmatprep.subr.mxu0 0.0
      %418 = vmatpush1.msra.mxu0 0.0
      %419 = vmatprep.subr.mxu0 0.0
      %420 = vmatpush1.msra.mxu0 0.0
      %421 = vmatprep.subr.mxu0 0.0
      %422 = vmatpush1.msra.mxu0 0.0
      %423 = vmatprep.subr.mxu0 0.0
      %424 = vmatpush1.msra.mxu0 0.0
      %425 = vmatprep.subr.mxu0 0.0
      %426 = vmatpush1.msra.mxu0 0.0
      %427 = vmatprep.subr.mxu0 0.0
      %428 = vmatpush1.msra.mxu0 0.0
      %429 = vmatprep.subr.mxu0 0.0
      %430 = vmatpush1.msra.mxu0 0.0
      %431 = vmatprep.subr.mxu0 0.0
      %432 = vmatpush1.msra.mxu0 0.0
      %433 = vmatprep.subr.mxu0 0.0
      %434 = vmatpush1.msra.mxu0 0.0
      %435 = vmatprep.subr.mxu0 0.0
      %436 = vmatpush1.msra.mxu0 0.0
      %437 = vmatprep.subr.mxu0 0.0
      %438 = vmatpush1.msra.mxu0 0.0
      %439 = vmatprep.subr.mxu0 0.0
      %440 = vmatpush1.msra.mxu0 0.0
      %441 = vmatprep.mubr.f32.mxu0 0.0
      %442 = vmatmul.mubr.f32.gmra.mrb[0].mxu0 %v370
      %v443 = vpop.f32.mrb[0].mxu0
      %v444 = vadd.f32 0.0, %v443
      %v445 = vpop.f32.mrb[0].mxu0
      %v446 = vadd.f32 0.0, %v445
      %447 = vdwg.mxu0
      %v450 = vcombine.low %v444, %v446
      %v452 = vadd.f32 %v363, %v450
      %v453 = vld [vmem:[%s4] sm:$0xf]
      %v454 = vld [vmem:[%s351] sm:$0xff]
      %v456 = vcombine.high %v454, %v454
      %v458 = vsel %vm368, %v453, 0
      %v460 = vsel %vm372, %v454, 0
      %v462 = vsel %vm372, %v456, 0
      %464 = vmatprep.subr.mxu0 %v462
      %465 = vmatpush1.msra.mxu0 %v460
      %466 = vmatprep.subr.mxu0 0.0
      %467 = vmatpush1.msra.mxu0 0.0
      %468 = vmatprep.subr.mxu0 0.0
      %469 = vmatpush1.msra.mxu0 0.0
      %470 = vmatprep.subr.mxu0 0.0
      %471 = vmatpush1.msra.mxu0 0.0
      %472 = vmatprep.subr.mxu0 0.0
      %473 = vmatpush1.msra.mxu0 0.0
      %474 = vmatprep.subr.mxu0 0.0
      %475 = vmatpush1.msra.mxu0 0.0
      %476 = vmatprep.subr.mxu0 0.0
      %477 = vmatpush1.msra.mxu0 0.0
      %478 = vmatprep.subr.mxu0 0.0
      %479 = vmatpush1.msra.mxu0 0.0
      %480 = vmatprep.subr.mxu0 0.0
      %481 = vmatpush1.msra.mxu0 0.0
      %482 = vmatprep.subr.mxu0 0.0
      %483 = vmatpush1.msra.mxu0 0.0
      %484 = vmatprep.subr.mxu0 0.0
      %485 = vmatpush1.msra.mxu0 0.0
      %486 = vmatprep.subr.mxu0 0.0
      %487 = vmatpush1.msra.mxu0 0.0
      %488 = vmatprep.subr.mxu0 0.0
      %489 = vmatpush1.msra.mxu0 0.0
      %490 = vmatprep.subr.mxu0 0.0
      %491 = vmatpush1.msra.mxu0 0.0
      %492 = vmatprep.subr.mxu0 0.0
      %493 = vmatpush1.msra.mxu0 0.0
      %494 = vmatprep.subr.mxu0 0.0
      %495 = vmatpush1.msra.mxu0 0.0
      %496 = vmatprep.subr.mxu0 0.0
      %497 = vmatpush1.msra.mxu0 0.0
      %498 = vmatprep.subr.mxu0 0.0
      %499 = vmatpush1.msra.mxu0 0.0
      %500 = vmatprep.subr.mxu0 0.0
      %501 = vmatpush1.msra.mxu0 0.0
      %502 = vmatprep.subr.mxu0 0.0
      %503 = vmatpush1.msra.mxu0 0.0
      %504 = vmatprep.subr.mxu0 0.0
      %505 = vmatpush1.msra.mxu0 0.0
      %506 = vmatprep.subr.mxu0 0.0
      %507 = vmatpush1.msra.mxu0 0.0
      %508 = vmatprep.subr.mxu0 0.0
      %509 = vmatpush1.msra.mxu0 0.0
      %510 = vmatprep.subr.mxu0 0.0
      %511 = vmatpush1.msra.mxu0 0.0
      %512 = vmatprep.subr.mxu0 0.0
      %513 = vmatpush1.msra.mxu0 0.0
      %514 = vmatprep.subr.mxu0 0.0
      %515 = vmatpush1.msra.mxu0 0.0
      %516 = vmatprep.subr.mxu0 0.0
      %517 = vmatpush1.msra.mxu0 0.0
      %518 = vmatprep.subr.mxu0 0.0
      %519 = vmatpush1.msra.mxu0 0.0
      %520 = vmatprep.subr.mxu0 0.0
      %521 = vmatpush1.msra.mxu0 0.0
      %522 = vmatprep.subr.mxu0 0.0
      %523 = vmatpush1.msra.mxu0 0.0
      %524 = vmatprep.subr.mxu0 0.0
      %525 = vmatpush1.msra.mxu0 0.0
      %526 = vmatprep.subr.mxu0 0.0
      %527 = vmatpush1.msra.mxu0 0.0
      %528 = vmatprep.mubr.f32.mxu0 0.0
      %529 = vmatmul.mubr.f32.gmra.mrb[0].mxu0 %v458
      %v530 = vpop.f32.mrb[0].mxu0
      %v531 = vadd.f32 0.0, %v530
      %v532 = vpop.f32.mrb[0].mxu0
      %v533 = vadd.f32 0.0, %v532
      %534 = vdwg.mxu0
      %v537 = vcombine.low %v531, %v533
      %v539 = vadd.f32 %v452, %v537
      %v540 = vld [vmem:[%s5] sm:$0xf]
      %542 = vset.pattern.permute.xlu0 0
      %543 = vperm.xlu0 %542, %v540
      %v544 = vpop.permute.xlu0 %543
      %v546 = vunpack.c.l.s4 839922192
      %v547 = vunpack.c.0.s8 %v546
      %v548 = vlaneseq
      %v549 = vshrl.u32 %v548, 7
      %v550 = vsub.s32 %v547, %v549
      %v551 = vrot.slane %v544, %v550
      %v553 = vadd.f32 %v539, %v551
      %554 = vst [vmem:[%s361] sm:$0xff] %v553
      %s555 = smul.u32 2, %s22
      %p556 = scmp.lt.s32.totalorder %s21, 1
      %s557 = scalar_select %p556, %s21, 1
      %p558 = scmp.lt.s32.totalorder %s555, 1
      %s559 = scalar_select %p558, %s555, 1
      %s560 = smul.addr %s557, 2
      %s561 = sadd.s32 %s559, %s560
      %s562 = smul.addr %s561, 4
      %s563 = scalar_lea.vmem %s6, %s562
      // Predicated region
      $region45: #{nonlocal_mask_forward.8} parent=43 // pred_check
        %p564 = pneg %p196
      $region46: #{nonlocal_mask_forward.8} parent=43 // pred_check_branch
        %566 = sbr.rel (%p564) target = $region48
      $region47: #{nonlocal_mask_forward.8} parent=43 // pred_region
        %s567 = smul.u32 2, %s22
      $region48: #{nonlocal_mask_forward.8} parent=43 // pred_fallthru
        _
    $region44: #{nonlocal_mask_forward.8} parent=5 // pred_fallthru
      _
    %p568 = scmp.le.s32.totalorder 2, %s12
    // Predicated region
    $region49: #{nonlocal_mask_forward.8} parent=5 // pred_check
      %p569 = pneg %p568
    $region50: #{nonlocal_mask_forward.8} parent=5 // pred_check_branch
      %571 = sbr.rel (%p569) target = $region52
    $region51: #{nonlocal_mask_forward.8} parent=5 // pred_region
      %s572 = ssub.s32 %s12, 2
      // Predicated region
      $region53: #{nonlocal_mask_forward.8} parent=51 // pred_check
        %p573 = pneg %p202
      $region54: #{nonlocal_mask_forward.8} parent=51 // pred_check_branch
        %575 = sbr.rel (%p573) target = $region56
      $region55: #{nonlocal_mask_forward.8} parent=51 // pred_region
        %s576 = smul.u32 2, %s24
        %p577 = scmp.lt.s32.totalorder %s23, 1
        %s578 = scalar_select %p577, %s23, 1
        %p579 = scmp.lt.s32.totalorder %s576, 1
        %s580 = scalar_select %p579, %s576, 1
        %s581 = smul.addr %s578, 2
        %s582 = sadd.s32 %s580, %s581
        %s583 = smul.addr %s582, 4
        %s584 = scalar_lea.vmem %s6, %s583
      $region56: #{nonlocal_mask_forward.8} parent=51 // pred_fallthru
        _
    $region52: #{nonlocal_mask_forward.8} parent=5 // pred_fallthru
      _
  $region6: #{nonlocal_mask_forward.8} parent=0 // loop_footer
    %s16 = sadd.s32 1, %s12
  $region7: #{nonlocal_mask_forward.8} parent=0 // loop_footer_branch
    %11 = sbr.rel target = $region3
  $region8: #{nonlocal_mask_forward.8} parent=0 // loop_exit
    _

// kernel: nonlocal_mask_forward.9
$region0: #{nonlocal_mask_forward.9}
  #allocation0 [shape = 'u32[]', space=smem, size = 0x4, offset = 0x4, fixed_abs, tag = 'smem constant byte address 0x4 - core index']
  #allocation1 [shape = 'u32[144,128]{1,0:T(1,128)}', space=vmem, size = 0x12000, scoped, tag = 'internal scratch']
  #allocation2 [shape = 'f32[16,256]{1,0:T(8,128)}', space=vmem, size = 0x4000, scoped, tag = 'scratch operand']
  #allocation3 [shape = 'f32[1,1]{1,0:T(1,128)S(1)}', space=vmem, size = 0x200, scoped, tag = 'scoped memory for nonlocal_mask_forward.9']
  %s0 = inlined_call_operand.vmem [shape: f32[2,4,256], index: 0, kind: input, shape index: {}]
  %s1 = inlined_call_operand.vmem [shape: f32[2,256], index: 1, kind: input, shape index: {}]
  %s2 = inlined_call_operand.vmem [shape: f32[144,4], index: 2, kind: input, shape index: {}]
  %s3 = inlined_call_operand.vmem [shape: f32[16,1], index: 3, kind: input, shape index: {}]
  %s4 = inlined_call_operand.vmem [shape: f32[9,16], index: 4, kind: input, shape index: {}]
  %s5 = inlined_call_operand.<no memory space> [shape: f32[1,1], index: 5, kind: input, shape index: {}]
  %s6 = inlined_call_operand.vmem [shape: f32[2,1,256], index: 6, kind: output, shape index: {}]
  %s7 = sld [smem:[#allocation0]]
  $region57: #{nonlocal_mask_forward.9} parent=0
    _
  %s9 = ssub.s32 1, %s7
  %s10 = scalar_select 0, %s9, %s7
  %v11 = vstv %s5
  %12 = vst [vmem:[#allocation3] sm:$0x1] %v11
  loop: start=0, step=1, limit=4
  $region2: #{nonlocal_mask_forward.9} parent=0 // loop_pre_header
    _
  $region3: #{nonlocal_mask_forward.9} parent=0 // loop_header
    %s14 = sphi 0, %s18
    %p15 = scmp.ge.s32.totalorder %s14, 4
    %s24 = sphi 0, %s26
    %s27 = sphi 0, %s24
    %s28 = sphi 0, %s27
    %s44 = sphi 0, %s28
    %s48 = sphi 0, %s48
    %s50 = sphi 0, %s48
    %s51 = sphi 0, %s50
    %s65 = sphi 0, %s51
    %s69 = sphi 0, %s69
    %s71 = sphi 0, %s69
    %s72 = sphi 0, %s71
    %s86 = sphi 0, %s72
    %s90 = sphi 0, %s90
    %s92 = sphi 0, %s90
    %s93 = sphi 0, %s92
    %s107 = sphi 0, %s93
    %s111 = sphi 0, %s111
    %s113 = sphi 0, %s111
    %s114 = sphi 0, %s113
    %s128 = sphi 0, %s114
    %s132 = sphi 0, %s132
    %s134 = sphi 0, %s132
    %s135 = sphi 0, %s134
    %s149 = sphi 0, %s135
    %s155 = sphi 0, %s157
    %s158 = sphi 0, %s155
    %s159 = sphi 0, %s158
    %s175 = sphi 0, %s159
  $region4: #{nonlocal_mask_forward.9} parent=0 // loop_header_branch
    %17 = sbr.rel (%p15) target = $region8
  $region5: #{nonlocal_mask_forward.9} parent=0 // loop_body
    %s19 = ssub.s32 %s14, 1
    %s20 = ssub.s32 %s14, 2
    %s21 = sadd.s32 %s14, 1
    %s22 = ssub.s32 %s14, %s21
    %p23 = scmp.eq.s32.totalorder %s22, 0
    %s25 = sadd.s32 %s24, 1
    %s26 = scalar_select %p23, %s24, %s25
    %p29 = pneg %p23
    %p30 = scmp.eq.s32.totalorder %s14, 1
    %p31 = por %p29, %p30
    %p32 = scmp.ne.s32.totalorder %s24, %s27
    %p33 = scmp.eq.s32.totalorder %s14, 0
    %p34 = por %p32, %p33
    %p35 = scmp.ne.s32.totalorder %s24, %s27
    %p36 = scmp.eq.s32.totalorder %s19, 1
    %p37 = por %p35, %p36
    %p38 = scmp.ne.s32.totalorder %s27, %s28
    %p39 = scmp.eq.s32.totalorder %s19, 0
    %p40 = por %p38, %p39
    %p41 = scmp.ne.s32.totalorder %s27, %s28
    %p42 = scmp.eq.s32.totalorder %s20, 1
    %p43 = por %p41, %p42
    %p45 = scmp.ne.s32.totalorder %s28, %s44
    %p46 = scmp.eq.s32.totalorder %s20, 0
    %p47 = por %p45, %p46
    %s49 = sadd.s32 %s48, 1
    %p52 = scmp.eq.s32.totalorder %s14, 1
    %p53 = scmp.ne.s32.totalorder %s48, %s50
    %p54 = scmp.eq.s32.totalorder %s14, 0
    %p55 = por %p53, %p54
    %p56 = scmp.ne.s32.totalorder %s48, %s50
    %p57 = scmp.eq.s32.totalorder %s19, 1
    %p58 = por %p56, %p57
    %p59 = scmp.ne.s32.totalorder %s50, %s51
    %p60 = scmp.eq.s32.totalorder %s19, 0
    %p61 = por %p59, %p60
    %p62 = scmp.ne.s32.totalorder %s50, %s51
    %p63 = scmp.eq.s32.totalorder %s20, 1
    %p64 = por %p62, %p63
    %p66 = scmp.ne.s32.totalorder %s51, %s65
    %p67 = scmp.eq.s32.totalorder %s20, 0
    %p68 = por %p66, %p67
    %s70 = sadd.s32 %s69, 1
    %p73 = scmp.eq.s32.totalorder %s14, 1
    %p74 = scmp.ne.s32.totalorder %s69, %s71
    %p75 = scmp.eq.s32.totalorder %s14, 0
    %p76 = por %p74, %p75
    %p77 = scmp.ne.s32.totalorder %s69, %s71
    %p78 = scmp.eq.s32.totalorder %s19, 1
    %p79 = por %p77, %p78
    %p80 = scmp.ne.s32.totalorder %s71, %s72
    %p81 = scmp.eq.s32.totalorder %s19, 0
    %p82 = por %p80, %p81
    %p83 = scmp.ne.s32.totalorder %s71, %s72
    %p84 = scmp.eq.s32.totalorder %s20, 1
    %p85 = por %p83, %p84
    %p87 = scmp.ne.s32.totalorder %s72, %s86
    %p88 = scmp.eq.s32.totalorder %s20, 0
    %p89 = por %p87, %p88
    %s91 = sadd.s32 %s90, 1
    %p94 = scmp.eq.s32.totalorder %s14, 1
    %p95 = scmp.ne.s32.totalorder %s90, %s92
    %p96 = scmp.eq.s32.totalorder %s14, 0
    %p97 = por %p95, %p96
    %p98 = scmp.ne.s32.totalorder %s90, %s92
    %p99 = scmp.eq.s32.totalorder %s19, 1
    %p100 = por %p98, %p99
    %p101 = scmp.ne.s32.totalorder %s92, %s93
    %p102 = scmp.eq.s32.totalorder %s19, 0
    %p103 = por %p101, %p102
    %p104 = scmp.ne.s32.totalorder %s92, %s93
    %p105 = scmp.eq.s32.totalorder %s20, 1
    %p106 = por %p104, %p105
    %p108 = scmp.ne.s32.totalorder %s93, %s107
    %p109 = scmp.eq.s32.totalorder %s20, 0
    %p110 = por %p108, %p109
    %s112 = sadd.s32 %s111, 1
    %p115 = scmp.eq.s32.totalorder %s14, 1
    %p116 = scmp.ne.s32.totalorder %s111, %s113
    %p117 = scmp.eq.s32.totalorder %s14, 0
    %p118 = por %p116, %p117
    %p119 = scmp.ne.s32.totalorder %s111, %s113
    %p120 = scmp.eq.s32.totalorder %s19, 1
    %p121 = por %p119, %p120
    %p122 = scmp.ne.s32.totalorder %s113, %s114
    %p123 = scmp.eq.s32.totalorder %s19, 0
    %p124 = por %p122, %p123
    %p125 = scmp.ne.s32.totalorder %s113, %s114
    %p126 = scmp.eq.s32.totalorder %s20, 1
    %p127 = por %p125, %p126
    %p129 = scmp.ne.s32.totalorder %s114, %s128
    %p130 = scmp.eq.s32.totalorder %s20, 0
    %p131 = por %p129, %p130
    %s133 = sadd.s32 %s132, 1
    %p136 = scmp.eq.s32.totalorder %s14, 1
    %p137 = scmp.ne.s32.totalorder %s132, %s134
    %p138 = scmp.eq.s32.totalorder %s14, 0
    %p139 = por %p137, %p138
    %p140 = scmp.ne.s32.totalorder %s132, %s134
    %p141 = scmp.eq.s32.totalorder %s19, 1
    %p142 = por %p140, %p141
    %p143 = scmp.ne.s32.totalorder %s134, %s135
    %p144 = scmp.eq.s32.totalorder %s19, 0
    %p145 = por %p143, %p144
    %p146 = scmp.ne.s32.totalorder %s134, %s135
    %p147 = scmp.eq.s32.totalorder %s20, 1
    %p148 = por %p146, %p147
    %p150 = scmp.ne.s32.totalorder %s135, %s149
    %p151 = scmp.eq.s32.totalorder %s20, 0
    %p152 = por %p150, %p151
    %s153 = ssub.s32 %s14, %s21
    %p154 = scmp.eq.s32.totalorder %s153, 0
    %s156 = sadd.s32 %s155, 1
    %s157 = scalar_select %p154, %s155, %s156
    %p160 = pneg %p154
    %p161 = scmp.eq.s32.totalorder %s14, 1
    %p162 = por %p160, %p161
    %p163 = scmp.ne.s32.totalorder %s155, %s158
    %p164 = scmp.eq.s32.totalorder %s14, 0
    %p165 = por %p163, %p164
    %p166 = scmp.ne.s32.totalorder %s155, %s158
    %p167 = scmp.eq.s32.totalorder %s19, 1
    %p168 = por %p166, %p167
    %p169 = scmp.ne.s32.totalorder %s158, %s159
    %p170 = scmp.eq.s32.totalorder %s19, 0
    %p171 = por %p169, %p170
    %p172 = scmp.ne.s32.totalorder %s158, %s159
    %p173 = scmp.eq.s32.totalorder %s20, 1
    %p174 = por %p172, %p173
    %p176 = scmp.ne.s32.totalorder %s159, %s175
    %p177 = scmp.eq.s32.totalorder %s20, 0
    %p178 = por %p176, %p177
    %p179 = scmp.le.s32.totalorder 1, %s14
    %p180 = scmp.lt.s32.totalorder %s14, 3
    %p181 = pnand %p179, %p180
    %p182 = pneg %p181
    // Predicated region
    $region9: #{nonlocal_mask_forward.9} parent=5 // pred_check
      _
    $region10: #{nonlocal_mask_forward.9} parent=5 // pred_check_branch
      %184 = sbr.rel (%p181) target = $region12
    $region11: #{nonlocal_mask_forward.9} parent=5 // pred_region
      %s185 = ssub.s32 %s14, 1
      // Predicated region
      $region13: #{nonlocal_mask_forward.9} parent=11 // pred_check
        %p186 = pneg %p61
      $region14: #{nonlocal_mask_forward.9} parent=11 // pred_check_branch
        %188 = sbr.rel (%p186) target = $region16
      $region15: #{nonlocal_mask_forward.9} parent=11 // pred_region
        _
      $region16: #{nonlocal_mask_forward.9} parent=11 // pred_fallthru
        _
      // Predicated region
      $region17: #{nonlocal_mask_forward.9} parent=11 // pred_check
        %p189 = pneg %p82
      $region18: #{nonlocal_mask_forward.9} parent=11 // pred_check_branch
        %191 = sbr.rel (%p189) target = $region20
      $region19: #{nonlocal_mask_forward.9} parent=11 // pred_region
        _
      $region20: #{nonlocal_mask_forward.9} parent=11 // pred_fallthru
        _
      // Predicated region
      $region21: #{nonlocal_mask_forward.9} parent=11 // pred_check
        %p192 = pneg %p103
      $region22: #{nonlocal_mask_forward.9} parent=11 // pred_check_branch
        %194 = sbr.rel (%p192) target = $region24
      $region23: #{nonlocal_mask_forward.9} parent=11 // pred_region
        _
      $region24: #{nonlocal_mask_forward.9} parent=11 // pred_fallthru
        _
      // Predicated region
      $region25: #{nonlocal_mask_forward.9} parent=11 // pred_check
        %p195 = pneg %p124
      $region26: #{nonlocal_mask_forward.9} parent=11 // pred_check_branch
        %197 = sbr.rel (%p195) target = $region28
      $region27: #{nonlocal_mask_forward.9} parent=11 // pred_region
        _
      $region28: #{nonlocal_mask_forward.9} parent=11 // pred_fallthru
        _
      // Predicated region
      $region29: #{nonlocal_mask_forward.9} parent=11 // pred_check
        %p198 = pneg %p145
      $region30: #{nonlocal_mask_forward.9} parent=11 // pred_check_branch
        %200 = sbr.rel (%p198) target = $region32
      $region31: #{nonlocal_mask_forward.9} parent=11 // pred_region
        _
      $region32: #{nonlocal_mask_forward.9} parent=11 // pred_fallthru
        _
    $region12: #{nonlocal_mask_forward.9} parent=5 // pred_fallthru
      _
    %p201 = scmp.lt.s32.totalorder %s14, 2
    // Predicated region
    $region33: #{nonlocal_mask_forward.9} parent=5 // pred_check
      %p202 = pneg %p201
    $region34: #{nonlocal_mask_forward.9} parent=5 // pred_check_branch
      %204 = sbr.rel (%p202) target = $region36
    $region35: #{nonlocal_mask_forward.9} parent=5 // pred_region
      // Predicated region
      $region37: #{nonlocal_mask_forward.9} parent=35 // pred_check
        %p205 = pneg %p34
      $region38: #{nonlocal_mask_forward.9} parent=35 // pred_check_branch
        %207 = sbr.rel (%p205) target = $region40
      $region39: #{nonlocal_mask_forward.9} parent=35 // pred_region
        %p208 = scmp.lt.s32.totalorder %s14, 1
        %s209 = scalar_select %p208, %s14, 1
        %s210 = smul.addr %s209, 2
        %s211 = smul.addr %s210, 4
        %s212 = scalar_lea.vmem %s0, %s211
      $region40: #{nonlocal_mask_forward.9} parent=35 // pred_fallthru
        _
    $region36: #{nonlocal_mask_forward.9} parent=5 // pred_fallthru
      _
    %p213 = scmp.le.s32.totalorder 1, %s14
    %p214 = scmp.lt.s32.totalorder %s14, 3
    %p215 = pnand %p213, %p214
    %p216 = pneg %p215
    // Predicated region
    $region41: #{nonlocal_mask_forward.9} parent=5 // pred_check
      _
    $region42: #{nonlocal_mask_forward.9} parent=5 // pred_check_branch
      %218 = sbr.rel (%p215) target = $region44
    $region43: #{nonlocal_mask_forward.9} parent=5 // pred_region
      %s219 = ssub.s32 %s14, 1
      %p220 = scmp.lt.s32.totalorder %s19, 1
      %s221 = scalar_select %p220, %s19, 1
      %s222 = smul.addr %s221, 2
      %s223 = smul.addr %s222, 4
      %s224 = scalar_lea.vmem %s0, %s223
      %p225 = pneg %p40
      %p226 = pneg %p37
      %p227 = pneg %p61
      %p228 = pneg %p58
      %p229 = pneg %p82
      %p230 = pneg %p79
      %p231 = pneg %p103
      %p232 = pneg %p100
      %p233 = pneg %p124
      %p234 = pneg %p121
      %p235 = pneg %p145
      %p236 = pneg %p142
      %p237 = pneg %p171
      %p238 = pneg %p168
      %p239 = scmp.lt.s32.totalorder %s19, 1
      %s240 = scalar_select %p239, %s19, 1
      %s241 = smul.addr %s240, 2
      %s242 = scalar_lea.vmem %s6, %s241
      %p243 = scmp.lt.s32.totalorder %s19, 1
      %s244 = scalar_select %p243, %s19, 1
      %s245 = smul.addr %s244, 2
      %s246 = smul.addr %s245, 4
      %s247 = scalar_lea.vmem %s0, %s246
      %p248 = scmp.lt.s32.totalorder %s19, 1
      %s249 = scalar_select %p248, %s19, 1
      %s250 = smul.addr %s249, 2
      %s251 = scalar_lea.vmem %s6, %s250
      %v252 = vld [vmem:[%s247] sm:$0xff]
      %v253 = vld [vmem:[%s2] sm:$0xff]
      %v254 = vld [vmem:[%s2 + $0x8] sm:$0xff]
      %v255 = vld [vmem:[%s2 + $0x10] sm:$0xff]
      %v256 = vld [vmem:[%s2 + $0x18] sm:$0xff]
      %v257 = vld [vmem:[%s2 + $0x20] sm:$0xff]
      %v258 = vld [vmem:[%s2 + $0x28] sm:$0xff]
      %v259 = vld [vmem:[%s2 + $0x30] sm:$0xff]
      %v260 = vld [vmem:[%s2 + $0x38] sm:$0xff]
      %v261 = vld [vmem:[%s2 + $0x40] sm:$0xff]
      %v262 = vld [vmem:[%s2 + $0x48] sm:$0xff]
      %v263 = vld [vmem:[%s2 + $0x50] sm:$0xff]
      %v264 = vld [vmem:[%s2 + $0x58] sm:$0xff]
      %v265 = vld [vmem:[%s2 + $0x60] sm:$0xff]
      %v266 = vld [vmem:[%s2 + $0x68] sm:$0xff]
      %v267 = vld [vmem:[%s2 + $0x70] sm:$0xff]
      %v268 = vld [vmem:[%s2 + $0x78] sm:$0xff]
      %v269 = vld [vmem:[%s2 + $0x80] sm:$0xff]
      %v270 = vld [vmem:[%s2 + $0x88] sm:$0xff]
      %v272 = vcombine.high %v252, %v252
      %vm273 = vcmask 31744
      %v275 = vsel %vm273, %v253, 0
      %v278 = vsel %vm273, %v254, 0
      %v281 = vsel %vm273, %v255, 0
      %v284 = vsel %vm273, %v256, 0
      %v287 = vsel %vm273, %v257, 0
      %v290 = vsel %vm273, %v258, 0
      %v293 = vsel %vm273, %v259, 0
      %v296 = vsel %vm273, %v260, 0
      %v299 = vsel %vm273, %v261, 0
      %v302 = vsel %vm273, %v262, 0
      %v305 = vsel %vm273, %v263, 0
      %v308 = vsel %vm273, %v264, 0
      %v311 = vsel %vm273, %v265, 0
      %v314 = vsel %vm273, %v266, 0
      %v317 = vsel %vm273, %v267, 0
      %v320 = vsel %vm273, %v268, 0
      %v323 = vsel %vm273, %v269, 0
      %v326 = vsel %vm273, %v270, 0
      %vm328 = vcmask 1043456
      %v329 = vsel %vm328, %v252, 0
      %v331 = vsel %vm328, %v272, 0
      %333 = vmatprep.subr.mxu0 %v331
      %334 = vmatpush1.msra.mxu0 %v329
      %335 = vmatprep.subr.mxu0 0.0
      %336 = vmatpush1.msra.mxu0 0.0
      %337 = vmatprep.subr.mxu0 0.0
      %338 = vmatpush1.msra.mxu0 0.0
      %339 = vmatprep.subr.mxu0 0.0
      %340 = vmatpush1.msra.mxu0 0.0
      %341 = vmatprep.subr.mxu0 0.0
      %342 = vmatpush1.msra.mxu0 0.0
      %343 = vmatprep.subr.mxu0 0.0
      %344 = vmatpush1.msra.mxu0 0.0
      %345 = vmatprep.subr.mxu0 0.0
      %346 = vmatpush1.msra.mxu0 0.0
      %347 = vmatprep.subr.mxu0 0.0
      %348 = vmatpush1.msra.mxu0 0.0
      %349 = vmatprep.subr.mxu0 0.0
      %350 = vmatpush1.msra.mxu0 0.0
      %351 = vmatprep.subr.mxu0 0.0
      %352 = vmatpush1.msra.mxu0 0.0
      %353 = vmatprep.subr.mxu0 0.0
      %354 = vmatpush1.msra.mxu0 0.0
      %355 = vmatprep.subr.mxu0 0.0
      %356 = vmatpush1.msra.mxu0 0.0
      %357 = vmatprep.subr.mxu0 0.0
      %358 = vmatpush1.msra.mxu0 0.0
      %359 = vmatprep.subr.mxu0 0.0
      %360 = vmatpush1.msra.mxu0 0.0
      %361 = vmatprep.subr.mxu0 0.0
      %362 = vmatpush1.msra.mxu0 0.0
      %363 = vmatprep.subr.mxu0 0.0
      %364 = vmatpush1.msra.mxu0 0.0
      %365 = vmatprep.subr.mxu0 0.0
      %366 = vmatpush1.msra.mxu0 0.0
      %367 = vmatprep.subr.mxu0 0.0
      %368 = vmatpush1.msra.mxu0 0.0
      %369 = vmatprep.subr.mxu0 0.0
      %370 = vmatpush1.msra.mxu0 0.0
      %371 = vmatprep.subr.mxu0 0.0
      %372 = vmatpush1.msra.mxu0 0.0
      %373 = vmatprep.subr.mxu0 0.0
      %374 = vmatpush1.msra.mxu0 0.0
      %375 = vmatprep.subr.mxu0 0.0
      %376 = vmatpush1.msra.mxu0 0.0
      %377 = vmatprep.subr.mxu0 0.0
      %378 = vmatpush1.msra.mxu0 0.0
      %379 = vmatprep.subr.mxu0 0.0
      %380 = vmatpush1.msra.mxu0 0.0
      %381 = vmatprep.subr.mxu0 0.0
      %382 = vmatpush1.msra.mxu0 0.0
      %383 = vmatprep.subr.mxu0 0.0
      %384 = vmatpush1.msra.mxu0 0.0
      %385 = vmatprep.subr.mxu0 0.0
      %386 = vmatpush1.msra.mxu0 0.0
      %387 = vmatprep.subr.mxu0 0.0
      %388 = vmatpush1.msra.mxu0 0.0
      %389 = vmatprep.subr.mxu0 0.0
      %390 = vmatpush1.msra.mxu0 0.0
      %391 = vmatprep.subr.mxu0 0.0
      %392 = vmatpush1.msra.mxu0 0.0
      %393 = vmatprep.subr.mxu0 0.0
      %394 = vmatpush1.msra.mxu0 0.0
      %395 = vmatprep.subr.mxu0 0.0
      %396 = vmatpush1.msra.mxu0 0.0
      %397 = vmatprep.mubr.f32.mxu0 0.0
      %398 = vmatmul.mubr.f32.gmra.mrb[0].mxu0 %v275
      %v399 = vpop.f32.mrb[0].mxu0
      %v400 = vadd.f32 0.0, %v399
      %v401 = vpop.f32.mrb[0].mxu0
      %v402 = vadd.f32 0.0, %v401
      %403 = vmatprep.mubr.f32.mxu0 0.0
      %404 = vmatmul.mubr.f32.gmra.mrb[0].mxu0 %v278
      %v405 = vpop.f32.mrb[0].mxu0
      %v406 = vadd.f32 0.0, %v405
      %v407 = vpop.f32.mrb[0].mxu0
      %v408 = vadd.f32 0.0, %v407
      %409 = vmatprep.mubr.f32.mxu0 0.0
      %410 = vmatmul.mubr.f32.gmra.mrb[0].mxu0 %v281
      %v411 = vpop.f32.mrb[0].mxu0
      %v412 = vadd.f32 0.0, %v411
      %v413 = vpop.f32.mrb[0].mxu0
      %v414 = vadd.f32 0.0, %v413
      %415 = vmatprep.mubr.f32.mxu0 0.0
      %416 = vmatmul.mubr.f32.gmra.mrb[0].mxu0 %v284
      %v417 = vpop.f32.mrb[0].mxu0
      %v418 = vadd.f32 0.0, %v417
      %v419 = vpop.f32.mrb[0].mxu0
      %v420 = vadd.f32 0.0, %v419
      %421 = vmatprep.mubr.f32.mxu0 0.0
      %422 = vmatmul.mubr.f32.gmra.mrb[0].mxu0 %v287
      %v423 = vpop.f32.mrb[0].mxu0
      %v424 = vadd.f32 0.0, %v423
      %v425 = vpop.f32.mrb[0].mxu0
      %v426 = vadd.f32 0.0, %v425
      %427 = vmatprep.mubr.f32.mxu0 0.0
      %428 = vmatmul.mubr.f32.gmra.mrb[0].mxu0 %v290
      %v429 = vpop.f32.mrb[0].mxu0
      %v430 = vadd.f32 0.0, %v429
      %v431 = vpop.f32.mrb[0].mxu0
      %v432 = vadd.f32 0.0, %v431
      %433 = vmatprep.mubr.f32.mxu0 0.0
      %434 = vmatmul.mubr.f32.gmra.mrb[0].mxu0 %v293
      %v435 = vpop.f32.mrb[0].mxu0
      %v436 = vadd.f32 0.0, %v435
      %v437 = vpop.f32.mrb[0].mxu0
      %v438 = vadd.f32 0.0, %v437
      %439 = vmatprep.mubr.f32.mxu0 0.0
      %440 = vmatmul.mubr.f32.gmra.mrb[0].mxu0 %v296
      %v441 = vpop.f32.mrb[0].mxu0
      %v442 = vadd.f32 0.0, %v441
      %v443 = vpop.f32.mrb[0].mxu0
      %v444 = vadd.f32 0.0, %v443
      %445 = vmatprep.mubr.f32.mxu0 0.0
      %446 = vmatmul.mubr.f32.gmra.mrb[0].mxu0 %v299
      %v447 = vpop.f32.mrb[0].mxu0
      %v448 = vadd.f32 0.0, %v447
      %v449 = vpop.f32.mrb[0].mxu0
      %v450 = vadd.f32 0.0, %v449
      %451 = vmatprep.mubr.f32.mxu0 0.0
      %452 = vmatmul.mubr.f32.gmra.mrb[0].mxu0 %v302
      %v453 = vpop.f32.mrb[0].mxu0
      %v454 = vadd.f32 0.0, %v453
      %v455 = vpop.f32.mrb[0].mxu0
      %v456 = vadd.f32 0.0, %v455
      %457 = vmatprep.mubr.f32.mxu0 0.0
      %458 = vmatmul.mubr.f32.gmra.mrb[0].mxu0 %v305
      %v459 = vpop.f32.mrb[0].mxu0
      %v460 = vadd.f32 0.0, %v459
      %v461 = vpop.f32.mrb[0].mxu0
      %v462 = vadd.f32 0.0, %v461
      %463 = vmatprep.mubr.f32.mxu0 0.0
      %464 = vmatmul.mubr.f32.gmra.mrb[0].mxu0 %v308
      %v465 = vpop.f32.mrb[0].mxu0
      %v466 = vadd.f32 0.0, %v465
      %v467 = vpop.f32.mrb[0].mxu0
      %v468 = vadd.f32 0.0, %v467
      %469 = vmatprep.mubr.f32.mxu0 0.0
      %470 = vmatmul.mubr.f32.gmra.mrb[0].mxu0 %v311
      %v471 = vpop.f32.mrb[0].mxu0
      %v472 = vadd.f32 0.0, %v471
      %v473 = vpop.f32.mrb[0].mxu0
      %v474 = vadd.f32 0.0, %v473
      %475 = vmatprep.mubr.f32.mxu0 0.0
      %476 = vmatmul.mubr.f32.gmra.mrb[0].mxu0 %v314
      %v477 = vpop.f32.mrb[0].mxu0
      %v478 = vadd.f32 0.0, %v477
      %v479 = vpop.f32.mrb[0].mxu0
      %v480 = vadd.f32 0.0, %v479
      %481 = vmatprep.mubr.f32.mxu0 0.0
      %482 = vmatmul.mubr.f32.gmra.mrb[0].mxu0 %v317
      %v483 = vpop.f32.mrb[0].mxu0
      %v484 = vadd.f32 0.0, %v483
      %v485 = vpop.f32.mrb[0].mxu0
      %v486 = vadd.f32 0.0, %v485
      %487 = vmatprep.mubr.f32.mxu0 0.0
      %488 = vmatmul.mubr.f32.gmra.mrb[0].mxu0 %v320
      %v489 = vpop.f32.mrb[0].mxu0
      %v490 = vadd.f32 0.0, %v489
      %v491 = vpop.f32.mrb[0].mxu0
      %v492 = vadd.f32 0.0, %v491
      %493 = vmatprep.mubr.f32.mxu0 0.0
      %494 = vmatmul.mubr.f32.gmra.mrb[0].mxu0 %v323
      %v495 = vpop.f32.mrb[0].mxu0
      %v496 = vadd.f32 0.0, %v495
      %v497 = vpop.f32.mrb[0].mxu0
      %v498 = vadd.f32 0.0, %v497
      %499 = vmatprep.mubr.f32.mxu0 0.0
      %500 = vmatmul.mubr.f32.gmra.mrb[0].mxu0 %v326
      %v501 = vpop.f32.mrb[0].mxu0
      %v502 = vadd.f32 0.0, %v501
      %v503 = vpop.f32.mrb[0].mxu0
      %v504 = vadd.f32 0.0, %v503
      %505 = vdwg.mxu0
      %v506 = vld [vmem:[%s1] ss:$2 sm:$0x3]
      %s507 = scalar_lea.vmem %s1, 1
      %v508 = vld [vmem:[%s507] ss:$2 sm:$0x3]
      %vm509 = vcmp.ge.f32.partialorder %v506, 1.0
      %vm510 = vcmp.le.f32.partialorder %v506, 16.0
      %vm511 = vmand %vm509, %vm510
      %vm512 = vcmp.ge.f32.partialorder %v508, 1.0
      %vm513 = vmand %vm511, %vm512
      %vm514 = vcmp.le.f32.partialorder %v508, 16.0
      %vm515 = vmand %vm513, %vm514
      %vm516 = vcmp.ge.f32.partialorder %v508, 0.0
      %vm517 = vmand %vm511, %vm516
      %vm518 = vcmp.le.f32.partialorder %v508, 15.0
      %vm519 = vmand %vm517, %vm518
      %vm520 = vcmp.ge.f32.partialorder %v508, -1.0
      %vm521 = vmand %vm511, %vm520
      %vm522 = vcmp.le.f32.partialorder %v508, 14.0
      %vm523 = vmand %vm521, %vm522
      %vm524 = vcmp.ge.f32.partialorder %v506, 0.0
      %vm525 = vcmp.le.f32.partialorder %v506, 15.0
      %vm526 = vmand %vm524, %vm525
      %vm527 = vmand %vm526, %vm512
      %vm528 = vmand %vm527, %vm514
      %vm529 = vmand %vm526, %vm516
      %vm530 = vmand %vm529, %vm518
      %vm531 = vmand %vm526, %vm520
      %vm532 = vmand %vm531, %vm522
      %vm533 = vcmp.ge.f32.partialorder %v506, -1.0
      %vm534 = vcmp.le.f32.partialorder %v506, 14.0
      %vm535 = vmand %vm533, %vm534
      %vm536 = vmand %vm535, %vm512
      %vm537 = vmand %vm536, %vm514
      %vm538 = vmand %vm535, %vm516
      %vm539 = vmand %vm538, %vm518
      %vm540 = vmand %vm535, %vm520
      %vm541 = vmand %vm540, %vm522
      %v542 = vld [vmem:[%s3] sm:$0xff]
      %v543 = vld [vmem:[%s3 + $0x8] sm:$0xff]
      %545 = vset.pattern.permute.xlu0 0
      %546 = vperm.xlu0 %545, %v542
      %v547 = vpop.permute.xlu0 %546
      %550 = vset.pattern.permute.xlu0 0
      %551 = vperm.xlu0 %550, %v543
      %v552 = vpop.permute.xlu0 %551
      %554 = vst [vmem:[#allocation2] sm:$0xff] %v547
      %555 = vst [vmem:[#allocation2 + $0x8] sm:$0xff] %v547
      %556 = vst [vmem:[#allocation2 + $0x10] sm:$0xff] %v552
      %557 = vst [vmem:[#allocation2 + $0x18] sm:$0xff] %v552
      %558 = vrot.lane.b32.xlu0 %v400, 17
      %v559 = vpop.permute.xlu0 %558
      %560 = vrot.lane.b32.xlu0 %v406, 17
      %v561 = vpop.permute.xlu0 %560
      %562 = vrot.lane.b32.xlu0 %v402, 17
      %v563 = vpop.permute.xlu0 %562
      %564 = vrot.lane.b32.xlu0 %v408, 17
      %v565 = vpop.permute.xlu0 %564
      %v566 = vlaneseq
      %v567 = vand.u32 %v566, 127
      %vm568 = vcmp.lt.s32.totalorder %v567, 17
      %v569 = vsel %vm568, %v559, %v563
      %v570 = vsel %vm568, %v561, %v565
      %v571 = vsel %vm568, %v563, %v559
      %v572 = vsel %vm568, %v565, %v561
      %v573 = vld [vmem:[#allocation2] sm:$0xff]
      %v574 = vld [vmem:[#allocation2 + $0x8] sm:$0xff]
      %v575 = vld [vmem:[#allocation2 + $0x10] sm:$0xff]
      %v576 = vld [vmem:[#allocation2 + $0x18] sm:$0xff]
      %v577 = vsel %vm515, 1, 0
      %v578 = vlaneseq
      %v579 = vshrl.u32 %v578, 7
      %v580 = vsub.s32 0, %v579
      %v581 = vrot.slane %v577, %v580
      %v582 = vlaneseq
      %v583 = vshrl.u32 %v582, 7
      %v584 = vsub.s32 1, %v583
      %v585 = vrot.slane %v577, %v584
      %vm586 = vcmp.eq.s32.totalorder %v581, 1
      %vm587 = vcmp.eq.s32.totalorder %v585, 1
      %v588 = vsel %vm586, %v571, 0.0
      %v589 = vsel %vm587, %v569, 0.0
      %v590 = vsel %vm586, %v572, 0.0
      %v591 = vsel %vm587, %v570, 0.0
      %v592 = vadd.f32 %v573, %v588
      %v593 = vadd.f32 %v574, %v589
      %v594 = vadd.f32 %v575, %v590
      %v595 = vadd.f32 %v576, %v591
      %596 = vst [vmem:[#allocation2] sm:$0xff] %v592
      %597 = vst [vmem:[#allocation2 + $0x8] sm:$0xff] %v593
      %598 = vst [vmem:[#allocation2 + $0x10] sm:$0xff] %v594
      %599 = vst [vmem:[#allocation2 + $0x18] sm:$0xff] %v595
      %600 = vrot.lane.b32.xlu0 %v412, 16
      %v601 = vpop.permute.xlu0 %600
      %602 = vrot.lane.b32.xlu0 %v418, 16
      %v603 = vpop.permute.xlu0 %602
      %604 = vrot.lane.b32.xlu0 %v414, 16
      %v605 = vpop.permute.xlu0 %604
      %606 = vrot.lane.b32.xlu0 %v420, 16
      %v607 = vpop.permute.xlu0 %606
      %vm608 = vcmp.lt.s32.totalorder %v567, 16
      %v609 = vsel %vm608, %v601, %v605
      %v610 = vsel %vm608, %v603, %v607
      %v611 = vsel %vm608, %v605, %v601
      %v612 = vsel %vm608, %v607, %v603
      %v613 = vld [vmem:[#allocation2] sm:$0xff]
      %v614 = vld [vmem:[#allocation2 + $0x8] sm:$0xff]
      %v615 = vld [vmem:[#allocation2 + $0x10] sm:$0xff]
      %v616 = vld [vmem:[#allocation2 + $0x18] sm:$0xff]
      %v617 = vsel %vm519, 1, 0
      %v618 = vlaneseq
      %v619 = vshrl.u32 %v618, 7
      %v620 = vsub.s32 0, %v619
      %v621 = vrot.slane %v617, %v620
      %v622 = vlaneseq
      %v623 = vshrl.u32 %v622, 7
      %v624 = vsub.s32 1, %v623
      %v625 = vrot.slane %v617, %v624
      %vm626 = vcmp.eq.s32.totalorder %v621, 1
      %vm627 = vcmp.eq.s32.totalorder %v625, 1
      %v628 = vsel %vm626, %v611, 0.0
      %v629 = vsel %vm627, %v609, 0.0
      %v630 = vsel %vm626, %v612, 0.0
      %v631 = vsel %vm627, %v610, 0.0
      %v632 = vadd.f32 %v613, %v628
      %v633 = vadd.f32 %v614, %v629
      %v634 = vadd.f32 %v615, %v630
      %v635 = vadd.f32 %v616, %v631
      %636 = vst [vmem:[#allocation2] sm:$0xff] %v632
      %637 = vst [vmem:[#allocation2 + $0x8] sm:$0xff] %v633
      %638 = vst [vmem:[#allocation2 + $0x10] sm:$0xff] %v634
      %639 = vst [vmem:[#allocation2 + $0x18] sm:$0xff] %v635
      %640 = vrot.lane.b32.xlu0 %v424, 15
      %v641 = vpop.permute.xlu0 %640
      %642 = vrot.lane.b32.xlu0 %v430, 15
      %v643 = vpop.permute.xlu0 %642
      %644 = vrot.lane.b32.xlu0 %v426, 15
      %v645 = vpop.permute.xlu0 %644
      %646 = vrot.lane.b32.xlu0 %v432, 15
      %v647 = vpop.permute.xlu0 %646
      %vm648 = vcmp.lt.s32.totalorder %v567, 15
      %v649 = vsel %vm648, %v641, %v645
      %v650 = vsel %vm648, %v643, %v647
      %v651 = vsel %vm648, %v645, %v641
      %v652 = vsel %vm648, %v647, %v643
      %v653 = vld [vmem:[#allocation2] sm:$0xff]
      %v654 = vld [vmem:[#allocation2 + $0x8] sm:$0xff]
      %v655 = vld [vmem:[#allocation2 + $0x10] sm:$0xff]
      %v656 = vld [vmem:[#allocation2 + $0x18] sm:$0xff]
      %v657 = vsel %vm523, 1, 0
      %v658 = vlaneseq
      %v659 = vshrl.u32 %v658, 7
      %v660 = vsub.s32 0, %v659
      %v661 = vrot.slane %v657, %v660
      %v662 = vlaneseq
      %v663 = vshrl.u32 %v662, 7
      %v664 = vsub.s32 1, %v663
      %v665 = vrot.slane %v657, %v664
      %vm666 = vcmp.eq.s32.totalorder %v661, 1
      %vm667 = vcmp.eq.s32.totalorder %v665, 1
      %v668 = vsel %vm666, %v651, 0.0
      %v669 = vsel %vm667, %v649, 0.0
      %v670 = vsel %vm666, %v652, 0.0
      %v671 = vsel %vm667, %v650, 0.0
      %v672 = vadd.f32 %v653, %v668
      %v673 = vadd.f32 %v654, %v669
      %v674 = vadd.f32 %v655, %v670
      %v675 = vadd.f32 %v656, %v671
      %676 = vst [vmem:[#allocation2] sm:$0xff] %v672
      %677 = vst [vmem:[#allocation2 + $0x8] sm:$0xff] %v673
      %678 = vst [vmem:[#allocation2 + $0x10] sm:$0xff] %v674
      %679 = vst [vmem:[#allocation2 + $0x18] sm:$0xff] %v675
      %680 = vrot.lane.b32.xlu0 %v436, 1
      %v681 = vpop.permute.xlu0 %680
      %682 = vrot.lane.b32.xlu0 %v442, 1
      %v683 = vpop.permute.xlu0 %682
      %684 = vrot.lane.b32.xlu0 %v438, 1
      %v685 = vpop.permute.xlu0 %684
      %686 = vrot.lane.b32.xlu0 %v444, 1
      %v687 = vpop.permute.xlu0 %686
      %vm688 = vcmp.lt.s32.totalorder %v567, 1
      %v689 = vsel %vm688, %v681, %v685
      %v690 = vsel %vm688, %v683, %v687
      %v691 = vsel %vm688, %v685, %v681
      %v692 = vsel %vm688, %v687, %v683
      %v693 = vld [vmem:[#allocation2] sm:$0xff]
      %v694 = vld [vmem:[#allocation2 + $0x8] sm:$0xff]
      %v695 = vld [vmem:[#allocation2 + $0x10] sm:$0xff]
      %v696 = vld [vmem:[#allocation2 + $0x18] sm:$0xff]
      %v697 = vsel %vm528, 1, 0
      %v698 = vlaneseq
      %v699 = vshrl.u32 %v698, 7
      %v700 = vsub.s32 0, %v699
      %v701 = vrot.slane %v697, %v700
      %v702 = vlaneseq
      %v703 = vshrl.u32 %v702, 7
      %v704 = vsub.s32 1, %v703
      %v705 = vrot.slane %v697, %v704
      %vm706 = vcmp.eq.s32.totalorder %v701, 1
      %vm707 = vcmp.eq.s32.totalorder %v705, 1
      %v708 = vsel %vm706, %v691, 0.0
      %v709 = vsel %vm707, %v689, 0.0
      %v710 = vsel %vm706, %v692, 0.0
      %v711 = vsel %vm707, %v690, 0.0
      %v712 = vadd.f32 %v693, %v708
      %v713 = vadd.f32 %v694, %v709
      %v714 = vadd.f32 %v695, %v710
      %v715 = vadd.f32 %v696, %v711
      %716 = vst [vmem:[#allocation2] sm:$0xff] %v712
      %717 = vst [vmem:[#allocation2 + $0x8] sm:$0xff] %v713
      %718 = vst [vmem:[#allocation2 + $0x10] sm:$0xff] %v714
      %719 = vst [vmem:[#allocation2 + $0x18] sm:$0xff] %v715
      %v720 = vld [vmem:[#allocation2] sm:$0xff]
      %v721 = vld [vmem:[#allocation2 + $0x8] sm:$0xff]
      %v722 = vld [vmem:[#allocation2 + $0x10] sm:$0xff]
      %v723 = vld [vmem:[#allocation2 + $0x18] sm:$0xff]
      %v724 = vsel %vm530, 1, 0
      %v725 = vlaneseq
      %v726 = vshrl.u32 %v725, 7
      %v727 = vsub.s32 0, %v726
      %v728 = vrot.slane %v724, %v727
      %v729 = vlaneseq
      %v730 = vshrl.u32 %v729, 7
      %v731 = vsub.s32 1, %v730
      %v732 = vrot.slane %v724, %v731
      %vm733 = vcmp.eq.s32.totalorder %v728, 1
      %vm734 = vcmp.eq.s32.totalorder %v732, 1
      %v735 = vsel %vm733, %v448, 0.0
      %v736 = vsel %vm734, %v450, 0.0
      %v737 = vsel %vm733, %v454, 0.0
      %v738 = vsel %vm734, %v456, 0.0
      %v739 = vadd.f32 %v720, %v735
      %v740 = vadd.f32 %v721, %v736
      %v741 = vadd.f32 %v722, %v737
      %v742 = vadd.f32 %v723, %v738
      %743 = vst [vmem:[#allocation2] sm:$0xff] %v739
      %744 = vst [vmem:[#allocation2 + $0x8] sm:$0xff] %v740
      %745 = vst [vmem:[#allocation2 + $0x10] sm:$0xff] %v741
      %746 = vst [vmem:[#allocation2 + $0x18] sm:$0xff] %v742
      %747 = vrot.lane.b32.xlu0 %v460, 127
      %v748 = vpop.permute.xlu0 %747
      %749 = vrot.lane.b32.xlu0 %v466, 127
      %v750 = vpop.permute.xlu0 %749
      %751 = vrot.lane.b32.xlu0 %v462, 127
      %v752 = vpop.permute.xlu0 %751
      %753 = vrot.lane.b32.xlu0 %v468, 127
      %v754 = vpop.permute.xlu0 %753
      %vm755 = vcmp.lt.s32.totalorder %v567, 127
      %v756 = vsel %vm755, %v748, %v752
      %v757 = vsel %vm755, %v750, %v754
      %v758 = vsel %vm755, %v752, %v748
      %v759 = vsel %vm755, %v754, %v750
      %v760 = vld [vmem:[#allocation2] sm:$0xff]
      %v761 = vld [vmem:[#allocation2 + $0x8] sm:$0xff]
      %v762 = vld [vmem:[#allocation2 + $0x10] sm:$0xff]
      %v763 = vld [vmem:[#allocation2 + $0x18] sm:$0xff]
      %v764 = vsel %vm532, 1, 0
      %v765 = vlaneseq
      %v766 = vshrl.u32 %v765, 7
      %v767 = vsub.s32 0, %v766
      %v768 = vrot.slane %v764, %v767
      %v769 = vlaneseq
      %v770 = vshrl.u32 %v769, 7
      %v771 = vsub.s32 1, %v770
      %v772 = vrot.slane %v764, %v771
      %vm773 = vcmp.eq.s32.totalorder %v768, 1
      %vm774 = vcmp.eq.s32.totalorder %v772, 1
      %v775 = vsel %vm773, %v756, 0.0
      %v776 = vsel %vm774, %v758, 0.0
      %v777 = vsel %vm773, %v757, 0.0
      %v778 = vsel %vm774, %v759, 0.0
      %v779 = vadd.f32 %v760, %v775
      %v780 = vadd.f32 %v761, %v776
      %v781 = vadd.f32 %v762, %v777
      %v782 = vadd.f32 %v763, %v778
      %783 = vst [vmem:[#allocation2] sm:$0xff] %v779
      %784 = vst [vmem:[#allocation2 + $0x8] sm:$0xff] %v780
      %785 = vst [vmem:[#allocation2 + $0x10] sm:$0xff] %v781
      %786 = vst [vmem:[#allocation2 + $0x18] sm:$0xff] %v782
      %787 = vrot.lane.b32.xlu0 %v472, 113
      %v788 = vpop.permute.xlu0 %787
      %789 = vrot.lane.b32.xlu0 %v478, 113
      %v790 = vpop.permute.xlu0 %789
      %791 = vrot.lane.b32.xlu0 %v474, 113
      %v792 = vpop.permute.xlu0 %791
      %793 = vrot.lane.b32.xlu0 %v480, 113
      %v794 = vpop.permute.xlu0 %793
      %vm795 = vcmp.lt.s32.totalorder %v567, 113
      %v796 = vsel %vm795, %v788, %v792
      %v797 = vsel %vm795, %v790, %v794
      %v798 = vsel %vm795, %v792, %v788
      %v799 = vsel %vm795, %v794, %v790
      %v800 = vld [vmem:[#allocation2] sm:$0xff]
      %v801 = vld [vmem:[#allocation2 + $0x8] sm:$0xff]
      %v802 = vld [vmem:[#allocation2 + $0x10] sm:$0xff]
      %v803 = vld [vmem:[#allocation2 + $0x18] sm:$0xff]
      %v804 = vsel %vm537, 1, 0
      %v805 = vlaneseq
      %v806 = vshrl.u32 %v805, 7
      %v807 = vsub.s32 0, %v806
      %v808 = vrot.slane %v804, %v807
      %v809 = vlaneseq
      %v810 = vshrl.u32 %v809, 7
      %v811 = vsub.s32 1, %v810
      %v812 = vrot.slane %v804, %v811
      %vm813 = vcmp.eq.s32.totalorder %v808, 1
      %vm814 = vcmp.eq.s32.totalorder %v812, 1
      %v815 = vsel %vm813, %v796, 0.0
      %v816 = vsel %vm814, %v798, 0.0
      %v817 = vsel %vm813, %v797, 0.0
      %v818 = vsel %vm814, %v799, 0.0
      %v819 = vadd.f32 %v800, %v815
      %v820 = vadd.f32 %v801, %v816
      %v821 = vadd.f32 %v802, %v817
      %v822 = vadd.f32 %v803, %v818
      %823 = vst [vmem:[#allocation2] sm:$0xff] %v819
      %824 = vst [vmem:[#allocation2 + $0x8] sm:$0xff] %v820
      %825 = vst [vmem:[#allocation2 + $0x10] sm:$0xff] %v821
      %826 = vst [vmem:[#allocation2 + $0x18] sm:$0xff] %v822
      %827 = vrot.lane.b32.xlu0 %v484, 112
      %v828 = vpop.permute.xlu0 %827
      %829 = vrot.lane.b32.xlu0 %v490, 112
      %v830 = vpop.permute.xlu0 %829
      %831 = vrot.lane.b32.xlu0 %v486, 112
      %v832 = vpop.permute.xlu0 %831
      %833 = vrot.lane.b32.xlu0 %v492, 112
      %v834 = vpop.permute.xlu0 %833
      %vm835 = vcmp.lt.s32.totalorder %v567, 112
      %v836 = vsel %vm835, %v828, %v832
      %v837 = vsel %vm835, %v830, %v834
      %v838 = vsel %vm835, %v832, %v828
      %v839 = vsel %vm835, %v834, %v830
      %v840 = vld [vmem:[#allocation2] sm:$0xff]
      %v841 = vld [vmem:[#allocation2 + $0x8] sm:$0xff]
      %v842 = vld [vmem:[#allocation2 + $0x10] sm:$0xff]
      %v843 = vld [vmem:[#allocation2 + $0x18] sm:$0xff]
      %v844 = vsel %vm539, 1, 0
      %v845 = vlaneseq
      %v846 = vshrl.u32 %v845, 7
      %v847 = vsub.s32 0, %v846
      %v848 = vrot.slane %v844, %v847
      %v849 = vlaneseq
      %v850 = vshrl.u32 %v849, 7
      %v851 = vsub.s32 1, %v850
      %v852 = vrot.slane %v844, %v851
      %vm853 = vcmp.eq.s32.totalorder %v848, 1
      %vm854 = vcmp.eq.s32.totalorder %v852, 1
      %v855 = vsel %vm853, %v836, 0.0
      %v856 = vsel %vm854, %v838, 0.0
      %v857 = vsel %vm853, %v837, 0.0
      %v858 = vsel %vm854, %v839, 0.0
      %v859 = vadd.f32 %v840, %v855
      %v860 = vadd.f32 %v841, %v856
      %v861 = vadd.f32 %v842, %v857
      %v862 = vadd.f32 %v843, %v858
      %863 = vst [vmem:[#allocation2] sm:$0xff] %v859
      %864 = vst [vmem:[#allocation2 + $0x8] sm:$0xff] %v860
      %865 = vst [vmem:[#allocation2 + $0x10] sm:$0xff] %v861
      %866 = vst [vmem:[#allocation2 + $0x18] sm:$0xff] %v862
      %867 = vrot.lane.b32.xlu0 %v496, 111
      %v868 = vpop.permute.xlu0 %867
      %869 = vrot.lane.b32.xlu0 %v502, 111
      %v870 = vpop.permute.xlu0 %869
      %871 = vrot.lane.b32.xlu0 %v498, 111
      %v872 = vpop.permute.xlu0 %871
      %873 = vrot.lane.b32.xlu0 %v504, 111
      %v874 = vpop.permute.xlu0 %873
      %vm875 = vcmp.lt.s32.totalorder %v567, 111
      %v876 = vsel %vm875, %v868, %v872
      %v877 = vsel %vm875, %v870, %v874
      %v878 = vsel %vm875, %v872, %v868
      %v879 = vsel %vm875, %v874, %v870
      %v880 = vld [vmem:[#allocation2] sm:$0xff]
      %v881 = vld [vmem:[#allocation2 + $0x8] sm:$0xff]
      %v882 = vld [vmem:[#allocation2 + $0x10] sm:$0xff]
      %v883 = vld [vmem:[#allocation2 + $0x18] sm:$0xff]
      %v884 = vsel %vm541, 1, 0
      %v885 = vlaneseq
      %v886 = vshrl.u32 %v885, 7
      %v887 = vsub.s32 0, %v886
      %v888 = vrot.slane %v884, %v887
      %v889 = vlaneseq
      %v890 = vshrl.u32 %v889, 7
      %v891 = vsub.s32 1, %v890
      %v892 = vrot.slane %v884, %v891
      %vm893 = vcmp.eq.s32.totalorder %v888, 1
      %vm894 = vcmp.eq.s32.totalorder %v892, 1
      %v895 = vsel %vm893, %v876, 0.0
      %v896 = vsel %vm894, %v878, 0.0
      %v897 = vsel %vm893, %v877, 0.0
      %v898 = vsel %vm894, %v879, 0.0
      %v899 = vadd.f32 %v880, %v895
      %v900 = vadd.f32 %v881, %v896
      %v901 = vadd.f32 %v882, %v897
      %v902 = vadd.f32 %v883, %v898
      %903 = vst [vmem:[#allocation2] sm:$0xff] %v899
      %904 = vst [vmem:[#allocation2 + $0x8] sm:$0xff] %v900
      %905 = vst [vmem:[#allocation2 + $0x10] sm:$0xff] %v901
      %906 = vst [vmem:[#allocation2 + $0x18] sm:$0xff] %v902
      %v907 = vld [vmem:[#allocation2] sm:$0xff]
      %v908 = vld [vmem:[#allocation2 + $0x8] sm:$0xff]
      %v909 = vld [vmem:[#allocation2 + $0x10] sm:$0xff]
      %v910 = vld [vmem:[#allocation2 + $0x18] sm:$0xff]
      %v911 = vmax.f32 %v907, 0.0
      %v912 = vmax.f32 %v908, 0.0
      %v913 = vmax.f32 %v909, 0.0
      %v914 = vmax.f32 %v910, 0.0
      %v915 = vld [vmem:[%s4] sm:$0xff]
      %v916 = vld [vmem:[%s4 + $0x8] sm:$0x1]
      %vm917 = vcmask 130048
      %v919 = vsel %vm917, %v915, 0
      %v922 = vsel %vm917, %v916, 0
      %924 = vmatprep.subr.mxu0 %v912
      %925 = vmatpush1.msra.mxu0 %v911
      %926 = vmatprep.subr.mxu0 %v914
      %927 = vmatpush1.msra.mxu0 %v913
      %928 = vmatprep.subr.mxu0 0.0
      %929 = vmatpush1.msra.mxu0 0.0
      %930 = vmatprep.subr.mxu0 0.0
      %931 = vmatpush1.msra.mxu0 0.0
      %932 = vmatprep.subr.mxu0 0.0
      %933 = vmatpush1.msra.mxu0 0.0
      %934 = vmatprep.subr.mxu0 0.0
      %935 = vmatpush1.msra.mxu0 0.0
      %936 = vmatprep.subr.mxu0 0.0
      %937 = vmatpush1.msra.mxu0 0.0
      %938 = vmatprep.subr.mxu0 0.0
      %939 = vmatpush1.msra.mxu0 0.0
      %940 = vmatprep.subr.mxu0 0.0
      %941 = vmatpush1.msra.mxu0 0.0
      %942 = vmatprep.subr.mxu0 0.0
      %943 = vmatpush1.msra.mxu0 0.0
      %944 = vmatprep.subr.mxu0 0.0
      %945 = vmatpush1.msra.mxu0 0.0
      %946 = vmatprep.subr.mxu0 0.0
      %947 = vmatpush1.msra.mxu0 0.0
      %948 = vmatprep.subr.mxu0 0.0
      %949 = vmatpush1.msra.mxu0 0.0
      %950 = vmatprep.subr.mxu0 0.0
      %951 = vmatpush1.msra.mxu0 0.0
      %952 = vmatprep.subr.mxu0 0.0
      %953 = vmatpush1.msra.mxu0 0.0
      %954 = vmatprep.subr.mxu0 0.0
      %955 = vmatpush1.msra.mxu0 0.0
      %956 = vmatprep.subr.mxu0 0.0
      %957 = vmatpush1.msra.mxu0 0.0
      %958 = vmatprep.subr.mxu0 0.0
      %959 = vmatpush1.msra.mxu0 0.0
      %960 = vmatprep.subr.mxu0 0.0
      %961 = vmatpush1.msra.mxu0 0.0
      %962 = vmatprep.subr.mxu0 0.0
      %963 = vmatpush1.msra.mxu0 0.0
      %964 = vmatprep.subr.mxu0 0.0
      %965 = vmatpush1.msra.mxu0 0.0
      %966 = vmatprep.subr.mxu0 0.0
      %967 = vmatpush1.msra.mxu0 0.0
      %968 = vmatprep.subr.mxu0 0.0
      %969 = vmatpush1.msra.mxu0 0.0
      %970 = vmatprep.subr.mxu0 0.0
      %971 = vmatpush1.msra.mxu0 0.0
      %972 = vmatprep.subr.mxu0 0.0
      %973 = vmatpush1.msra.mxu0 0.0
      %974 = vmatprep.subr.mxu0 0.0
      %975 = vmatpush1.msra.mxu0 0.0
      %976 = vmatprep.subr.mxu0 0.0
      %977 = vmatpush1.msra.mxu0 0.0
      %978 = vmatprep.subr.mxu0 0.0
      %979 = vmatpush1.msra.mxu0 0.0
      %980 = vmatprep.subr.mxu0 0.0
      %981 = vmatpush1.msra.mxu0 0.0
      %982 = vmatprep.subr.mxu0 0.0
      %983 = vmatpush1.msra.mxu0 0.0
      %984 = vmatprep.subr.mxu0 0.0
      %985 = vmatpush1.msra.mxu0 0.0
      %986 = vmatprep.subr.mxu0 0.0
      %987 = vmatpush1.msra.mxu0 0.0
      %988 = vmatprep.mubr.f32.mxu0 0.0
      %989 = vmatmul.mubr.f32.gmra.mrb[0].mxu0 %v919
      %v990 = vpop.f32.mrb[0].mxu0
      %v991 = vadd.f32 0.0, %v990
      %v992 = vpop.f32.mrb[0].mxu0
      %v993 = vadd.f32 0.0, %v992
      %994 = vmatprep.mubr.f32.mxu0 0.0
      %995 = vmatmul.mubr.f32.gmra.mrb[0].mxu0 %v922
      %v996 = vpop.f32.mrb[0].mxu0
      %v997 = vadd.f32 0.0, %v996
      %v998 = vpop.f32.mrb[0].mxu0
      %v999 = vadd.f32 0.0, %v998
      %1000 = vdwg.mxu0
      %v1001 = vld [vmem:[#allocation3] sm:$0x1]
      %1003 = vset.pattern.permute.xlu0 0
      %1004 = vperm.xlu0 %1003, %v1001
      %v1005 = vpop.permute.xlu0 %1004
      %v1007 = vlaneseq
      %v1008 = vshrl.u32 %v1007, 7
      %v1009 = vsub.s32 0, %v1008
      %v1010 = vrot.slane %v1005, %v1009
      %1011 = vrot.lane.b32.xlu0 %v991, 17
      %v1012 = vpop.permute.xlu0 %1011
      %1013 = vrot.lane.b32.xlu0 %v993, 17
      %v1014 = vpop.permute.xlu0 %1013
      %v1015 = vsel %vm568, %v1012, %v1014
      %v1016 = vsel %vm568, %v1014, %v1012
      %v1019 = vcombine.low %v1016, %v1015
      %v1021 = vunpack.c.l.s4 1966171168
      %v1022 = vunpack.c.0.s8 %v1021
      %v1023 = vlaneseq
      %v1024 = vshrl.u32 %v1023, 7
      %v1025 = vsub.s32 %v1022, %v1024
      %v1026 = vrot.slane %v1019, %v1025
      %v1028 = vunpack.c.l.s4 1966171168
      %v1029 = vunpack.c.0.s8 %v1028
      %v1030 = vlaneseq
      %v1031 = vshrl.u32 %v1030, 7
      %v1032 = vsub.s32 %v1029, %v1031
      %v1033 = vrot.slane %v1026, %v1032
      %v1035 = vsel %vm515, %v1033, 0.0
      %v1036 = vadd.f32 %v1010, %v1035
      %v1039 = vrot.slane %v991, 1
      %v1040 = vrot.slane %v993, 1
      %1043 = vrot.lane.b32.xlu0 %v1039, 16
      %v1044 = vpop.permute.xlu0 %1043
      %1045 = vrot.lane.b32.xlu0 %v1040, 16
      %v1046 = vpop.permute.xlu0 %1045
      %v1047 = vsel %vm608, %v1044, %v1046
      %v1048 = vsel %vm608, %v1046, %v1044
      %v1051 = vcombine.low %v1048, %v1047
      %v1053 = vunpack.c.l.s4 1966171168
      %v1054 = vunpack.c.0.s8 %v1053
      %v1055 = vlaneseq
      %v1056 = vshrl.u32 %v1055, 7
      %v1057 = vsub.s32 %v1054, %v1056
      %v1058 = vrot.slane %v1051, %v1057
      %v1060 = vunpack.c.l.s4 1966171168
      %v1061 = vunpack.c.0.s8 %v1060
      %v1062 = vlaneseq
      %v1063 = vshrl.u32 %v1062, 7
      %v1064 = vsub.s32 %v1061, %v1063
      %v1065 = vrot.slane %v1058, %v1064
      %v1067 = vsel %vm519, %v1065, 0.0
      %v1068 = vadd.f32 %v1036, %v1067
      %v1069 = vrot.slane %v991, 2
      %v1070 = vrot.slane %v993, 2
      %1073 = vrot.lane.b32.xlu0 %v1069, 15
      %v1074 = vpop.permute.xlu0 %1073
      %1075 = vrot.lane.b32.xlu0 %v1070, 15
      %v1076 = vpop.permute.xlu0 %1075
      %v1077 = vsel %vm648, %v1074, %v1076
      %v1078 = vsel %vm648, %v1076, %v1074
      %v1081 = vcombine.low %v1078, %v1077
      %v1083 = vunpack.c.l.s4 1966171168
      %v1084 = vunpack.c.0.s8 %v1083
      %v1085 = vlaneseq
      %v1086 = vshrl.u32 %v1085, 7
      %v1087 = vsub.s32 %v1084, %v1086
      %v1088 = vrot.slane %v1081, %v1087
      %v1090 = vunpack.c.l.s4 1966171168
      %v1091 = vunpack.c.0.s8 %v1090
      %v1092 = vlaneseq
      %v1093 = vshrl.u32 %v1092, 7
      %v1094 = vsub.s32 %v1091, %v1093
      %v1095 = vrot.slane %v1088, %v1094
      %v1097 = vsel %vm523, %v1095, 0.0
      %v1098 = vadd.f32 %v1068, %v1097
      %v1099 = vrot.slane %v991, 3
      %v1100 = vrot.slane %v993, 3
      %1103 = vrot.lane.b32.xlu0 %v1099, 1
      %v1104 = vpop.permute.xlu0 %1103
      %1105 = vrot.lane.b32.xlu0 %v1100, 1
      %v1106 = vpop.permute.xlu0 %1105
      %v1107 = vsel %vm688, %v1104, %v1106
      %v1108 = vsel %vm688, %v1106, %v1104
      %v1111 = vcombine.low %v1108, %v1107
      %v1113 = vunpack.c.l.s4 1966171168
      %v1114 = vunpack.c.0.s8 %v1113
      %v1115 = vlaneseq
      %v1116 = vshrl.u32 %v1115, 7
      %v1117 = vsub.s32 %v1114, %v1116
      %v1118 = vrot.slane %v1111, %v1117
      %v1120 = vunpack.c.l.s4 1966171168
      %v1121 = vunpack.c.0.s8 %v1120
      %v1122 = vlaneseq
      %v1123 = vshrl.u32 %v1122, 7
      %v1124 = vsub.s32 %v1121, %v1123
      %v1125 = vrot.slane %v1118, %v1124
      %v1127 = vsel %vm528, %v1125, 0.0
      %v1128 = vadd.f32 %v1098, %v1127
      %v1129 = vrot.slane %v991, 4
      %v1130 = vrot.slane %v993, 4
      %v1131 = vcombine.low %v1129, %v1130
      %v1133 = vunpack.c.l.s4 1966171168
      %v1134 = vunpack.c.0.s8 %v1133
      %v1135 = vlaneseq
      %v1136 = vshrl.u32 %v1135, 7
      %v1137 = vsub.s32 %v1134, %v1136
      %v1138 = vrot.slane %v1131, %v1137
      %v1140 = vunpack.c.l.s4 1966171168
      %v1141 = vunpack.c.0.s8 %v1140
      %v1142 = vlaneseq
      %v1143 = vshrl.u32 %v1142, 7
      %v1144 = vsub.s32 %v1141, %v1143
      %v1145 = vrot.slane %v1138, %v1144
      %v1147 = vsel %vm530, %v1145, 0.0
      %v1148 = vadd.f32 %v1128, %v1147
      %v1149 = vrot.slane %v991, 5
      %v1150 = vrot.slane %v993, 5
      %1153 = vrot.lane.b32.xlu0 %v1149, 127
      %v1154 = vpop.permute.xlu0 %1153
      %1155 = vrot.lane.b32.xlu0 %v1150, 127
      %v1156 = vpop.permute.xlu0 %1155
      %v1157 = vsel %vm755, %v1154, %v1156
      %v1158 = vsel %vm755, %v1156, %v1154
      %v1161 = vcombine.low %v1157, %v1158
      %v1163 = vunpack.c.l.s4 1966171168
      %v1164 = vunpack.c.0.s8 %v1163
      %v1165 = vlaneseq
      %v1166 = vshrl.u32 %v1165, 7
      %v1167 = vsub.s32 %v1164, %v1166
      %v1168 = vrot.slane %v1161, %v1167
      %v1170 = vunpack.c.l.s4 1966171168
      %v1171 = vunpack.c.0.s8 %v1170
      %v1172 = vlaneseq
      %v1173 = vshrl.u32 %v1172, 7
      %v1174 = vsub.s32 %v1171, %v1173
      %v1175 = vrot.slane %v1168, %v1174
      %v1177 = vsel %vm532, %v1175, 0.0
      %v1178 = vadd.f32 %v1148, %v1177
      %v1179 = vrot.slane %v991, 6
      %v1180 = vrot.slane %v993, 6
      %1183 = vrot.lane.b32.xlu0 %v1179, 113
      %v1184 = vpop.permute.xlu0 %1183
      %1185 = vrot.lane.b32.xlu0 %v1180, 113
      %v1186 = vpop.permute.xlu0 %1185
      %v1187 = vsel %vm795, %v1184, %v1186
      %v1188 = vsel %vm795, %v1186, %v1184
      %v1191 = vcombine.low %v1187, %v1188
      %v1193 = vunpack.c.l.s4 1966171168
      %v1194 = vunpack.c.0.s8 %v1193
      %v1195 = vlaneseq
      %v1196 = vshrl.u32 %v1195, 7
      %v1197 = vsub.s32 %v1194, %v1196
      %v1198 = vrot.slane %v1191, %v1197
      %v1200 = vunpack.c.l.s4 1966171168
      %v1201 = vunpack.c.0.s8 %v1200
      %v1202 = vlaneseq
      %v1203 = vshrl.u32 %v1202, 7
      %v1204 = vsub.s32 %v1201, %v1203
      %v1205 = vrot.slane %v1198, %v1204
      %v1207 = vsel %vm537, %v1205, 0.0
      %v1208 = vadd.f32 %v1178, %v1207
      %v1209 = vrot.slane %v991, 7
      %v1210 = vrot.slane %v993, 7
      %1213 = vrot.lane.b32.xlu0 %v1209, 112
      %v1214 = vpop.permute.xlu0 %1213
      %1215 = vrot.lane.b32.xlu0 %v1210, 112
      %v1216 = vpop.permute.xlu0 %1215
      %v1217 = vsel %vm835, %v1214, %v1216
      %v1218 = vsel %vm835, %v1216, %v1214
      %v1221 = vcombine.low %v1217, %v1218
      %v1223 = vunpack.c.l.s4 1966171168
      %v1224 = vunpack.c.0.s8 %v1223
      %v1225 = vlaneseq
      %v1226 = vshrl.u32 %v1225, 7
      %v1227 = vsub.s32 %v1224, %v1226
      %v1228 = vrot.slane %v1221, %v1227
      %v1230 = vunpack.c.l.s4 1966171168
      %v1231 = vunpack.c.0.s8 %v1230
      %v1232 = vlaneseq
      %v1233 = vshrl.u32 %v1232, 7
      %v1234 = vsub.s32 %v1231, %v1233
      %v1235 = vrot.slane %v1228, %v1234
      %v1237 = vsel %vm539, %v1235, 0.0
      %v1238 = vadd.f32 %v1208, %v1237
      %1239 = vrot.lane.b32.xlu0 %v997, 111
      %v1240 = vpop.permute.xlu0 %1239
      %1241 = vrot.lane.b32.xlu0 %v999, 111
      %v1242 = vpop.permute.xlu0 %1241
      %v1243 = vsel %vm875, %v1240, %v1242
      %v1244 = vsel %vm875, %v1242, %v1240
      %v1247 = vcombine.low %v1243, %v1244
      %v1249 = vunpack.c.l.s4 1966171168
      %v1250 = vunpack.c.0.s8 %v1249
      %v1251 = vlaneseq
      %v1252 = vshrl.u32 %v1251, 7
      %v1253 = vsub.s32 %v1250, %v1252
      %v1254 = vrot.slane %v1247, %v1253
      %v1256 = vunpack.c.l.s4 1966171168
      %v1257 = vunpack.c.0.s8 %v1256
      %v1258 = vlaneseq
      %v1259 = vshrl.u32 %v1258, 7
      %v1260 = vsub.s32 %v1257, %v1259
      %v1261 = vrot.slane %v1254, %v1260
      %v1263 = vsel %vm541, %v1261, 0.0
      %v1264 = vadd.f32 %v1238, %v1263
      %v1265 = vsub.f32 0.0, %v1264
      %v1266 = vmul.f32 %v1265, 1.442695
      %v1267 = vpow.pop %v1266
      %v1268 = vadd.f32 %v1267, 1.0
      %v1269 = vrcp.pop %v1268
      %v1270 = vmul.f32 1.0, %v1269
      %v1271 = vlaneseq
      %vm1272 = vcmp.ge.s32.totalorder %v1271, 0
      %vm1273 = vcmp.lt.s32.totalorder %v1271, 256
      %vm1274 = vmand %vm1272, %vm1273
      %1275 = vst.msk [vmem:[%s251] sm:$0x3] %vm1274, %v1270
      %p1276 = scmp.lt.s32.totalorder %s19, 1
      %s1277 = scalar_select %p1276, %s19, 1
      %s1278 = smul.addr %s1277, 2
      %s1279 = scalar_lea.vmem %s6, %s1278
      // Predicated region
      $region45: #{nonlocal_mask_forward.9} parent=43 // pred_check
        %p1280 = pneg %p168
      $region46: #{nonlocal_mask_forward.9} parent=43 // pred_check_branch
        %1282 = sbr.rel (%p1280) target = $region48
      $region47: #{nonlocal_mask_forward.9} parent=43 // pred_region
        _
      $region48: #{nonlocal_mask_forward.9} parent=43 // pred_fallthru
        _
    $region44: #{nonlocal_mask_forward.9} parent=5 // pred_fallthru
      _
    %p1283 = scmp.le.s32.totalorder 2, %s14
    // Predicated region
    $region49: #{nonlocal_mask_forward.9} parent=5 // pred_check
      %p1284 = pneg %p1283
    $region50: #{nonlocal_mask_forward.9} parent=5 // pred_check_branch
      %1286 = sbr.rel (%p1284) target = $region52
    $region51: #{nonlocal_mask_forward.9} parent=5 // pred_region
      %s1287 = ssub.s32 %s14, 2
      // Predicated region
      $region53: #{nonlocal_mask_forward.9} parent=51 // pred_check
        %p1288 = pneg %p174
      $region54: #{nonlocal_mask_forward.9} parent=51 // pred_check_branch
        %1290 = sbr.rel (%p1288) target = $region56
      $region55: #{nonlocal_mask_forward.9} parent=51 // pred_region
        %p1291 = scmp.lt.s32.totalorder %s20, 1
        %s1292 = scalar_select %p1291, %s20, 1
        %s1293 = smul.addr %s1292, 2
        %s1294 = scalar_lea.vmem %s6, %s1293
      $region56: #{nonlocal_mask_forward.9} parent=51 // pred_fallthru
        _
    $region52: #{nonlocal_mask_forward.9} parent=5 // pred_fallthru
      _
  $region6: #{nonlocal_mask_forward.9} parent=0 // loop_footer
    %s18 = sadd.s32 1, %s14
  $region7: #{nonlocal_mask_forward.9} parent=0 // loop_footer_branch
    %13 = sbr.rel target = $region3
  $region8: #{nonlocal_mask_forward.9} parent=0 // loop_exit
    _

</llo_original>
